<compile_context>
chip_gen: v6e
topology: v6e:2x2x1
jax: 0.10.0
libtpu: 0.0.40
codegen_flags: <defaults>
</compile_context>

<pallas_src>
import functools

import numpy as np
import jax
import jax.numpy as jnp
from jax.experimental import pallas as pl
from jax.experimental.pallas import tpu as pltpu


POOLED_H = 7
POOLED_W = 7
SPATIAL_SCALE = 0.5
_PP_PAD = 64          # 7*7 = 49 pooled cells, padded to 64 lanes per RoI


def _g(u):
    # Antiderivative of the bilinear tent (1 - |s|) for |s| <= 1: G(u) = u - 0.5*u*|u|.
    return u - 0.5 * u * jnp.abs(u)


def _prroi_kernel(bidx_ref, coords_ref, feat_hbm, out_ref, feat_vmem, *,
                  TR, PH, PW, H, W, HW, HW_pad, N, scale):
    t = pl.program_id(0)
    f32 = jnp.float32

    # Copy the feature tensor HBM -> VMEM scratch exactly once; the scratch
    # persists across grid steps (single-buffered, unlike a resident BlockSpec).
    @pl.when(t == 0)
    def _():
        pltpu.sync_copy(feat_hbm, feat_vmem)

    # RoI-independent index tables (tiny; hoisted out of the per-RoI loop).
    hh = jax.lax.broadcasted_iota(jnp.int32, (H, _PP_PAD), 0).astype(f32)  # feature row h
    ww = jax.lax.broadcasted_iota(jnp.int32, (W, _PP_PAD), 0).astype(f32)  # feature col w
    qh = jax.lax.broadcasted_iota(jnp.int32, (H, _PP_PAD), 1).astype(f32)  # pooled cell id
    qw = jax.lax.broadcasted_iota(jnp.int32, (W, _PP_PAD), 1).astype(f32)
    ph = jnp.floor((qh + 0.5) * (1.0 / PW))                 # pooled bin row (per lane)
    pw = qw - PW * jnp.floor((qw + 0.5) * (1.0 / PW))       # pooled bin col (per lane)

    w_blocks = []
    batch_ids = []
    for i in range(TR):
        r = t * TR + i
        b = bidx_ref[r]
        x1 = coords_ref[4 * r + 0] * scale
        y1 = coords_ref[4 * r + 1] * scale
        x2 = coords_ref[4 * r + 2] * scale
        y2 = coords_ref[4 * r + 3] * scale

        roi_w = jnp.maximum(x2 - x1, 0.0)
        roi_h = jnp.maximum(y2 - y1, 0.0)
        bin_w = roi_w / PW
        bin_h = roi_h / PH
        win = bin_w * bin_h
        inv_win = jnp.where(win > 0.0, 1.0 / win, 0.0)   # exact reference semantics

        # Separable PrRoI weights:  Wt[(h,w),(ph,pw)] = Fy[h,ph] * Fx[w,pw] / win
        y_s = y1 + bin_h * ph                             # (H, 64)
        x_s = x1 + bin_w * pw                             # (W, 64)
        fy = (_g(jnp.clip(y_s + bin_h - hh, -1.0, 1.0)) -
              _g(jnp.clip(y_s - hh, -1.0, 1.0))) * inv_win          # (H, 64)
        fx = (_g(jnp.clip(x_s + bin_w - ww, -1.0, 1.0)) -
              _g(jnp.clip(x_s - ww, -1.0, 1.0)))                    # (W, 64)
        wt = (fy[:, None, :] * fx[None, :, :]).reshape(HW, _PP_PAD)  # (HW, 64)
        if HW_pad != HW:   # keep the MXU contraction dim a multiple of 128
            wt = jnp.concatenate(
                [wt, jnp.zeros((HW_pad - HW, _PP_PAD), f32)], axis=0)
        w_blocks.append(wt)
        batch_ids.append(b)

    if N == 1:
        # Common IoUNet / tracking case: one fused MXU matmul per grid step,
        # (C, HW) @ (HW, TR*64) — full-width output columns.
        w_all = jnp.concatenate(w_blocks, axis=-1)                   # (HW_pad, TR*64)
        acc = jnp.dot(feat_vmem[0], w_all, preferred_element_type=jnp.float32)
    else:
        # TODO(synk): for large N, sort RoIs by batch index in the wrapper so
        # tiles share a batch and this branch also fuses into one wide matmul.
        acc = jnp.concatenate(
            [jnp.dot(feat_vmem[batch_ids[i]], w_blocks[i],
                     preferred_element_type=jnp.float32)
             for i in range(TR)], axis=-1)

    # Single lane-dense (C, TR*64) store per grid step (no 64-lane sub-stores).
    out_ref[0, :, :] = acc.astype(out_ref.dtype)


def _vmem_cap_bytes(default=64 << 20):
    try:
        info = pltpu.get_tpu_info()
        return int(getattr(info, "vmem_capacity_bytes", default))
    except Exception:
        return default


def prroi_pool2d(features, rois, pooled_h=POOLED_H, pooled_w=POOLED_W,
                 spatial_scale=SPATIAL_SCALE, rois_per_step=8):
    N, C, H, W = (int(s) for s in features.shape)
    R = int(rois.shape[0])
    HW = H * W
    HW_pad = -(-HW // 128) * 128
    PH, PW = pooled_h, pooled_w
    PP = PH * PW
    assert PP <= _PP_PAD
    TR = int(rois_per_step)
    assert TR % 2 == 0, "rois_per_step must be even (output lane dim TR*64, mult of 128)"

    T = -(-R // TR)              # grid steps
    R_pad = T * TR

    # Lane-dense features (N, C, H*W), contraction dim padded to 128-multiple.
    feat_flat = features.reshape(N, C, HW).astype(jnp.float32)
    if HW_pad != HW:
        feat_flat = jnp.pad(feat_flat, ((0, 0), (0, 0), (0, HW_pad - HW)))
    # TODO(synk): optionally store features (and cast wt) as bf16 to halve VMEM and
    # use the native bf16 MXU rate; needs tolerance re-validation first.

    # Scalars -> flat 1-D SMEM arrays. Clamp batch index (bad RoIs remapped, not OOB).
    bidx = jnp.clip(rois[:, 0].astype(jnp.int32), 0, N - 1)
    bidx = jnp.pad(bidx, (0, R_pad - R))
    coords = rois[:, 1:5].astype(jnp.float32)
    coords = jnp.pad(coords, ((0, R_pad - R), (0, 0)))   # padded RoIs: zero area -> zeros
    coords_flat = coords.reshape(-1)                     # (R_pad*4,)

    kernel = functools.partial(
        _prroi_kernel, TR=TR, PH=PH, PW=PW, H=H, W=W, HW=HW, HW_pad=HW_pad,
        N=N, scale=float(spatial_scale))

    out_cols = TR * _PP_PAD
    grid_spec = pltpu.PrefetchScalarGridSpec(
        num_scalar_prefetch=0,
        grid=(T,),
        in_specs=[
            pl.BlockSpec(memory_space=pltpu.MemorySpace.SMEM),   # batch indices
            pl.BlockSpec(memory_space=pltpu.MemorySpace.SMEM),   # roi coords (flat)
            pl.BlockSpec(memory_space=pl.ANY),                   # features stay in HBM
        ],
        out_specs=pl.BlockSpec((1, C, out_cols), lambda t: (t, 0, 0)),
        scratch_shapes=[pltpu.VMEM((N, C, HW_pad), jnp.float32)],  # single-buffered feats
    )

    # Generation-aware VMEM budget: single-buffered feature scratch + double-buffered
    # output block + weight temporaries + headroom, capped at device capacity.
    feat_bytes = N * C * HW_pad * 4
    out_bytes = 2 * C * out_cols * 4
    wt_bytes = 3 * TR * HW_pad * _PP_PAD * 4
    need = feat_bytes + out_bytes + wt_bytes + (4 << 20)
    cap = _vmem_cap_bytes()
    vmem_limit = int(min(max(need, 16 << 20), max(cap - (8 << 20), 16 << 20)))

    out_tiles = pl.pallas_call(
        kernel,
        out_shape=jax.ShapeDtypeStruct((T, C, out_cols), jnp.float32),
        grid_spec=grid_spec,
        compiler_params=pltpu.CompilerParams(
            # "arbitrary": the copy-once feature scratch requires sequential grid steps.
            dimension_semantics=("arbitrary",),
            vmem_limit_bytes=vmem_limit),
    )(bidx, coords_flat, feat_flat)

    # (T, C, TR*64) -> (R, C, PH, PW)
    out = out_tiles.reshape(T, C, TR, _PP_PAD)
    out = jnp.transpose(out, (0, 2, 1, 3)).reshape(R_pad, C, _PP_PAD)
    return out[:R, :, :PP].reshape(R, C, PH, PW)


def iou_net_forward(features, rois):
    """IoUNet.forward: out = PrRoIPool2D(7, 7, spatial_scale=0.5)(features, rois)."""
    return prroi_pool2d(features, rois)


# ---------------------------------------------------------------------------
# Pure NumPy reference: direct transcription of the PrRoIPool CUDA algorithm.
# ---------------------------------------------------------------------------
def _prroi_pool_ref(features, rois, pooled_h, pooled_w, spatial_scale):
    N, C, H, W = features.shape
    R = rois.shape[0]
    out = np.zeros((R, C, pooled_h, pooled_w), np.float64)

    def get_data(data, h, w):
        if h < 0 or w < 0 or h >= H or w >= W:
            return 0.0
        return data[h, w]

    def mat_calc(data, s_h, s_w, e_h, e_w, y0, x0, y1, x1):
        alpha = x0 - s_w
        beta = y0 - s_h
        lim_alpha = x1 - s_w
        lim_beta = y1 - s_h
        a1 = lim_alpha - 0.5 * lim_alpha ** 2 - alpha + 0.5 * alpha ** 2
        a2 = 0.5 * lim_alpha ** 2 - 0.5 * alpha ** 2
        b1 = lim_beta - 0.5 * lim_beta ** 2 - beta + 0.5 * beta ** 2
        b2 = 0.5 * lim_beta ** 2 - 0.5 * beta ** 2
        return (get_data(data, s_h, s_w) * a1 * b1 +
                get_data(data, s_h, e_w) * a2 * b1 +
                get_data(data, e_h, s_w) * a1 * b2 +
                get_data(data, e_h, e_w) * a2 * b2)

    for r in range(R):
        b = int(rois[r, 0])
        x1r = rois[r, 1] * spatial_scale
        y1r = rois[r, 2] * spatial_scale
        x2r = rois[r, 3] * spatial_scale
        y2r = rois[r, 4] * spatial_scale
        roi_w = max(x2r - x1r, 0.0)
        roi_h = max(y2r - y1r, 0.0)
        bin_w = roi_w / pooled_w
        bin_h = roi_h / pooled_h
        win = max(bin_w * bin_h, 0.0)
        for c in range(C):
            data = features[b, c]
            for ph in range(pooled_h):
                for pw in range(pooled_w):
                    if win == 0.0:
                        continue
                    ws = x1r + bin_w * pw
                    we = ws + bin_w
                    hs = y1r + bin_h * ph
                    he = hs + bin_h
                    s = 0.0
                    for hi in range(int(np.floor(hs)), int(np.ceil(he))):
                        for wi in range(int(np.floor(ws)), int(np.ceil(we))):
                            s += mat_calc(data, hi, wi, hi + 1, wi + 1,
                                          max(hs, float(hi)), max(ws, float(wi)),
                                          min(he, float(hi + 1)), min(we, float(wi + 1)))
                    out[r, c, ph, pw] = s / win
    return out


if __name__ == "__main__":
    key = jax.random.PRNGKey(0)
    kf, kb, k1, k2 = jax.random.split(key, 4)

    # --- Test 1: N=2 (general multi-batch path, per-RoI matmuls, one wide store) ---
    N, C, H, W, R = 2, 4, 16, 16, 8
    features = jax.random.normal(kf, (N, C, H, W), jnp.float32)
    batch_idx = jax.random.randint(kb, (R,), 0, N).astype(jnp.float32)
    xy1 = jax.random.uniform(k1, (R, 2), jnp.float32, minval=0.0, maxval=18.0)
    wh = jax.random.uniform(k2, (R, 2), jnp.float32, minval=2.0, maxval=12.0)
    rois = jnp.concatenate([batch_idx[:, None], xy1, xy1 + wh], axis=1)

    out = jax.block_until_ready(iou_net_forward(features, rois))
    ref = _prroi_pool_ref(np.asarray(features, np.float64),
                          np.asarray(rois, np.float64),
                          POOLED_H, POOLED_W, SPATIAL_SCALE)
    np.testing.assert_allclose(np.asarray(out), ref, rtol=1e-4, atol=1e-4)

    # --- Test 2: N=1 (common tracking case, fully fused (C,HW)@(HW,TR*64) matmul) ---
    R1 = 5
    features1 = features[:1]
    rois1 = jnp.concatenate(
        [jnp.zeros((R1, 1), jnp.float32), xy1[:R1], xy1[:R1] + wh[:R1]], axis=1)
    out1 = jax.block_until_ready(iou_net_forward(features1, rois1))
    ref1 = _prroi_pool_ref(np.asarray(features1, np.float64),
                           np.asarray(rois1, np.float64),
                           POOLED_H, POOLED_W, SPATIAL_SCALE)
    np.testing.assert_allclose(np.asarray(out1), ref1, rtol=1e-4, atol=1e-4)

    print("KERNEL_OK")
</pallas_src>

<mosaic_0001>
module attributes {stable_mosaic.version = 11 : i64} {
  func.func @_prroi_kernel(%arg0: i32, %arg1: memref<8xi32, #tpu.memory_space<smem>>, %arg2: memref<32xf32, #tpu.memory_space<smem>>, %arg3: memref<2x4x256xf32, #tpu.memory_space<any>>, %arg4: memref<1x4x512xf32, #tpu.memory_space<vmem>>, %arg5: memref<2x4x256xf32, #tpu.memory_space<vmem>>) attributes {dimension_semantics = [#tpu.dimension_semantics<arbitrary>], iteration_bounds = array<i64: 1>, scalar_prefetch = 0 : i64, scratch_operands = 1 : i64, tpu.core_type = #tpu.core_type<tc>, window_params = [{transform_indices = @transform_0, window_bounds = array<i64: 8>}, {transform_indices = @transform_1, window_bounds = array<i64: 32>}, {}, {transform_indices = @transform_3, window_bounds = array<i64: 1, 4, 512>}]} {
    %c0_i32 = arith.constant 0 : i32
    %0 = arith.cmpi eq, %arg0, %c0_i32 : i32
    %1 = arith.extui %0 : i1 to i32
    %c0_i32_0 = arith.constant 0 : i32
    %2 = arith.cmpi ne, %1, %c0_i32_0 : i32
    scf.if %2 {
      "tpu.region"() ({
        %828 = tpu.sem_alloc : memref<!tpu.dma_semaphore, #tpu.memory_space<semaphore_mem>>
        tpu.enqueue_dma source(%arg3 : memref<2x4x256xf32, #tpu.memory_space<any>>) target(%arg5 : memref<2x4x256xf32, #tpu.memory_space<vmem>>) target_semaphore(%828 : memref<!tpu.dma_semaphore, #tpu.memory_space<semaphore_mem>>)
        tpu.wait_dma2 semaphore(%828 : memref<!tpu.dma_semaphore, #tpu.memory_space<semaphore_mem>>) src(%arg3 : memref<2x4x256xf32, #tpu.memory_space<any>>) dst(%arg5 : memref<2x4x256xf32, #tpu.memory_space<vmem>>)
        tpu.yield
      }) : () -> ()
    } else {
    }
    %3 = tpu.iota {dimensions = array<i32: 0>} : vector<16x64xi32>
    %4 = arith.sitofp %3 : vector<16x64xi32> to vector<16x64xf32>
    %5 = tpu.iota {dimensions = array<i32: 0>} : vector<16x64xi32>
    %6 = arith.sitofp %5 : vector<16x64xi32> to vector<16x64xf32>
    %7 = tpu.iota {dimensions = array<i32: 1>} : vector<16x64xi32>
    %8 = arith.sitofp %7 : vector<16x64xi32> to vector<16x64xf32>
    %9 = tpu.iota {dimensions = array<i32: 1>} : vector<16x64xi32>
    %10 = arith.sitofp %9 : vector<16x64xi32> to vector<16x64xf32>
    %cst = arith.constant 5.000000e-01 : f32
    %11 = vector.broadcast %cst : f32 to vector<16x64xf32>
    %12 = arith.addf %8, %11 : vector<16x64xf32>
    %cst_1 = arith.constant 0.142857149 : f32
    %13 = vector.broadcast %cst_1 : f32 to vector<16x64xf32>
    %14 = arith.mulf %12, %13 : vector<16x64xf32>
    %15 = math.floor %14 : vector<16x64xf32>
    %cst_2 = arith.constant 5.000000e-01 : f32
    %16 = vector.broadcast %cst_2 : f32 to vector<16x64xf32>
    %17 = arith.addf %10, %16 : vector<16x64xf32>
    %cst_3 = arith.constant 0.142857149 : f32
    %18 = vector.broadcast %cst_3 : f32 to vector<16x64xf32>
    %19 = arith.mulf %17, %18 : vector<16x64xf32>
    %20 = math.floor %19 : vector<16x64xf32>
    %cst_4 = arith.constant 7.000000e+00 : f32
    %21 = vector.broadcast %cst_4 : f32 to vector<16x64xf32>
    %22 = arith.mulf %21, %20 : vector<16x64xf32>
    %23 = arith.subf %10, %22 : vector<16x64xf32>
    %c8_i32 = arith.constant 8 : i32
    %24 = arith.muli %arg0, %c8_i32 : i32
    %c0_i32_5 = arith.constant 0 : i32
    %25 = arith.addi %24, %c0_i32_5 : i32
    %26 = arith.index_cast %25 : i32 to index
    %27 = memref.load %arg1[%26] : memref<8xi32, #tpu.memory_space<smem>>
    %c4_i32 = arith.constant 4 : i32
    %28 = arith.muli %c4_i32, %25 : i32
    %c0_i32_6 = arith.constant 0 : i32
    %29 = arith.addi %28, %c0_i32_6 : i32
    %30 = arith.index_cast %29 : i32 to index
    %31 = memref.load %arg2[%30] : memref<32xf32, #tpu.memory_space<smem>>
    %cst_7 = arith.constant 5.000000e-01 : f32
    %32 = arith.mulf %31, %cst_7 : f32
    %c4_i32_8 = arith.constant 4 : i32
    %33 = arith.muli %c4_i32_8, %25 : i32
    %c1_i32 = arith.constant 1 : i32
    %34 = arith.addi %33, %c1_i32 : i32
    %35 = arith.index_cast %34 : i32 to index
    %36 = memref.load %arg2[%35] : memref<32xf32, #tpu.memory_space<smem>>
    %cst_9 = arith.constant 5.000000e-01 : f32
    %37 = arith.mulf %36, %cst_9 : f32
    %c4_i32_10 = arith.constant 4 : i32
    %38 = arith.muli %c4_i32_10, %25 : i32
    %c2_i32 = arith.constant 2 : i32
    %39 = arith.addi %38, %c2_i32 : i32
    %40 = arith.index_cast %39 : i32 to index
    %41 = memref.load %arg2[%40] : memref<32xf32, #tpu.memory_space<smem>>
    %cst_11 = arith.constant 5.000000e-01 : f32
    %42 = arith.mulf %41, %cst_11 : f32
    %c4_i32_12 = arith.constant 4 : i32
    %43 = arith.muli %c4_i32_12, %25 : i32
    %c3_i32 = arith.constant 3 : i32
    %44 = arith.addi %43, %c3_i32 : i32
    %45 = arith.index_cast %44 : i32 to index
    %46 = memref.load %arg2[%45] : memref<32xf32, #tpu.memory_space<smem>>
    %cst_13 = arith.constant 5.000000e-01 : f32
    %47 = arith.mulf %46, %cst_13 : f32
    %48 = arith.subf %42, %32 : f32
    %cst_14 = arith.constant 0.000000e+00 : f32
    %49 = arith.maximumf %48, %cst_14 : f32
    %50 = arith.subf %47, %37 : f32
    %cst_15 = arith.constant 0.000000e+00 : f32
    %51 = arith.maximumf %50, %cst_15 : f32
    %cst_16 = arith.constant 7.000000e+00 : f32
    %52 = arith.divf %49, %cst_16 : f32
    %cst_17 = arith.constant 7.000000e+00 : f32
    %53 = arith.divf %51, %cst_17 : f32
    %54 = arith.mulf %52, %53 : f32
    %cst_18 = arith.constant 0.000000e+00 : f32
    %55 = arith.cmpf ogt, %54, %cst_18 : f32
    %cst_19 = arith.constant 1.000000e+00 : f32
    %56 = arith.divf %cst_19, %54 : f32
    %cst_20 = arith.constant 0.000000e+00 : f32
    %57 = arith.select %55, %56, %cst_20 : f32
    %58 = vector.broadcast %53 : f32 to vector<16x64xf32>
    %59 = arith.mulf %58, %15 : vector<16x64xf32>
    %60 = vector.broadcast %37 : f32 to vector<16x64xf32>
    %61 = arith.addf %60, %59 : vector<16x64xf32>
    %62 = vector.broadcast %52 : f32 to vector<16x64xf32>
    %63 = arith.mulf %62, %23 : vector<16x64xf32>
    %64 = vector.broadcast %32 : f32 to vector<16x64xf32>
    %65 = arith.addf %64, %63 : vector<16x64xf32>
    %66 = vector.broadcast %53 : f32 to vector<16x64xf32>
    %67 = arith.addf %61, %66 : vector<16x64xf32>
    %68 = arith.subf %67, %4 : vector<16x64xf32>
    %cst_21 = arith.constant -1.000000e+00 : f32
    %cst_22 = arith.constant 1.000000e+00 : f32
    %69 = vector.broadcast %cst_21 : f32 to vector<16x64xf32>
    %70 = arith.maximumf %69, %68 : vector<16x64xf32>
    %71 = vector.broadcast %cst_22 : f32 to vector<16x64xf32>
    %72 = arith.minimumf %71, %70 : vector<16x64xf32>
    %cst_23 = arith.constant 5.000000e-01 : f32
    %73 = vector.broadcast %cst_23 : f32 to vector<16x64xf32>
    %74 = arith.mulf %73, %72 : vector<16x64xf32>
    %75 = math.absf %72 : vector<16x64xf32>
    %76 = arith.mulf %74, %75 : vector<16x64xf32>
    %77 = arith.subf %72, %76 : vector<16x64xf32>
    %78 = arith.subf %61, %4 : vector<16x64xf32>
    %cst_24 = arith.constant -1.000000e+00 : f32
    %cst_25 = arith.constant 1.000000e+00 : f32
    %79 = vector.broadcast %cst_24 : f32 to vector<16x64xf32>
    %80 = arith.maximumf %79, %78 : vector<16x64xf32>
    %81 = vector.broadcast %cst_25 : f32 to vector<16x64xf32>
    %82 = arith.minimumf %81, %80 : vector<16x64xf32>
    %cst_26 = arith.constant 5.000000e-01 : f32
    %83 = vector.broadcast %cst_26 : f32 to vector<16x64xf32>
    %84 = arith.mulf %83, %82 : vector<16x64xf32>
    %85 = math.absf %82 : vector<16x64xf32>
    %86 = arith.mulf %84, %85 : vector<16x64xf32>
    %87 = arith.subf %82, %86 : vector<16x64xf32>
    %88 = arith.subf %77, %87 : vector<16x64xf32>
    %89 = vector.broadcast %57 : f32 to vector<16x64xf32>
    %90 = arith.mulf %88, %89 : vector<16x64xf32>
    %91 = vector.broadcast %52 : f32 to vector<16x64xf32>
    %92 = arith.addf %65, %91 : vector<16x64xf32>
    %93 = arith.subf %92, %6 : vector<16x64xf32>
    %cst_27 = arith.constant -1.000000e+00 : f32
    %cst_28 = arith.constant 1.000000e+00 : f32
    %94 = vector.broadcast %cst_27 : f32 to vector<16x64xf32>
    %95 = arith.maximumf %94, %93 : vector<16x64xf32>
    %96 = vector.broadcast %cst_28 : f32 to vector<16x64xf32>
    %97 = arith.minimumf %96, %95 : vector<16x64xf32>
    %cst_29 = arith.constant 5.000000e-01 : f32
    %98 = vector.broadcast %cst_29 : f32 to vector<16x64xf32>
    %99 = arith.mulf %98, %97 : vector<16x64xf32>
    %100 = math.absf %97 : vector<16x64xf32>
    %101 = arith.mulf %99, %100 : vector<16x64xf32>
    %102 = arith.subf %97, %101 : vector<16x64xf32>
    %103 = arith.subf %65, %6 : vector<16x64xf32>
    %cst_30 = arith.constant -1.000000e+00 : f32
    %cst_31 = arith.constant 1.000000e+00 : f32
    %104 = vector.broadcast %cst_30 : f32 to vector<16x64xf32>
    %105 = arith.maximumf %104, %103 : vector<16x64xf32>
    %106 = vector.broadcast %cst_31 : f32 to vector<16x64xf32>
    %107 = arith.minimumf %106, %105 : vector<16x64xf32>
    %cst_32 = arith.constant 5.000000e-01 : f32
    %108 = vector.broadcast %cst_32 : f32 to vector<16x64xf32>
    %109 = arith.mulf %108, %107 : vector<16x64xf32>
    %110 = math.absf %107 : vector<16x64xf32>
    %111 = arith.mulf %109, %110 : vector<16x64xf32>
    %112 = arith.subf %107, %111 : vector<16x64xf32>
    %113 = arith.subf %102, %112 : vector<16x64xf32>
    %114 = vector.shape_cast %90 : vector<16x64xf32> to vector<16x1x64xf32>
    %115 = vector.shape_cast %113 : vector<16x64xf32> to vector<1x16x64xf32>
    %116 = vector.broadcast %114 : vector<16x1x64xf32> to vector<16x16x64xf32>
    %117 = vector.broadcast %115 : vector<1x16x64xf32> to vector<16x16x64xf32>
    %118 = arith.mulf %116, %117 : vector<16x16x64xf32>
    %119 = vector.shape_cast %118 : vector<16x16x64xf32> to vector<256x64xf32>
    %c8_i32_33 = arith.constant 8 : i32
    %120 = arith.muli %arg0, %c8_i32_33 : i32
    %c1_i32_34 = arith.constant 1 : i32
    %121 = arith.addi %120, %c1_i32_34 : i32
    %122 = arith.index_cast %121 : i32 to index
    %123 = memref.load %arg1[%122] : memref<8xi32, #tpu.memory_space<smem>>
    %c4_i32_35 = arith.constant 4 : i32
    %124 = arith.muli %c4_i32_35, %121 : i32
    %c0_i32_36 = arith.constant 0 : i32
    %125 = arith.addi %124, %c0_i32_36 : i32
    %126 = arith.index_cast %125 : i32 to index
    %127 = memref.load %arg2[%126] : memref<32xf32, #tpu.memory_space<smem>>
    %cst_37 = arith.constant 5.000000e-01 : f32
    %128 = arith.mulf %127, %cst_37 : f32
    %c4_i32_38 = arith.constant 4 : i32
    %129 = arith.muli %c4_i32_38, %121 : i32
    %c1_i32_39 = arith.constant 1 : i32
    %130 = arith.addi %129, %c1_i32_39 : i32
    %131 = arith.index_cast %130 : i32 to index
    %132 = memref.load %arg2[%131] : memref<32xf32, #tpu.memory_space<smem>>
    %cst_40 = arith.constant 5.000000e-01 : f32
    %133 = arith.mulf %132, %cst_40 : f32
    %c4_i32_41 = arith.constant 4 : i32
    %134 = arith.muli %c4_i32_41, %121 : i32
    %c2_i32_42 = arith.constant 2 : i32
    %135 = arith.addi %134, %c2_i32_42 : i32
    %136 = arith.index_cast %135 : i32 to index
    %137 = memref.load %arg2[%136] : memref<32xf32, #tpu.memory_space<smem>>
    %cst_43 = arith.constant 5.000000e-01 : f32
    %138 = arith.mulf %137, %cst_43 : f32
    %c4_i32_44 = arith.constant 4 : i32
    %139 = arith.muli %c4_i32_44, %121 : i32
    %c3_i32_45 = arith.constant 3 : i32
    %140 = arith.addi %139, %c3_i32_45 : i32
    %141 = arith.index_cast %140 : i32 to index
    %142 = memref.load %arg2[%141] : memref<32xf32, #tpu.memory_space<smem>>
    %cst_46 = arith.constant 5.000000e-01 : f32
    %143 = arith.mulf %142, %cst_46 : f32
    %144 = arith.subf %138, %128 : f32
    %cst_47 = arith.constant 0.000000e+00 : f32
    %145 = arith.maximumf %144, %cst_47 : f32
    %146 = arith.subf %143, %133 : f32
    %cst_48 = arith.constant 0.000000e+00 : f32
    %147 = arith.maximumf %146, %cst_48 : f32
    %cst_49 = arith.constant 7.000000e+00 : f32
    %148 = arith.divf %145, %cst_49 : f32
    %cst_50 = arith.constant 7.000000e+00 : f32
    %149 = arith.divf %147, %cst_50 : f32
    %150 = arith.mulf %148, %149 : f32
    %cst_51 = arith.constant 0.000000e+00 : f32
    %151 = arith.cmpf ogt, %150, %cst_51 : f32
    %cst_52 = arith.constant 1.000000e+00 : f32
    %152 = arith.divf %cst_52, %150 : f32
    %cst_53 = arith.constant 0.000000e+00 : f32
    %153 = arith.select %151, %152, %cst_53 : f32
    %154 = vector.broadcast %149 : f32 to vector<16x64xf32>
    %155 = arith.mulf %154, %15 : vector<16x64xf32>
    %156 = vector.broadcast %133 : f32 to vector<16x64xf32>
    %157 = arith.addf %156, %155 : vector<16x64xf32>
    %158 = vector.broadcast %148 : f32 to vector<16x64xf32>
    %159 = arith.mulf %158, %23 : vector<16x64xf32>
    %160 = vector.broadcast %128 : f32 to vector<16x64xf32>
    %161 = arith.addf %160, %159 : vector<16x64xf32>
    %162 = vector.broadcast %149 : f32 to vector<16x64xf32>
    %163 = arith.addf %157, %162 : vector<16x64xf32>
    %164 = arith.subf %163, %4 : vector<16x64xf32>
    %cst_54 = arith.constant -1.000000e+00 : f32
    %cst_55 = arith.constant 1.000000e+00 : f32
    %165 = vector.broadcast %cst_54 : f32 to vector<16x64xf32>
    %166 = arith.maximumf %165, %164 : vector<16x64xf32>
    %167 = vector.broadcast %cst_55 : f32 to vector<16x64xf32>
    %168 = arith.minimumf %167, %166 : vector<16x64xf32>
    %cst_56 = arith.constant 5.000000e-01 : f32
    %169 = vector.broadcast %cst_56 : f32 to vector<16x64xf32>
    %170 = arith.mulf %169, %168 : vector<16x64xf32>
    %171 = math.absf %168 : vector<16x64xf32>
    %172 = arith.mulf %170, %171 : vector<16x64xf32>
    %173 = arith.subf %168, %172 : vector<16x64xf32>
    %174 = arith.subf %157, %4 : vector<16x64xf32>
    %cst_57 = arith.constant -1.000000e+00 : f32
    %cst_58 = arith.constant 1.000000e+00 : f32
    %175 = vector.broadcast %cst_57 : f32 to vector<16x64xf32>
    %176 = arith.maximumf %175, %174 : vector<16x64xf32>
    %177 = vector.broadcast %cst_58 : f32 to vector<16x64xf32>
    %178 = arith.minimumf %177, %176 : vector<16x64xf32>
    %cst_59 = arith.constant 5.000000e-01 : f32
    %179 = vector.broadcast %cst_59 : f32 to vector<16x64xf32>
    %180 = arith.mulf %179, %178 : vector<16x64xf32>
    %181 = math.absf %178 : vector<16x64xf32>
    %182 = arith.mulf %180, %181 : vector<16x64xf32>
    %183 = arith.subf %178, %182 : vector<16x64xf32>
    %184 = arith.subf %173, %183 : vector<16x64xf32>
    %185 = vector.broadcast %153 : f32 to vector<16x64xf32>
    %186 = arith.mulf %184, %185 : vector<16x64xf32>
    %187 = vector.broadcast %148 : f32 to vector<16x64xf32>
    %188 = arith.addf %161, %187 : vector<16x64xf32>
    %189 = arith.subf %188, %6 : vector<16x64xf32>
    %cst_60 = arith.constant -1.000000e+00 : f32
    %cst_61 = arith.constant 1.000000e+00 : f32
    %190 = vector.broadcast %cst_60 : f32 to vector<16x64xf32>
    %191 = arith.maximumf %190, %189 : vector<16x64xf32>
    %192 = vector.broadcast %cst_61 : f32 to vector<16x64xf32>
    %193 = arith.minimumf %192, %191 : vector<16x64xf32>
    %cst_62 = arith.constant 5.000000e-01 : f32
    %194 = vector.broadcast %cst_62 : f32 to vector<16x64xf32>
    %195 = arith.mulf %194, %193 : vector<16x64xf32>
    %196 = math.absf %193 : vector<16x64xf32>
    %197 = arith.mulf %195, %196 : vector<16x64xf32>
    %198 = arith.subf %193, %197 : vector<16x64xf32>
    %199 = arith.subf %161, %6 : vector<16x64xf32>
    %cst_63 = arith.constant -1.000000e+00 : f32
    %cst_64 = arith.constant 1.000000e+00 : f32
    %200 = vector.broadcast %cst_63 : f32 to vector<16x64xf32>
    %201 = arith.maximumf %200, %199 : vector<16x64xf32>
    %202 = vector.broadcast %cst_64 : f32 to vector<16x64xf32>
    %203 = arith.minimumf %202, %201 : vector<16x64xf32>
    %cst_65 = arith.constant 5.000000e-01 : f32
    %204 = vector.broadcast %cst_65 : f32 to vector<16x64xf32>
    %205 = arith.mulf %204, %203 : vector<16x64xf32>
    %206 = math.absf %203 : vector<16x64xf32>
    %207 = arith.mulf %205, %206 : vector<16x64xf32>
    %208 = arith.subf %203, %207 : vector<16x64xf32>
    %209 = arith.subf %198, %208 : vector<16x64xf32>
    %210 = vector.shape_cast %186 : vector<16x64xf32> to vector<16x1x64xf32>
    %211 = vector.shape_cast %209 : vector<16x64xf32> to vector<1x16x64xf32>
    %212 = vector.broadcast %210 : vector<16x1x64xf32> to vector<16x16x64xf32>
    %213 = vector.broadcast %211 : vector<1x16x64xf32> to vector<16x16x64xf32>
    %214 = arith.mulf %212, %213 : vector<16x16x64xf32>
    %215 = vector.shape_cast %214 : vector<16x16x64xf32> to vector<256x64xf32>
    %c8_i32_66 = arith.constant 8 : i32
    %216 = arith.muli %arg0, %c8_i32_66 : i32
    %c2_i32_67 = arith.constant 2 : i32
    %217 = arith.addi %216, %c2_i32_67 : i32
    %218 = arith.index_cast %217 : i32 to index
    %219 = memref.load %arg1[%218] : memref<8xi32, #tpu.memory_space<smem>>
    %c4_i32_68 = arith.constant 4 : i32
    %220 = arith.muli %c4_i32_68, %217 : i32
    %c0_i32_69 = arith.constant 0 : i32
    %221 = arith.addi %220, %c0_i32_69 : i32
    %222 = arith.index_cast %221 : i32 to index
    %223 = memref.load %arg2[%222] : memref<32xf32, #tpu.memory_space<smem>>
    %cst_70 = arith.constant 5.000000e-01 : f32
    %224 = arith.mulf %223, %cst_70 : f32
    %c4_i32_71 = arith.constant 4 : i32
    %225 = arith.muli %c4_i32_71, %217 : i32
    %c1_i32_72 = arith.constant 1 : i32
    %226 = arith.addi %225, %c1_i32_72 : i32
    %227 = arith.index_cast %226 : i32 to index
    %228 = memref.load %arg2[%227] : memref<32xf32, #tpu.memory_space<smem>>
    %cst_73 = arith.constant 5.000000e-01 : f32
    %229 = arith.mulf %228, %cst_73 : f32
    %c4_i32_74 = arith.constant 4 : i32
    %230 = arith.muli %c4_i32_74, %217 : i32
    %c2_i32_75 = arith.constant 2 : i32
    %231 = arith.addi %230, %c2_i32_75 : i32
    %232 = arith.index_cast %231 : i32 to index
    %233 = memref.load %arg2[%232] : memref<32xf32, #tpu.memory_space<smem>>
    %cst_76 = arith.constant 5.000000e-01 : f32
    %234 = arith.mulf %233, %cst_76 : f32
    %c4_i32_77 = arith.constant 4 : i32
    %235 = arith.muli %c4_i32_77, %217 : i32
    %c3_i32_78 = arith.constant 3 : i32
    %236 = arith.addi %235, %c3_i32_78 : i32
    %237 = arith.index_cast %236 : i32 to index
    %238 = memref.load %arg2[%237] : memref<32xf32, #tpu.memory_space<smem>>
    %cst_79 = arith.constant 5.000000e-01 : f32
    %239 = arith.mulf %238, %cst_79 : f32
    %240 = arith.subf %234, %224 : f32
    %cst_80 = arith.constant 0.000000e+00 : f32
    %241 = arith.maximumf %240, %cst_80 : f32
    %242 = arith.subf %239, %229 : f32
    %cst_81 = arith.constant 0.000000e+00 : f32
    %243 = arith.maximumf %242, %cst_81 : f32
    %cst_82 = arith.constant 7.000000e+00 : f32
    %244 = arith.divf %241, %cst_82 : f32
    %cst_83 = arith.constant 7.000000e+00 : f32
    %245 = arith.divf %243, %cst_83 : f32
    %246 = arith.mulf %244, %245 : f32
    %cst_84 = arith.constant 0.000000e+00 : f32
    %247 = arith.cmpf ogt, %246, %cst_84 : f32
    %cst_85 = arith.constant 1.000000e+00 : f32
    %248 = arith.divf %cst_85, %246 : f32
    %cst_86 = arith.constant 0.000000e+00 : f32
    %249 = arith.select %247, %248, %cst_86 : f32
    %250 = vector.broadcast %245 : f32 to vector<16x64xf32>
    %251 = arith.mulf %250, %15 : vector<16x64xf32>
    %252 = vector.broadcast %229 : f32 to vector<16x64xf32>
    %253 = arith.addf %252, %251 : vector<16x64xf32>
    %254 = vector.broadcast %244 : f32 to vector<16x64xf32>
    %255 = arith.mulf %254, %23 : vector<16x64xf32>
    %256 = vector.broadcast %224 : f32 to vector<16x64xf32>
    %257 = arith.addf %256, %255 : vector<16x64xf32>
    %258 = vector.broadcast %245 : f32 to vector<16x64xf32>
    %259 = arith.addf %253, %258 : vector<16x64xf32>
    %260 = arith.subf %259, %4 : vector<16x64xf32>
    %cst_87 = arith.constant -1.000000e+00 : f32
    %cst_88 = arith.constant 1.000000e+00 : f32
    %261 = vector.broadcast %cst_87 : f32 to vector<16x64xf32>
    %262 = arith.maximumf %261, %260 : vector<16x64xf32>
    %263 = vector.broadcast %cst_88 : f32 to vector<16x64xf32>
    %264 = arith.minimumf %263, %262 : vector<16x64xf32>
    %cst_89 = arith.constant 5.000000e-01 : f32
    %265 = vector.broadcast %cst_89 : f32 to vector<16x64xf32>
    %266 = arith.mulf %265, %264 : vector<16x64xf32>
    %267 = math.absf %264 : vector<16x64xf32>
    %268 = arith.mulf %266, %267 : vector<16x64xf32>
    %269 = arith.subf %264, %268 : vector<16x64xf32>
    %270 = arith.subf %253, %4 : vector<16x64xf32>
    %cst_90 = arith.constant -1.000000e+00 : f32
    %cst_91 = arith.constant 1.000000e+00 : f32
    %271 = vector.broadcast %cst_90 : f32 to vector<16x64xf32>
    %272 = arith.maximumf %271, %270 : vector<16x64xf32>
    %273 = vector.broadcast %cst_91 : f32 to vector<16x64xf32>
    %274 = arith.minimumf %273, %272 : vector<16x64xf32>
    %cst_92 = arith.constant 5.000000e-01 : f32
    %275 = vector.broadcast %cst_92 : f32 to vector<16x64xf32>
    %276 = arith.mulf %275, %274 : vector<16x64xf32>
    %277 = math.absf %274 : vector<16x64xf32>
    %278 = arith.mulf %276, %277 : vector<16x64xf32>
    %279 = arith.subf %274, %278 : vector<16x64xf32>
    %280 = arith.subf %269, %279 : vector<16x64xf32>
    %281 = vector.broadcast %249 : f32 to vector<16x64xf32>
    %282 = arith.mulf %280, %281 : vector<16x64xf32>
    %283 = vector.broadcast %244 : f32 to vector<16x64xf32>
    %284 = arith.addf %257, %283 : vector<16x64xf32>
    %285 = arith.subf %284, %6 : vector<16x64xf32>
    %cst_93 = arith.constant -1.000000e+00 : f32
    %cst_94 = arith.constant 1.000000e+00 : f32
    %286 = vector.broadcast %cst_93 : f32 to vector<16x64xf32>
    %287 = arith.maximumf %286, %285 : vector<16x64xf32>
    %288 = vector.broadcast %cst_94 : f32 to vector<16x64xf32>
    %289 = arith.minimumf %288, %287 : vector<16x64xf32>
    %cst_95 = arith.constant 5.000000e-01 : f32
    %290 = vector.broadcast %cst_95 : f32 to vector<16x64xf32>
    %291 = arith.mulf %290, %289 : vector<16x64xf32>
    %292 = math.absf %289 : vector<16x64xf32>
    %293 = arith.mulf %291, %292 : vector<16x64xf32>
    %294 = arith.subf %289, %293 : vector<16x64xf32>
    %295 = arith.subf %257, %6 : vector<16x64xf32>
    %cst_96 = arith.constant -1.000000e+00 : f32
    %cst_97 = arith.constant 1.000000e+00 : f32
    %296 = vector.broadcast %cst_96 : f32 to vector<16x64xf32>
    %297 = arith.maximumf %296, %295 : vector<16x64xf32>
    %298 = vector.broadcast %cst_97 : f32 to vector<16x64xf32>
    %299 = arith.minimumf %298, %297 : vector<16x64xf32>
    %cst_98 = arith.constant 5.000000e-01 : f32
    %300 = vector.broadcast %cst_98 : f32 to vector<16x64xf32>
    %301 = arith.mulf %300, %299 : vector<16x64xf32>
    %302 = math.absf %299 : vector<16x64xf32>
    %303 = arith.mulf %301, %302 : vector<16x64xf32>
    %304 = arith.subf %299, %303 : vector<16x64xf32>
    %305 = arith.subf %294, %304 : vector<16x64xf32>
    %306 = vector.shape_cast %282 : vector<16x64xf32> to vector<16x1x64xf32>
    %307 = vector.shape_cast %305 : vector<16x64xf32> to vector<1x16x64xf32>
    %308 = vector.broadcast %306 : vector<16x1x64xf32> to vector<16x16x64xf32>
    %309 = vector.broadcast %307 : vector<1x16x64xf32> to vector<16x16x64xf32>
    %310 = arith.mulf %308, %309 : vector<16x16x64xf32>
    %311 = vector.shape_cast %310 : vector<16x16x64xf32> to vector<256x64xf32>
    %c8_i32_99 = arith.constant 8 : i32
    %312 = arith.muli %arg0, %c8_i32_99 : i32
    %c3_i32_100 = arith.constant 3 : i32
    %313 = arith.addi %312, %c3_i32_100 : i32
    %314 = arith.index_cast %313 : i32 to index
    %315 = memref.load %arg1[%314] : memref<8xi32, #tpu.memory_space<smem>>
    %c4_i32_101 = arith.constant 4 : i32
    %316 = arith.muli %c4_i32_101, %313 : i32
    %c0_i32_102 = arith.constant 0 : i32
    %317 = arith.addi %316, %c0_i32_102 : i32
    %318 = arith.index_cast %317 : i32 to index
    %319 = memref.load %arg2[%318] : memref<32xf32, #tpu.memory_space<smem>>
    %cst_103 = arith.constant 5.000000e-01 : f32
    %320 = arith.mulf %319, %cst_103 : f32
    %c4_i32_104 = arith.constant 4 : i32
    %321 = arith.muli %c4_i32_104, %313 : i32
    %c1_i32_105 = arith.constant 1 : i32
    %322 = arith.addi %321, %c1_i32_105 : i32
    %323 = arith.index_cast %322 : i32 to index
    %324 = memref.load %arg2[%323] : memref<32xf32, #tpu.memory_space<smem>>
    %cst_106 = arith.constant 5.000000e-01 : f32
    %325 = arith.mulf %324, %cst_106 : f32
    %c4_i32_107 = arith.constant 4 : i32
    %326 = arith.muli %c4_i32_107, %313 : i32
    %c2_i32_108 = arith.constant 2 : i32
    %327 = arith.addi %326, %c2_i32_108 : i32
    %328 = arith.index_cast %327 : i32 to index
    %329 = memref.load %arg2[%328] : memref<32xf32, #tpu.memory_space<smem>>
    %cst_109 = arith.constant 5.000000e-01 : f32
    %330 = arith.mulf %329, %cst_109 : f32
    %c4_i32_110 = arith.constant 4 : i32
    %331 = arith.muli %c4_i32_110, %313 : i32
    %c3_i32_111 = arith.constant 3 : i32
    %332 = arith.addi %331, %c3_i32_111 : i32
    %333 = arith.index_cast %332 : i32 to index
    %334 = memref.load %arg2[%333] : memref<32xf32, #tpu.memory_space<smem>>
    %cst_112 = arith.constant 5.000000e-01 : f32
    %335 = arith.mulf %334, %cst_112 : f32
    %336 = arith.subf %330, %320 : f32
    %cst_113 = arith.constant 0.000000e+00 : f32
    %337 = arith.maximumf %336, %cst_113 : f32
    %338 = arith.subf %335, %325 : f32
    %cst_114 = arith.constant 0.000000e+00 : f32
    %339 = arith.maximumf %338, %cst_114 : f32
    %cst_115 = arith.constant 7.000000e+00 : f32
    %340 = arith.divf %337, %cst_115 : f32
    %cst_116 = arith.constant 7.000000e+00 : f32
    %341 = arith.divf %339, %cst_116 : f32
    %342 = arith.mulf %340, %341 : f32
    %cst_117 = arith.constant 0.000000e+00 : f32
    %343 = arith.cmpf ogt, %342, %cst_117 : f32
    %cst_118 = arith.constant 1.000000e+00 : f32
    %344 = arith.divf %cst_118, %342 : f32
    %cst_119 = arith.constant 0.000000e+00 : f32
    %345 = arith.select %343, %344, %cst_119 : f32
    %346 = vector.broadcast %341 : f32 to vector<16x64xf32>
    %347 = arith.mulf %346, %15 : vector<16x64xf32>
    %348 = vector.broadcast %325 : f32 to vector<16x64xf32>
    %349 = arith.addf %348, %347 : vector<16x64xf32>
    %350 = vector.broadcast %340 : f32 to vector<16x64xf32>
    %351 = arith.mulf %350, %23 : vector<16x64xf32>
    %352 = vector.broadcast %320 : f32 to vector<16x64xf32>
    %353 = arith.addf %352, %351 : vector<16x64xf32>
    %354 = vector.broadcast %341 : f32 to vector<16x64xf32>
    %355 = arith.addf %349, %354 : vector<16x64xf32>
    %356 = arith.subf %355, %4 : vector<16x64xf32>
    %cst_120 = arith.constant -1.000000e+00 : f32
    %cst_121 = arith.constant 1.000000e+00 : f32
    %357 = vector.broadcast %cst_120 : f32 to vector<16x64xf32>
    %358 = arith.maximumf %357, %356 : vector<16x64xf32>
    %359 = vector.broadcast %cst_121 : f32 to vector<16x64xf32>
    %360 = arith.minimumf %359, %358 : vector<16x64xf32>
    %cst_122 = arith.constant 5.000000e-01 : f32
    %361 = vector.broadcast %cst_122 : f32 to vector<16x64xf32>
    %362 = arith.mulf %361, %360 : vector<16x64xf32>
    %363 = math.absf %360 : vector<16x64xf32>
    %364 = arith.mulf %362, %363 : vector<16x64xf32>
    %365 = arith.subf %360, %364 : vector<16x64xf32>
    %366 = arith.subf %349, %4 : vector<16x64xf32>
    %cst_123 = arith.constant -1.000000e+00 : f32
    %cst_124 = arith.constant 1.000000e+00 : f32
    %367 = vector.broadcast %cst_123 : f32 to vector<16x64xf32>
    %368 = arith.maximumf %367, %366 : vector<16x64xf32>
    %369 = vector.broadcast %cst_124 : f32 to vector<16x64xf32>
    %370 = arith.minimumf %369, %368 : vector<16x64xf32>
    %cst_125 = arith.constant 5.000000e-01 : f32
    %371 = vector.broadcast %cst_125 : f32 to vector<16x64xf32>
    %372 = arith.mulf %371, %370 : vector<16x64xf32>
    %373 = math.absf %370 : vector<16x64xf32>
    %374 = arith.mulf %372, %373 : vector<16x64xf32>
    %375 = arith.subf %370, %374 : vector<16x64xf32>
    %376 = arith.subf %365, %375 : vector<16x64xf32>
    %377 = vector.broadcast %345 : f32 to vector<16x64xf32>
    %378 = arith.mulf %376, %377 : vector<16x64xf32>
    %379 = vector.broadcast %340 : f32 to vector<16x64xf32>
    %380 = arith.addf %353, %379 : vector<16x64xf32>
    %381 = arith.subf %380, %6 : vector<16x64xf32>
    %cst_126 = arith.constant -1.000000e+00 : f32
    %cst_127 = arith.constant 1.000000e+00 : f32
    %382 = vector.broadcast %cst_126 : f32 to vector<16x64xf32>
    %383 = arith.maximumf %382, %381 : vector<16x64xf32>
    %384 = vector.broadcast %cst_127 : f32 to vector<16x64xf32>
    %385 = arith.minimumf %384, %383 : vector<16x64xf32>
    %cst_128 = arith.constant 5.000000e-01 : f32
    %386 = vector.broadcast %cst_128 : f32 to vector<16x64xf32>
    %387 = arith.mulf %386, %385 : vector<16x64xf32>
    %388 = math.absf %385 : vector<16x64xf32>
    %389 = arith.mulf %387, %388 : vector<16x64xf32>
    %390 = arith.subf %385, %389 : vector<16x64xf32>
    %391 = arith.subf %353, %6 : vector<16x64xf32>
    %cst_129 = arith.constant -1.000000e+00 : f32
    %cst_130 = arith.constant 1.000000e+00 : f32
    %392 = vector.broadcast %cst_129 : f32 to vector<16x64xf32>
    %393 = arith.maximumf %392, %391 : vector<16x64xf32>
    %394 = vector.broadcast %cst_130 : f32 to vector<16x64xf32>
    %395 = arith.minimumf %394, %393 : vector<16x64xf32>
    %cst_131 = arith.constant 5.000000e-01 : f32
    %396 = vector.broadcast %cst_131 : f32 to vector<16x64xf32>
    %397 = arith.mulf %396, %395 : vector<16x64xf32>
    %398 = math.absf %395 : vector<16x64xf32>
    %399 = arith.mulf %397, %398 : vector<16x64xf32>
    %400 = arith.subf %395, %399 : vector<16x64xf32>
    %401 = arith.subf %390, %400 : vector<16x64xf32>
    %402 = vector.shape_cast %378 : vector<16x64xf32> to vector<16x1x64xf32>
    %403 = vector.shape_cast %401 : vector<16x64xf32> to vector<1x16x64xf32>
    %404 = vector.broadcast %402 : vector<16x1x64xf32> to vector<16x16x64xf32>
    %405 = vector.broadcast %403 : vector<1x16x64xf32> to vector<16x16x64xf32>
    %406 = arith.mulf %404, %405 : vector<16x16x64xf32>
    %407 = vector.shape_cast %406 : vector<16x16x64xf32> to vector<256x64xf32>
    %c8_i32_132 = arith.constant 8 : i32
    %408 = arith.muli %arg0, %c8_i32_132 : i32
    %c4_i32_133 = arith.constant 4 : i32
    %409 = arith.addi %408, %c4_i32_133 : i32
    %410 = arith.index_cast %409 : i32 to index
    %411 = memref.load %arg1[%410] : memref<8xi32, #tpu.memory_space<smem>>
    %c4_i32_134 = arith.constant 4 : i32
    %412 = arith.muli %c4_i32_134, %409 : i32
    %c0_i32_135 = arith.constant 0 : i32
    %413 = arith.addi %412, %c0_i32_135 : i32
    %414 = arith.index_cast %413 : i32 to index
    %415 = memref.load %arg2[%414] : memref<32xf32, #tpu.memory_space<smem>>
    %cst_136 = arith.constant 5.000000e-01 : f32
    %416 = arith.mulf %415, %cst_136 : f32
    %c4_i32_137 = arith.constant 4 : i32
    %417 = arith.muli %c4_i32_137, %409 : i32
    %c1_i32_138 = arith.constant 1 : i32
    %418 = arith.addi %417, %c1_i32_138 : i32
    %419 = arith.index_cast %418 : i32 to index
    %420 = memref.load %arg2[%419] : memref<32xf32, #tpu.memory_space<smem>>
    %cst_139 = arith.constant 5.000000e-01 : f32
    %421 = arith.mulf %420, %cst_139 : f32
    %c4_i32_140 = arith.constant 4 : i32
    %422 = arith.muli %c4_i32_140, %409 : i32
    %c2_i32_141 = arith.constant 2 : i32
    %423 = arith.addi %422, %c2_i32_141 : i32
    %424 = arith.index_cast %423 : i32 to index
    %425 = memref.load %arg2[%424] : memref<32xf32, #tpu.memory_space<smem>>
    %cst_142 = arith.constant 5.000000e-01 : f32
    %426 = arith.mulf %425, %cst_142 : f32
    %c4_i32_143 = arith.constant 4 : i32
    %427 = arith.muli %c4_i32_143, %409 : i32
    %c3_i32_144 = arith.constant 3 : i32
    %428 = arith.addi %427, %c3_i32_144 : i32
    %429 = arith.index_cast %428 : i32 to index
    %430 = memref.load %arg2[%429] : memref<32xf32, #tpu.memory_space<smem>>
    %cst_145 = arith.constant 5.000000e-01 : f32
    %431 = arith.mulf %430, %cst_145 : f32
    %432 = arith.subf %426, %416 : f32
    %cst_146 = arith.constant 0.000000e+00 : f32
    %433 = arith.maximumf %432, %cst_146 : f32
    %434 = arith.subf %431, %421 : f32
    %cst_147 = arith.constant 0.000000e+00 : f32
    %435 = arith.maximumf %434, %cst_147 : f32
    %cst_148 = arith.constant 7.000000e+00 : f32
    %436 = arith.divf %433, %cst_148 : f32
    %cst_149 = arith.constant 7.000000e+00 : f32
    %437 = arith.divf %435, %cst_149 : f32
    %438 = arith.mulf %436, %437 : f32
    %cst_150 = arith.constant 0.000000e+00 : f32
    %439 = arith.cmpf ogt, %438, %cst_150 : f32
    %cst_151 = arith.constant 1.000000e+00 : f32
    %440 = arith.divf %cst_151, %438 : f32
    %cst_152 = arith.constant 0.000000e+00 : f32
    %441 = arith.select %439, %440, %cst_152 : f32
    %442 = vector.broadcast %437 : f32 to vector<16x64xf32>
    %443 = arith.mulf %442, %15 : vector<16x64xf32>
    %444 = vector.broadcast %421 : f32 to vector<16x64xf32>
    %445 = arith.addf %444, %443 : vector<16x64xf32>
    %446 = vector.broadcast %436 : f32 to vector<16x64xf32>
    %447 = arith.mulf %446, %23 : vector<16x64xf32>
    %448 = vector.broadcast %416 : f32 to vector<16x64xf32>
    %449 = arith.addf %448, %447 : vector<16x64xf32>
    %450 = vector.broadcast %437 : f32 to vector<16x64xf32>
    %451 = arith.addf %445, %450 : vector<16x64xf32>
    %452 = arith.subf %451, %4 : vector<16x64xf32>
    %cst_153 = arith.constant -1.000000e+00 : f32
    %cst_154 = arith.constant 1.000000e+00 : f32
    %453 = vector.broadcast %cst_153 : f32 to vector<16x64xf32>
    %454 = arith.maximumf %453, %452 : vector<16x64xf32>
    %455 = vector.broadcast %cst_154 : f32 to vector<16x64xf32>
    %456 = arith.minimumf %455, %454 : vector<16x64xf32>
    %cst_155 = arith.constant 5.000000e-01 : f32
    %457 = vector.broadcast %cst_155 : f32 to vector<16x64xf32>
    %458 = arith.mulf %457, %456 : vector<16x64xf32>
    %459 = math.absf %456 : vector<16x64xf32>
    %460 = arith.mulf %458, %459 : vector<16x64xf32>
    %461 = arith.subf %456, %460 : vector<16x64xf32>
    %462 = arith.subf %445, %4 : vector<16x64xf32>
    %cst_156 = arith.constant -1.000000e+00 : f32
    %cst_157 = arith.constant 1.000000e+00 : f32
    %463 = vector.broadcast %cst_156 : f32 to vector<16x64xf32>
    %464 = arith.maximumf %463, %462 : vector<16x64xf32>
    %465 = vector.broadcast %cst_157 : f32 to vector<16x64xf32>
    %466 = arith.minimumf %465, %464 : vector<16x64xf32>
    %cst_158 = arith.constant 5.000000e-01 : f32
    %467 = vector.broadcast %cst_158 : f32 to vector<16x64xf32>
    %468 = arith.mulf %467, %466 : vector<16x64xf32>
    %469 = math.absf %466 : vector<16x64xf32>
    %470 = arith.mulf %468, %469 : vector<16x64xf32>
    %471 = arith.subf %466, %470 : vector<16x64xf32>
    %472 = arith.subf %461, %471 : vector<16x64xf32>
    %473 = vector.broadcast %441 : f32 to vector<16x64xf32>
    %474 = arith.mulf %472, %473 : vector<16x64xf32>
    %475 = vector.broadcast %436 : f32 to vector<16x64xf32>
    %476 = arith.addf %449, %475 : vector<16x64xf32>
    %477 = arith.subf %476, %6 : vector<16x64xf32>
    %cst_159 = arith.constant -1.000000e+00 : f32
    %cst_160 = arith.constant 1.000000e+00 : f32
    %478 = vector.broadcast %cst_159 : f32 to vector<16x64xf32>
    %479 = arith.maximumf %478, %477 : vector<16x64xf32>
    %480 = vector.broadcast %cst_160 : f32 to vector<16x64xf32>
    %481 = arith.minimumf %480, %479 : vector<16x64xf32>
    %cst_161 = arith.constant 5.000000e-01 : f32
    %482 = vector.broadcast %cst_161 : f32 to vector<16x64xf32>
    %483 = arith.mulf %482, %481 : vector<16x64xf32>
    %484 = math.absf %481 : vector<16x64xf32>
    %485 = arith.mulf %483, %484 : vector<16x64xf32>
    %486 = arith.subf %481, %485 : vector<16x64xf32>
    %487 = arith.subf %449, %6 : vector<16x64xf32>
    %cst_162 = arith.constant -1.000000e+00 : f32
    %cst_163 = arith.constant 1.000000e+00 : f32
    %488 = vector.broadcast %cst_162 : f32 to vector<16x64xf32>
    %489 = arith.maximumf %488, %487 : vector<16x64xf32>
    %490 = vector.broadcast %cst_163 : f32 to vector<16x64xf32>
    %491 = arith.minimumf %490, %489 : vector<16x64xf32>
    %cst_164 = arith.constant 5.000000e-01 : f32
    %492 = vector.broadcast %cst_164 : f32 to vector<16x64xf32>
    %493 = arith.mulf %492, %491 : vector<16x64xf32>
    %494 = math.absf %491 : vector<16x64xf32>
    %495 = arith.mulf %493, %494 : vector<16x64xf32>
    %496 = arith.subf %491, %495 : vector<16x64xf32>
    %497 = arith.subf %486, %496 : vector<16x64xf32>
    %498 = vector.shape_cast %474 : vector<16x64xf32> to vector<16x1x64xf32>
    %499 = vector.shape_cast %497 : vector<16x64xf32> to vector<1x16x64xf32>
    %500 = vector.broadcast %498 : vector<16x1x64xf32> to vector<16x16x64xf32>
    %501 = vector.broadcast %499 : vector<1x16x64xf32> to vector<16x16x64xf32>
    %502 = arith.mulf %500, %501 : vector<16x16x64xf32>
    %503 = vector.shape_cast %502 : vector<16x16x64xf32> to vector<256x64xf32>
    %c8_i32_165 = arith.constant 8 : i32
    %504 = arith.muli %arg0, %c8_i32_165 : i32
    %c5_i32 = arith.constant 5 : i32
    %505 = arith.addi %504, %c5_i32 : i32
    %506 = arith.index_cast %505 : i32 to index
    %507 = memref.load %arg1[%506] : memref<8xi32, #tpu.memory_space<smem>>
    %c4_i32_166 = arith.constant 4 : i32
    %508 = arith.muli %c4_i32_166, %505 : i32
    %c0_i32_167 = arith.constant 0 : i32
    %509 = arith.addi %508, %c0_i32_167 : i32
    %510 = arith.index_cast %509 : i32 to index
    %511 = memref.load %arg2[%510] : memref<32xf32, #tpu.memory_space<smem>>
    %cst_168 = arith.constant 5.000000e-01 : f32
    %512 = arith.mulf %511, %cst_168 : f32
    %c4_i32_169 = arith.constant 4 : i32
    %513 = arith.muli %c4_i32_169, %505 : i32
    %c1_i32_170 = arith.constant 1 : i32
    %514 = arith.addi %513, %c1_i32_170 : i32
    %515 = arith.index_cast %514 : i32 to index
    %516 = memref.load %arg2[%515] : memref<32xf32, #tpu.memory_space<smem>>
    %cst_171 = arith.constant 5.000000e-01 : f32
    %517 = arith.mulf %516, %cst_171 : f32
    %c4_i32_172 = arith.constant 4 : i32
    %518 = arith.muli %c4_i32_172, %505 : i32
    %c2_i32_173 = arith.constant 2 : i32
    %519 = arith.addi %518, %c2_i32_173 : i32
    %520 = arith.index_cast %519 : i32 to index
    %521 = memref.load %arg2[%520] : memref<32xf32, #tpu.memory_space<smem>>
    %cst_174 = arith.constant 5.000000e-01 : f32
    %522 = arith.mulf %521, %cst_174 : f32
    %c4_i32_175 = arith.constant 4 : i32
    %523 = arith.muli %c4_i32_175, %505 : i32
    %c3_i32_176 = arith.constant 3 : i32
    %524 = arith.addi %523, %c3_i32_176 : i32
    %525 = arith.index_cast %524 : i32 to index
    %526 = memref.load %arg2[%525] : memref<32xf32, #tpu.memory_space<smem>>
    %cst_177 = arith.constant 5.000000e-01 : f32
    %527 = arith.mulf %526, %cst_177 : f32
    %528 = arith.subf %522, %512 : f32
    %cst_178 = arith.constant 0.000000e+00 : f32
    %529 = arith.maximumf %528, %cst_178 : f32
    %530 = arith.subf %527, %517 : f32
    %cst_179 = arith.constant 0.000000e+00 : f32
    %531 = arith.maximumf %530, %cst_179 : f32
    %cst_180 = arith.constant 7.000000e+00 : f32
    %532 = arith.divf %529, %cst_180 : f32
    %cst_181 = arith.constant 7.000000e+00 : f32
    %533 = arith.divf %531, %cst_181 : f32
    %534 = arith.mulf %532, %533 : f32
    %cst_182 = arith.constant 0.000000e+00 : f32
    %535 = arith.cmpf ogt, %534, %cst_182 : f32
    %cst_183 = arith.constant 1.000000e+00 : f32
    %536 = arith.divf %cst_183, %534 : f32
    %cst_184 = arith.constant 0.000000e+00 : f32
    %537 = arith.select %535, %536, %cst_184 : f32
    %538 = vector.broadcast %533 : f32 to vector<16x64xf32>
    %539 = arith.mulf %538, %15 : vector<16x64xf32>
    %540 = vector.broadcast %517 : f32 to vector<16x64xf32>
    %541 = arith.addf %540, %539 : vector<16x64xf32>
    %542 = vector.broadcast %532 : f32 to vector<16x64xf32>
    %543 = arith.mulf %542, %23 : vector<16x64xf32>
    %544 = vector.broadcast %512 : f32 to vector<16x64xf32>
    %545 = arith.addf %544, %543 : vector<16x64xf32>
    %546 = vector.broadcast %533 : f32 to vector<16x64xf32>
    %547 = arith.addf %541, %546 : vector<16x64xf32>
    %548 = arith.subf %547, %4 : vector<16x64xf32>
    %cst_185 = arith.constant -1.000000e+00 : f32
    %cst_186 = arith.constant 1.000000e+00 : f32
    %549 = vector.broadcast %cst_185 : f32 to vector<16x64xf32>
    %550 = arith.maximumf %549, %548 : vector<16x64xf32>
    %551 = vector.broadcast %cst_186 : f32 to vector<16x64xf32>
    %552 = arith.minimumf %551, %550 : vector<16x64xf32>
    %cst_187 = arith.constant 5.000000e-01 : f32
    %553 = vector.broadcast %cst_187 : f32 to vector<16x64xf32>
    %554 = arith.mulf %553, %552 : vector<16x64xf32>
    %555 = math.absf %552 : vector<16x64xf32>
    %556 = arith.mulf %554, %555 : vector<16x64xf32>
    %557 = arith.subf %552, %556 : vector<16x64xf32>
    %558 = arith.subf %541, %4 : vector<16x64xf32>
    %cst_188 = arith.constant -1.000000e+00 : f32
    %cst_189 = arith.constant 1.000000e+00 : f32
    %559 = vector.broadcast %cst_188 : f32 to vector<16x64xf32>
    %560 = arith.maximumf %559, %558 : vector<16x64xf32>
    %561 = vector.broadcast %cst_189 : f32 to vector<16x64xf32>
    %562 = arith.minimumf %561, %560 : vector<16x64xf32>
    %cst_190 = arith.constant 5.000000e-01 : f32
    %563 = vector.broadcast %cst_190 : f32 to vector<16x64xf32>
    %564 = arith.mulf %563, %562 : vector<16x64xf32>
    %565 = math.absf %562 : vector<16x64xf32>
    %566 = arith.mulf %564, %565 : vector<16x64xf32>
    %567 = arith.subf %562, %566 : vector<16x64xf32>
    %568 = arith.subf %557, %567 : vector<16x64xf32>
    %569 = vector.broadcast %537 : f32 to vector<16x64xf32>
    %570 = arith.mulf %568, %569 : vector<16x64xf32>
    %571 = vector.broadcast %532 : f32 to vector<16x64xf32>
    %572 = arith.addf %545, %571 : vector<16x64xf32>
    %573 = arith.subf %572, %6 : vector<16x64xf32>
    %cst_191 = arith.constant -1.000000e+00 : f32
    %cst_192 = arith.constant 1.000000e+00 : f32
    %574 = vector.broadcast %cst_191 : f32 to vector<16x64xf32>
    %575 = arith.maximumf %574, %573 : vector<16x64xf32>
    %576 = vector.broadcast %cst_192 : f32 to vector<16x64xf32>
    %577 = arith.minimumf %576, %575 : vector<16x64xf32>
    %cst_193 = arith.constant 5.000000e-01 : f32
    %578 = vector.broadcast %cst_193 : f32 to vector<16x64xf32>
    %579 = arith.mulf %578, %577 : vector<16x64xf32>
    %580 = math.absf %577 : vector<16x64xf32>
    %581 = arith.mulf %579, %580 : vector<16x64xf32>
    %582 = arith.subf %577, %581 : vector<16x64xf32>
    %583 = arith.subf %545, %6 : vector<16x64xf32>
    %cst_194 = arith.constant -1.000000e+00 : f32
    %cst_195 = arith.constant 1.000000e+00 : f32
    %584 = vector.broadcast %cst_194 : f32 to vector<16x64xf32>
    %585 = arith.maximumf %584, %583 : vector<16x64xf32>
    %586 = vector.broadcast %cst_195 : f32 to vector<16x64xf32>
    %587 = arith.minimumf %586, %585 : vector<16x64xf32>
    %cst_196 = arith.constant 5.000000e-01 : f32
    %588 = vector.broadcast %cst_196 : f32 to vector<16x64xf32>
    %589 = arith.mulf %588, %587 : vector<16x64xf32>
    %590 = math.absf %587 : vector<16x64xf32>
    %591 = arith.mulf %589, %590 : vector<16x64xf32>
    %592 = arith.subf %587, %591 : vector<16x64xf32>
    %593 = arith.subf %582, %592 : vector<16x64xf32>
    %594 = vector.shape_cast %570 : vector<16x64xf32> to vector<16x1x64xf32>
    %595 = vector.shape_cast %593 : vector<16x64xf32> to vector<1x16x64xf32>
    %596 = vector.broadcast %594 : vector<16x1x64xf32> to vector<16x16x64xf32>
    %597 = vector.broadcast %595 : vector<1x16x64xf32> to vector<16x16x64xf32>
    %598 = arith.mulf %596, %597 : vector<16x16x64xf32>
    %599 = vector.shape_cast %598 : vector<16x16x64xf32> to vector<256x64xf32>
    %c8_i32_197 = arith.constant 8 : i32
    %600 = arith.muli %arg0, %c8_i32_197 : i32
    %c6_i32 = arith.constant 6 : i32
    %601 = arith.addi %600, %c6_i32 : i32
    %602 = arith.index_cast %601 : i32 to index
    %603 = memref.load %arg1[%602] : memref<8xi32, #tpu.memory_space<smem>>
    %c4_i32_198 = arith.constant 4 : i32
    %604 = arith.muli %c4_i32_198, %601 : i32
    %c0_i32_199 = arith.constant 0 : i32
    %605 = arith.addi %604, %c0_i32_199 : i32
    %606 = arith.index_cast %605 : i32 to index
    %607 = memref.load %arg2[%606] : memref<32xf32, #tpu.memory_space<smem>>
    %cst_200 = arith.constant 5.000000e-01 : f32
    %608 = arith.mulf %607, %cst_200 : f32
    %c4_i32_201 = arith.constant 4 : i32
    %609 = arith.muli %c4_i32_201, %601 : i32
    %c1_i32_202 = arith.constant 1 : i32
    %610 = arith.addi %609, %c1_i32_202 : i32
    %611 = arith.index_cast %610 : i32 to index
    %612 = memref.load %arg2[%611] : memref<32xf32, #tpu.memory_space<smem>>
    %cst_203 = arith.constant 5.000000e-01 : f32
    %613 = arith.mulf %612, %cst_203 : f32
    %c4_i32_204 = arith.constant 4 : i32
    %614 = arith.muli %c4_i32_204, %601 : i32
    %c2_i32_205 = arith.constant 2 : i32
    %615 = arith.addi %614, %c2_i32_205 : i32
    %616 = arith.index_cast %615 : i32 to index
    %617 = memref.load %arg2[%616] : memref<32xf32, #tpu.memory_space<smem>>
    %cst_206 = arith.constant 5.000000e-01 : f32
    %618 = arith.mulf %617, %cst_206 : f32
    %c4_i32_207 = arith.constant 4 : i32
    %619 = arith.muli %c4_i32_207, %601 : i32
    %c3_i32_208 = arith.constant 3 : i32
    %620 = arith.addi %619, %c3_i32_208 : i32
    %621 = arith.index_cast %620 : i32 to index
    %622 = memref.load %arg2[%621] : memref<32xf32, #tpu.memory_space<smem>>
    %cst_209 = arith.constant 5.000000e-01 : f32
    %623 = arith.mulf %622, %cst_209 : f32
    %624 = arith.subf %618, %608 : f32
    %cst_210 = arith.constant 0.000000e+00 : f32
    %625 = arith.maximumf %624, %cst_210 : f32
    %626 = arith.subf %623, %613 : f32
    %cst_211 = arith.constant 0.000000e+00 : f32
    %627 = arith.maximumf %626, %cst_211 : f32
    %cst_212 = arith.constant 7.000000e+00 : f32
    %628 = arith.divf %625, %cst_212 : f32
    %cst_213 = arith.constant 7.000000e+00 : f32
    %629 = arith.divf %627, %cst_213 : f32
    %630 = arith.mulf %628, %629 : f32
    %cst_214 = arith.constant 0.000000e+00 : f32
    %631 = arith.cmpf ogt, %630, %cst_214 : f32
    %cst_215 = arith.constant 1.000000e+00 : f32
    %632 = arith.divf %cst_215, %630 : f32
    %cst_216 = arith.constant 0.000000e+00 : f32
    %633 = arith.select %631, %632, %cst_216 : f32
    %634 = vector.broadcast %629 : f32 to vector<16x64xf32>
    %635 = arith.mulf %634, %15 : vector<16x64xf32>
    %636 = vector.broadcast %613 : f32 to vector<16x64xf32>
    %637 = arith.addf %636, %635 : vector<16x64xf32>
    %638 = vector.broadcast %628 : f32 to vector<16x64xf32>
    %639 = arith.mulf %638, %23 : vector<16x64xf32>
    %640 = vector.broadcast %608 : f32 to vector<16x64xf32>
    %641 = arith.addf %640, %639 : vector<16x64xf32>
    %642 = vector.broadcast %629 : f32 to vector<16x64xf32>
    %643 = arith.addf %637, %642 : vector<16x64xf32>
    %644 = arith.subf %643, %4 : vector<16x64xf32>
    %cst_217 = arith.constant -1.000000e+00 : f32
    %cst_218 = arith.constant 1.000000e+00 : f32
    %645 = vector.broadcast %cst_217 : f32 to vector<16x64xf32>
    %646 = arith.maximumf %645, %644 : vector<16x64xf32>
    %647 = vector.broadcast %cst_218 : f32 to vector<16x64xf32>
    %648 = arith.minimumf %647, %646 : vector<16x64xf32>
    %cst_219 = arith.constant 5.000000e-01 : f32
    %649 = vector.broadcast %cst_219 : f32 to vector<16x64xf32>
    %650 = arith.mulf %649, %648 : vector<16x64xf32>
    %651 = math.absf %648 : vector<16x64xf32>
    %652 = arith.mulf %650, %651 : vector<16x64xf32>
    %653 = arith.subf %648, %652 : vector<16x64xf32>
    %654 = arith.subf %637, %4 : vector<16x64xf32>
    %cst_220 = arith.constant -1.000000e+00 : f32
    %cst_221 = arith.constant 1.000000e+00 : f32
    %655 = vector.broadcast %cst_220 : f32 to vector<16x64xf32>
    %656 = arith.maximumf %655, %654 : vector<16x64xf32>
    %657 = vector.broadcast %cst_221 : f32 to vector<16x64xf32>
    %658 = arith.minimumf %657, %656 : vector<16x64xf32>
    %cst_222 = arith.constant 5.000000e-01 : f32
    %659 = vector.broadcast %cst_222 : f32 to vector<16x64xf32>
    %660 = arith.mulf %659, %658 : vector<16x64xf32>
    %661 = math.absf %658 : vector<16x64xf32>
    %662 = arith.mulf %660, %661 : vector<16x64xf32>
    %663 = arith.subf %658, %662 : vector<16x64xf32>
    %664 = arith.subf %653, %663 : vector<16x64xf32>
    %665 = vector.broadcast %633 : f32 to vector<16x64xf32>
    %666 = arith.mulf %664, %665 : vector<16x64xf32>
    %667 = vector.broadcast %628 : f32 to vector<16x64xf32>
    %668 = arith.addf %641, %667 : vector<16x64xf32>
    %669 = arith.subf %668, %6 : vector<16x64xf32>
    %cst_223 = arith.constant -1.000000e+00 : f32
    %cst_224 = arith.constant 1.000000e+00 : f32
    %670 = vector.broadcast %cst_223 : f32 to vector<16x64xf32>
    %671 = arith.maximumf %670, %669 : vector<16x64xf32>
    %672 = vector.broadcast %cst_224 : f32 to vector<16x64xf32>
    %673 = arith.minimumf %672, %671 : vector<16x64xf32>
    %cst_225 = arith.constant 5.000000e-01 : f32
    %674 = vector.broadcast %cst_225 : f32 to vector<16x64xf32>
    %675 = arith.mulf %674, %673 : vector<16x64xf32>
    %676 = math.absf %673 : vector<16x64xf32>
    %677 = arith.mulf %675, %676 : vector<16x64xf32>
    %678 = arith.subf %673, %677 : vector<16x64xf32>
    %679 = arith.subf %641, %6 : vector<16x64xf32>
    %cst_226 = arith.constant -1.000000e+00 : f32
    %cst_227 = arith.constant 1.000000e+00 : f32
    %680 = vector.broadcast %cst_226 : f32 to vector<16x64xf32>
    %681 = arith.maximumf %680, %679 : vector<16x64xf32>
    %682 = vector.broadcast %cst_227 : f32 to vector<16x64xf32>
    %683 = arith.minimumf %682, %681 : vector<16x64xf32>
    %cst_228 = arith.constant 5.000000e-01 : f32
    %684 = vector.broadcast %cst_228 : f32 to vector<16x64xf32>
    %685 = arith.mulf %684, %683 : vector<16x64xf32>
    %686 = math.absf %683 : vector<16x64xf32>
    %687 = arith.mulf %685, %686 : vector<16x64xf32>
    %688 = arith.subf %683, %687 : vector<16x64xf32>
    %689 = arith.subf %678, %688 : vector<16x64xf32>
    %690 = vector.shape_cast %666 : vector<16x64xf32> to vector<16x1x64xf32>
    %691 = vector.shape_cast %689 : vector<16x64xf32> to vector<1x16x64xf32>
    %692 = vector.broadcast %690 : vector<16x1x64xf32> to vector<16x16x64xf32>
    %693 = vector.broadcast %691 : vector<1x16x64xf32> to vector<16x16x64xf32>
    %694 = arith.mulf %692, %693 : vector<16x16x64xf32>
    %695 = vector.shape_cast %694 : vector<16x16x64xf32> to vector<256x64xf32>
    %c8_i32_229 = arith.constant 8 : i32
    %696 = arith.muli %arg0, %c8_i32_229 : i32
    %c7_i32 = arith.constant 7 : i32
    %697 = arith.addi %696, %c7_i32 : i32
    %698 = arith.index_cast %697 : i32 to index
    %699 = memref.load %arg1[%698] : memref<8xi32, #tpu.memory_space<smem>>
    %c4_i32_230 = arith.constant 4 : i32
    %700 = arith.muli %c4_i32_230, %697 : i32
    %c0_i32_231 = arith.constant 0 : i32
    %701 = arith.addi %700, %c0_i32_231 : i32
    %702 = arith.index_cast %701 : i32 to index
    %703 = memref.load %arg2[%702] : memref<32xf32, #tpu.memory_space<smem>>
    %cst_232 = arith.constant 5.000000e-01 : f32
    %704 = arith.mulf %703, %cst_232 : f32
    %c4_i32_233 = arith.constant 4 : i32
    %705 = arith.muli %c4_i32_233, %697 : i32
    %c1_i32_234 = arith.constant 1 : i32
    %706 = arith.addi %705, %c1_i32_234 : i32
    %707 = arith.index_cast %706 : i32 to index
    %708 = memref.load %arg2[%707] : memref<32xf32, #tpu.memory_space<smem>>
    %cst_235 = arith.constant 5.000000e-01 : f32
    %709 = arith.mulf %708, %cst_235 : f32
    %c4_i32_236 = arith.constant 4 : i32
    %710 = arith.muli %c4_i32_236, %697 : i32
    %c2_i32_237 = arith.constant 2 : i32
    %711 = arith.addi %710, %c2_i32_237 : i32
    %712 = arith.index_cast %711 : i32 to index
    %713 = memref.load %arg2[%712] : memref<32xf32, #tpu.memory_space<smem>>
    %cst_238 = arith.constant 5.000000e-01 : f32
    %714 = arith.mulf %713, %cst_238 : f32
    %c4_i32_239 = arith.constant 4 : i32
    %715 = arith.muli %c4_i32_239, %697 : i32
    %c3_i32_240 = arith.constant 3 : i32
    %716 = arith.addi %715, %c3_i32_240 : i32
    %717 = arith.index_cast %716 : i32 to index
    %718 = memref.load %arg2[%717] : memref<32xf32, #tpu.memory_space<smem>>
    %cst_241 = arith.constant 5.000000e-01 : f32
    %719 = arith.mulf %718, %cst_241 : f32
    %720 = arith.subf %714, %704 : f32
    %cst_242 = arith.constant 0.000000e+00 : f32
    %721 = arith.maximumf %720, %cst_242 : f32
    %722 = arith.subf %719, %709 : f32
    %cst_243 = arith.constant 0.000000e+00 : f32
    %723 = arith.maximumf %722, %cst_243 : f32
    %cst_244 = arith.constant 7.000000e+00 : f32
    %724 = arith.divf %721, %cst_244 : f32
    %cst_245 = arith.constant 7.000000e+00 : f32
    %725 = arith.divf %723, %cst_245 : f32
    %726 = arith.mulf %724, %725 : f32
    %cst_246 = arith.constant 0.000000e+00 : f32
    %727 = arith.cmpf ogt, %726, %cst_246 : f32
    %cst_247 = arith.constant 1.000000e+00 : f32
    %728 = arith.divf %cst_247, %726 : f32
    %cst_248 = arith.constant 0.000000e+00 : f32
    %729 = arith.select %727, %728, %cst_248 : f32
    %730 = vector.broadcast %725 : f32 to vector<16x64xf32>
    %731 = arith.mulf %730, %15 : vector<16x64xf32>
    %732 = vector.broadcast %709 : f32 to vector<16x64xf32>
    %733 = arith.addf %732, %731 : vector<16x64xf32>
    %734 = vector.broadcast %724 : f32 to vector<16x64xf32>
    %735 = arith.mulf %734, %23 : vector<16x64xf32>
    %736 = vector.broadcast %704 : f32 to vector<16x64xf32>
    %737 = arith.addf %736, %735 : vector<16x64xf32>
    %738 = vector.broadcast %725 : f32 to vector<16x64xf32>
    %739 = arith.addf %733, %738 : vector<16x64xf32>
    %740 = arith.subf %739, %4 : vector<16x64xf32>
    %cst_249 = arith.constant -1.000000e+00 : f32
    %cst_250 = arith.constant 1.000000e+00 : f32
    %741 = vector.broadcast %cst_249 : f32 to vector<16x64xf32>
    %742 = arith.maximumf %741, %740 : vector<16x64xf32>
    %743 = vector.broadcast %cst_250 : f32 to vector<16x64xf32>
    %744 = arith.minimumf %743, %742 : vector<16x64xf32>
    %cst_251 = arith.constant 5.000000e-01 : f32
    %745 = vector.broadcast %cst_251 : f32 to vector<16x64xf32>
    %746 = arith.mulf %745, %744 : vector<16x64xf32>
    %747 = math.absf %744 : vector<16x64xf32>
    %748 = arith.mulf %746, %747 : vector<16x64xf32>
    %749 = arith.subf %744, %748 : vector<16x64xf32>
    %750 = arith.subf %733, %4 : vector<16x64xf32>
    %cst_252 = arith.constant -1.000000e+00 : f32
    %cst_253 = arith.constant 1.000000e+00 : f32
    %751 = vector.broadcast %cst_252 : f32 to vector<16x64xf32>
    %752 = arith.maximumf %751, %750 : vector<16x64xf32>
    %753 = vector.broadcast %cst_253 : f32 to vector<16x64xf32>
    %754 = arith.minimumf %753, %752 : vector<16x64xf32>
    %cst_254 = arith.constant 5.000000e-01 : f32
    %755 = vector.broadcast %cst_254 : f32 to vector<16x64xf32>
    %756 = arith.mulf %755, %754 : vector<16x64xf32>
    %757 = math.absf %754 : vector<16x64xf32>
    %758 = arith.mulf %756, %757 : vector<16x64xf32>
    %759 = arith.subf %754, %758 : vector<16x64xf32>
    %760 = arith.subf %749, %759 : vector<16x64xf32>
    %761 = vector.broadcast %729 : f32 to vector<16x64xf32>
    %762 = arith.mulf %760, %761 : vector<16x64xf32>
    %763 = vector.broadcast %724 : f32 to vector<16x64xf32>
    %764 = arith.addf %737, %763 : vector<16x64xf32>
    %765 = arith.subf %764, %6 : vector<16x64xf32>
    %cst_255 = arith.constant -1.000000e+00 : f32
    %cst_256 = arith.constant 1.000000e+00 : f32
    %766 = vector.broadcast %cst_255 : f32 to vector<16x64xf32>
    %767 = arith.maximumf %766, %765 : vector<16x64xf32>
    %768 = vector.broadcast %cst_256 : f32 to vector<16x64xf32>
    %769 = arith.minimumf %768, %767 : vector<16x64xf32>
    %cst_257 = arith.constant 5.000000e-01 : f32
    %770 = vector.broadcast %cst_257 : f32 to vector<16x64xf32>
    %771 = arith.mulf %770, %769 : vector<16x64xf32>
    %772 = math.absf %769 : vector<16x64xf32>
    %773 = arith.mulf %771, %772 : vector<16x64xf32>
    %774 = arith.subf %769, %773 : vector<16x64xf32>
    %775 = arith.subf %737, %6 : vector<16x64xf32>
    %cst_258 = arith.constant -1.000000e+00 : f32
    %cst_259 = arith.constant 1.000000e+00 : f32
    %776 = vector.broadcast %cst_258 : f32 to vector<16x64xf32>
    %777 = arith.maximumf %776, %775 : vector<16x64xf32>
    %778 = vector.broadcast %cst_259 : f32 to vector<16x64xf32>
    %779 = arith.minimumf %778, %777 : vector<16x64xf32>
    %cst_260 = arith.constant 5.000000e-01 : f32
    %780 = vector.broadcast %cst_260 : f32 to vector<16x64xf32>
    %781 = arith.mulf %780, %779 : vector<16x64xf32>
    %782 = math.absf %779 : vector<16x64xf32>
    %783 = arith.mulf %781, %782 : vector<16x64xf32>
    %784 = arith.subf %779, %783 : vector<16x64xf32>
    %785 = arith.subf %774, %784 : vector<16x64xf32>
    %786 = vector.shape_cast %762 : vector<16x64xf32> to vector<16x1x64xf32>
    %787 = vector.shape_cast %785 : vector<16x64xf32> to vector<1x16x64xf32>
    %788 = vector.broadcast %786 : vector<16x1x64xf32> to vector<16x16x64xf32>
    %789 = vector.broadcast %787 : vector<1x16x64xf32> to vector<16x16x64xf32>
    %790 = arith.mulf %788, %789 : vector<16x16x64xf32>
    %791 = vector.shape_cast %790 : vector<16x16x64xf32> to vector<256x64xf32>
    %792 = arith.index_cast %27 : i32 to index
    %c0 = arith.constant 0 : index
    %c0_261 = arith.constant 0 : index
    %793 = vector.load %arg5[%792, %c0, %c0_261] : memref<2x4x256xf32, #tpu.memory_space<vmem>>, vector<1x4x256xf32>
    %794 = vector.shape_cast %793 : vector<1x4x256xf32> to vector<4x256xf32>
    %cst_262 = arith.constant dense<0.000000e+00> : vector<4x64xf32>
    %795 = tpu.matmul %794, %119, %cst_262 {dimension_numbers = #tpu.dot_dimension_numbers<[1], [0], [0], [1], [0, 0, 1, 1], [], []>} : vector<4x256xf32>, vector<256x64xf32>, vector<4x64xf32> -> vector<4x64xf32>
    %796 = arith.index_cast %123 : i32 to index
    %c0_263 = arith.constant 0 : index
    %c0_264 = arith.constant 0 : index
    %797 = vector.load %arg5[%796, %c0_263, %c0_264] : memref<2x4x256xf32, #tpu.memory_space<vmem>>, vector<1x4x256xf32>
    %798 = vector.shape_cast %797 : vector<1x4x256xf32> to vector<4x256xf32>
    %cst_265 = arith.constant dense<0.000000e+00> : vector<4x64xf32>
    %799 = tpu.matmul %798, %215, %cst_265 {dimension_numbers = #tpu.dot_dimension_numbers<[1], [0], [0], [1], [0, 0, 1, 1], [], []>} : vector<4x256xf32>, vector<256x64xf32>, vector<4x64xf32> -> vector<4x64xf32>
    %800 = arith.index_cast %219 : i32 to index
    %c0_266 = arith.constant 0 : index
    %c0_267 = arith.constant 0 : index
    %801 = vector.load %arg5[%800, %c0_266, %c0_267] : memref<2x4x256xf32, #tpu.memory_space<vmem>>, vector<1x4x256xf32>
    %802 = vector.shape_cast %801 : vector<1x4x256xf32> to vector<4x256xf32>
    %cst_268 = arith.constant dense<0.000000e+00> : vector<4x64xf32>
    %803 = tpu.matmul %802, %311, %cst_268 {dimension_numbers = #tpu.dot_dimension_numbers<[1], [0], [0], [1], [0, 0, 1, 1], [], []>} : vector<4x256xf32>, vector<256x64xf32>, vector<4x64xf32> -> vector<4x64xf32>
    %804 = arith.index_cast %315 : i32 to index
    %c0_269 = arith.constant 0 : index
    %c0_270 = arith.constant 0 : index
    %805 = vector.load %arg5[%804, %c0_269, %c0_270] : memref<2x4x256xf32, #tpu.memory_space<vmem>>, vector<1x4x256xf32>
    %806 = vector.shape_cast %805 : vector<1x4x256xf32> to vector<4x256xf32>
    %cst_271 = arith.constant dense<0.000000e+00> : vector<4x64xf32>
    %807 = tpu.matmul %806, %407, %cst_271 {dimension_numbers = #tpu.dot_dimension_numbers<[1], [0], [0], [1], [0, 0, 1, 1], [], []>} : vector<4x256xf32>, vector<256x64xf32>, vector<4x64xf32> -> vector<4x64xf32>
    %808 = arith.index_cast %411 : i32 to index
    %c0_272 = arith.constant 0 : index
    %c0_273 = arith.constant 0 : index
    %809 = vector.load %arg5[%808, %c0_272, %c0_273] : memref<2x4x256xf32, #tpu.memory_space<vmem>>, vector<1x4x256xf32>
    %810 = vector.shape_cast %809 : vector<1x4x256xf32> to vector<4x256xf32>
    %cst_274 = arith.constant dense<0.000000e+00> : vector<4x64xf32>
    %811 = tpu.matmul %810, %503, %cst_274 {dimension_numbers = #tpu.dot_dimension_numbers<[1], [0], [0], [1], [0, 0, 1, 1], [], []>} : vector<4x256xf32>, vector<256x64xf32>, vector<4x64xf32> -> vector<4x64xf32>
    %812 = arith.index_cast %507 : i32 to index
    %c0_275 = arith.constant 0 : index
    %c0_276 = arith.constant 0 : index
    %813 = vector.load %arg5[%812, %c0_275, %c0_276] : memref<2x4x256xf32, #tpu.memory_space<vmem>>, vector<1x4x256xf32>
    %814 = vector.shape_cast %813 : vector<1x4x256xf32> to vector<4x256xf32>
    %cst_277 = arith.constant dense<0.000000e+00> : vector<4x64xf32>
    %815 = tpu.matmul %814, %599, %cst_277 {dimension_numbers = #tpu.dot_dimension_numbers<[1], [0], [0], [1], [0, 0, 1, 1], [], []>} : vector<4x256xf32>, vector<256x64xf32>, vector<4x64xf32> -> vector<4x64xf32>
    %816 = arith.index_cast %603 : i32 to index
    %c0_278 = arith.constant 0 : index
    %c0_279 = arith.constant 0 : index
    %817 = vector.load %arg5[%816, %c0_278, %c0_279] : memref<2x4x256xf32, #tpu.memory_space<vmem>>, vector<1x4x256xf32>
    %818 = vector.shape_cast %817 : vector<1x4x256xf32> to vector<4x256xf32>
    %cst_280 = arith.constant dense<0.000000e+00> : vector<4x64xf32>
    %819 = tpu.matmul %818, %695, %cst_280 {dimension_numbers = #tpu.dot_dimension_numbers<[1], [0], [0], [1], [0, 0, 1, 1], [], []>} : vector<4x256xf32>, vector<256x64xf32>, vector<4x64xf32> -> vector<4x64xf32>
    %820 = arith.index_cast %699 : i32 to index
    %c0_281 = arith.constant 0 : index
    %c0_282 = arith.constant 0 : index
    %821 = vector.load %arg5[%820, %c0_281, %c0_282] : memref<2x4x256xf32, #tpu.memory_space<vmem>>, vector<1x4x256xf32>
    %822 = vector.shape_cast %821 : vector<1x4x256xf32> to vector<4x256xf32>
    %cst_283 = arith.constant dense<0.000000e+00> : vector<4x64xf32>
    %823 = tpu.matmul %822, %791, %cst_283 {dimension_numbers = #tpu.dot_dimension_numbers<[1], [0], [0], [1], [0, 0, 1, 1], [], []>} : vector<4x256xf32>, vector<256x64xf32>, vector<4x64xf32> -> vector<4x64xf32>
    %824 = tpu.concatenate %795, %799, %803, %807, %811, %815, %819, %823 in 1 : vector<4x64xf32>, vector<4x64xf32>, vector<4x64xf32>, vector<4x64xf32>, vector<4x64xf32>, vector<4x64xf32>, vector<4x64xf32>, vector<4x64xf32> -> vector<4x512xf32>
    %c0_284 = arith.constant 0 : index
    %c0_285 = arith.constant 0 : index
    %c0_286 = arith.constant 0 : index
    %825 = vector.load %arg4[%c0_284, %c0_285, %c0_286] : memref<1x4x512xf32, #tpu.memory_space<vmem>>, vector<1x4x512xf32>
    %826 = vector.shape_cast %825 : vector<1x4x512xf32> to vector<4x512xf32>
    %827 = vector.shape_cast %824 : vector<4x512xf32> to vector<1x4x512xf32>
    tpu.vector_store %arg4[%c0_284, %c0_285, %c0_286], %827 {strides = array<i32>} : memref<1x4x512xf32, #tpu.memory_space<vmem>>, vector<1x4x512xf32>,
    return
  }
  func.func @transform_0(%arg0: i32) -> i32 {
    %c0_i32 = arith.constant 0 : i32
    %c0_i32_0 = arith.constant 0 : i32
    return %c0_i32 : i32
  }
  func.func @transform_1(%arg0: i32) -> i32 {
    %c0_i32 = arith.constant 0 : i32
    %c0_i32_0 = arith.constant 0 : i32
    return %c0_i32 : i32
  }
  func.func @transform_3(%arg0: i32) -> (i32, i32, i32) {
    %c0_i32 = arith.constant 0 : i32
    %c0_i32_0 = arith.constant 0 : i32
    %c0_i32_1 = arith.constant 0 : i32
    return %arg0, %c0_i32, %c0_i32_0 : i32, i32, i32
  }
}

</mosaic_0001>

<llo_original>
// kernel: tpu_custom_call.1
$region0: #{tpu_custom_call.1}
  #allocation0 [shape = 'u32[]', space=smem, size = 0x4, offset = 0x4, fixed_abs, tag = 'smem constant byte address 0x4 - core index']
  #allocation1 [shape = 'u32[144,128]{1,0:T(1,128)}', space=vmem, size = 0x12000, scoped, tag = 'internal scratch']
  #allocation2 [shape = 'f32[2,4,256]{2,1,0:T(4,128)}', space=vmem, size = 0x2000, scoped, tag = 'scratch operand']
  #allocation10 [shape = 's32[]', space=sflag, size = 0x4, offset = 0, fixed_abs, tag = 'sflag constant byte address 0x0 - dummy sync flag']
  #allocation11 [shape = 's32[]', space=sflag, size = 0x4, offset = 0, fixed_abs, tag = 'sflag constant byte address 0x0 - dummy sync flag']
  #allocation12 [shape = 'u32[]', space=smem, size = 0x4, offset = 0x44, fixed_abs, tag = 'smem constant byte address 0x44 - assertion arg 0']
  #allocation13 [shape = 'u32[]', space=smem, size = 0x4, offset = 0x48, fixed_abs, tag = 'smem constant byte address 0x48 - assertion arg 1']
  %s0 = inlined_call_operand.hbm [shape: s32[8], index: 0, kind: input, shape index: {}]
  %s1 = inlined_call_operand.vmem [shape: f32[32], index: 1, kind: input, shape index: {}]
  %s2 = inlined_call_operand.hbm [shape: f32[2,4,256], index: 2, kind: input, shape index: {}]
  %s3 = inlined_call_operand.hbm [shape: f32[1,4,512], index: 3, kind: output, shape index: {}]
  %s4 = sld [smem:[#allocation0]]
  $region35: #{tpu_custom_call.1} parent=0
    _
  %s6 = ssub.s32 1, %s4
  %s7 = scalar_select 0, %s6, %s4
  $region1: #{tpu_custom_call.1} parent=0
    #allocation3 [shape = 'u8[512]{0}', space=smem, size = 0x200, scoped, tag = 'input window, operand 0, single buffered']
    #allocation4 [shape = 's32[1]{0}', space=sflag, size = 0x4, scoped, tag = 'scoped memory for tpu_custom_call.1']
    #allocation5 [shape = 's32[1]{0}', space=sflag, size = 0x4, scoped, tag = 'scoped memory for tpu_custom_call.1']
    #allocation6 [shape = 's32[1]{0}', space=sflag, size = 0x4, scoped, tag = 'scoped memory for tpu_custom_call.1']
    #allocation7 [shape = 'u8[512]{0}', space=smem, size = 0x200, scoped, tag = 'input window, operand 1, single buffered']
    #allocation8 [shape = 'u8[8192]{0}', space=vmem, size = 0x2000, scoped, tag = 'output window, operand 0, single buffered']
    %8 = vsyncpa [#allocation5], 0
    %9 = vsyncpa [#allocation6], 0
    %10 = vsyncpa [#allocation4], 0
    // Predicated region
    $region2: #{tpu_custom_call.1} parent=1 // pred_check
      _
    $region3: #{tpu_custom_call.1} parent=1 // pred_check_branch
      %12 = sbr.rel (0) target = $region5
    $region4: #{tpu_custom_call.1} parent=1 // pred_region
      %s14 = ssub.s32 16, 16
      %15 = vsyncadd [#allocation5], %s14
      %18 = dma.hbm_to_smem %s0, 16, [#allocation3], [#allocation5]
    $region5: #{tpu_custom_call.1} parent=1 // pred_fallthru
      _
    // Predicated region
    $region6: #{tpu_custom_call.1} parent=1 // pred_check
      _
    $region7: #{tpu_custom_call.1} parent=1 // pred_check_branch
      %20 = sbr.rel (0) target = $region9
    $region8: #{tpu_custom_call.1} parent=1 // pred_region
      %s22 = ssub.s32 16, 16
      %23 = vsyncadd [#allocation6], %s22
      %s25 = sshll.u32 %s1, 4
      %s26 = int_to_ptr.vmem [resolvable:$true] %s25
      %28 = dma.vmem_to_smem %s26, 16, [#allocation7], [#allocation6]
    $region9: #{tpu_custom_call.1} parent=1 // pred_fallthru
      _
    // Predicated region
    $region10: #{tpu_custom_call.1} parent=1 // pred_check
      _
    $region11: #{tpu_custom_call.1} parent=1 // pred_check_branch
      %30 = sbr.rel (0) target = $region13
    $region12: #{tpu_custom_call.1} parent=1 // pred_region
      %31 = dma.done [#allocation5], 16
    $region13: #{tpu_custom_call.1} parent=1 // pred_fallthru
      _
    // Predicated region
    $region14: #{tpu_custom_call.1} parent=1 // pred_check
      _
    $region15: #{tpu_custom_call.1} parent=1 // pred_check_branch
      %33 = sbr.rel (0) target = $region17
    $region16: #{tpu_custom_call.1} parent=1 // pred_region
      %34 = dma.done [#allocation6], 16
    $region17: #{tpu_custom_call.1} parent=1 // pred_fallthru
      _
    %35 = sfence
    %p36 = scmp.eq.s32.totalorder 0, 0
    // Predicated region
    $region18: #{tpu_custom_call.1} parent=1 // pred_check
      %p37 = pneg %p36
    $region19: #{tpu_custom_call.1} parent=1 // pred_check_branch
      %39 = sbr.rel (%p37) target = $region21
    $region20: #{tpu_custom_call.1} parent=1 // pred_region
      $region22: #{tpu_custom_call.1} parent=20
        #allocation9 [shape = 's32[1]{0}', space=sflag, size = 0x4, scoped, tag = 'scoped memory for tpu_custom_call.1']
        // Predicated region
        $region23: #{tpu_custom_call.1} parent=22 // pred_check
          _
        $region24: #{tpu_custom_call.1} parent=22 // pred_check_branch
          %41 = sbr.rel target = $region26
        $region25: #{tpu_custom_call.1} parent=22 // pred_region
          %42 = sst [smem:[#allocation12]] [#allocation11]
          %43 = sst [smem:[#allocation13]] [#allocation10]
        $region26: #{tpu_custom_call.1} parent=22 // pred_fallthru
          _
        %45 = shalt.err (0)
        %s47 = sshll.u32 [#allocation2], 4
        %s48 = int_to_ptr.vmem [resolvable:$true] %s47
        %50 = dma.hbm_to_vmem [thread:$0]  %s2, 256, %s48, [#allocation9]
        %s51 = smul.u32 4, 2
        %s52 = smul.u32 %s51, 1
        %s53 = smul.u32 %s52, 2
        %s54 = sshll.u32 %s53, 4
        %55 = dma.done [#allocation9], %s54
    $region21: #{tpu_custom_call.1} parent=1 // pred_fallthru
      _
    %v56 = vlaneseq
    %v57 = vshrl.u32 %v56, 7
    %v58 = vadd.s32 %v57, 8
    %v59 = vcvt.s32.f32 %v57
    %v60 = vcvt.s32.f32 %v58
    %v61 = vlaneseq
    %v62 = vand.u32 %v61, 127
    %v63 = vcvt.s32.f32 %v62
    %v64 = vadd.f32 %v63, 0.5
    %v65 = vmul.f32 %v64, 0.14285715
    %v66 = vfloor.f32 %v65
    %v67 = vmul.f32 %v66, 7.0
    %v68 = vsub.f32 %v63, %v67
    %s69 = smul.u32 0, 8
    %s70 = sld [smem:[#allocation3 + %s69]]
    %s71 = smul.u32 0, 32
    %s72 = sld [smem:[#allocation7 + %s71]]
    %s73 = smul.f32 %s72, 0.5
    %s74 = sadd.s32 %s71, 1
    %s75 = sld [smem:[#allocation7 + %s74]]
    %s76 = smul.f32 %s75, 0.5
    %s77 = sadd.s32 %s71, 2
    %s78 = sld [smem:[#allocation7 + %s77]]
    %s79 = smul.f32 %s78, 0.5
    %s80 = sadd.s32 %s71, 3
    %s81 = sld [smem:[#allocation7 + %s80]]
    %s82 = smul.f32 %s81, 0.5
    %s83 = ssub.f32 %s79, %s73
    %s84 = smax.f32 %s83, 0.0
    %s85 = ssub.f32 %s82, %s76
    %s86 = smax.f32 %s85, 0.0
    %v87 = vrcp.pop 7.0
    %s88 = vtos %v87
    %s89 = smul.f32 %s84, %s88
    %v90 = vrcp.pop 7.0
    %s91 = vtos %v90
    %s92 = smul.f32 %s86, %s91
    %s93 = smul.f32 %s89, %s92
    %p94 = scmp.gt.f32.partialorder %s93, 0.0
    %v95 = vstv %s93
    %v96 = vrcp.pop %v95
    %s97 = vtos %v96
    %s98 = scalar_select %p94, %s97, 0.0
    %v99 = vstv %s92
    %v100 = vmul.f32 %v99, %v66
    %v101 = vstv %s76
    %v102 = vadd.f32 %v101, %v100
    %v103 = vstv %s89
    %v104 = vmul.f32 %v103, %v68
    %v105 = vstv %s73
    %v106 = vadd.f32 %v105, %v104
    %v107 = vadd.f32 %v102, %v99
    %v108 = vsub.f32 %v107, %v59
    %v109 = vsub.f32 %v107, %v60
    %v110 = vmax.f32 %v108, -1.0
    %v111 = vmax.f32 %v109, -1.0
    %v112 = vmin.f32 %v110, 1.0
    %v113 = vmin.f32 %v111, 1.0
    %v114 = vmul.f32 %v112, 0.5
    %v115 = vmul.f32 %v113, 0.5
    %v116 = vand.u32 2147483647, %v112
    %v117 = vand.u32 2147483647, %v113
    %v118 = vmul.f32 %v114, %v116
    %v119 = vmul.f32 %v115, %v117
    %v120 = vsub.f32 %v112, %v118
    %v121 = vsub.f32 %v113, %v119
    %v122 = vsub.f32 %v102, %v59
    %v123 = vsub.f32 %v102, %v60
    %v124 = vmax.f32 %v122, -1.0
    %v125 = vmax.f32 %v123, -1.0
    %v126 = vmin.f32 %v124, 1.0
    %v127 = vmin.f32 %v125, 1.0
    %v128 = vmul.f32 %v126, 0.5
    %v129 = vmul.f32 %v127, 0.5
    %v130 = vand.u32 2147483647, %v126
    %v131 = vand.u32 2147483647, %v127
    %v132 = vmul.f32 %v128, %v130
    %v133 = vmul.f32 %v129, %v131
    %v134 = vsub.f32 %v126, %v132
    %v135 = vsub.f32 %v127, %v133
    %v136 = vsub.f32 %v120, %v134
    %v137 = vsub.f32 %v121, %v135
    %v138 = vstv %s98
    %v139 = vmul.f32 %v136, %v138
    %v140 = vmul.f32 %v137, %v138
    %v141 = vadd.f32 %v106, %v103
    %v142 = vsub.f32 %v141, %v59
    %v143 = vsub.f32 %v141, %v60
    %v144 = vmax.f32 %v142, -1.0
    %v145 = vmax.f32 %v143, -1.0
    %v146 = vmin.f32 %v144, 1.0
    %v147 = vmin.f32 %v145, 1.0
    %v148 = vmul.f32 %v146, 0.5
    %v149 = vmul.f32 %v147, 0.5
    %v150 = vand.u32 2147483647, %v146
    %v151 = vand.u32 2147483647, %v147
    %v152 = vmul.f32 %v148, %v150
    %v153 = vmul.f32 %v149, %v151
    %v154 = vsub.f32 %v146, %v152
    %v155 = vsub.f32 %v147, %v153
    %v156 = vsub.f32 %v106, %v59
    %v157 = vsub.f32 %v106, %v60
    %v158 = vmax.f32 %v156, -1.0
    %v159 = vmax.f32 %v157, -1.0
    %v160 = vmin.f32 %v158, 1.0
    %v161 = vmin.f32 %v159, 1.0
    %v162 = vmul.f32 %v160, 0.5
    %v163 = vmul.f32 %v161, 0.5
    %v164 = vand.u32 2147483647, %v160
    %v165 = vand.u32 2147483647, %v161
    %v166 = vmul.f32 %v162, %v164
    %v167 = vmul.f32 %v163, %v165
    %v168 = vsub.f32 %v160, %v166
    %v169 = vsub.f32 %v161, %v167
    %v170 = vsub.f32 %v154, %v168
    %v171 = vsub.f32 %v155, %v169
    %v174 = vcombine.high %v139, %v139
    %v176 = vunpack.c.l.s4 1966171168
    %v177 = vunpack.c.0.s8 %v176
    %v178 = vlaneseq
    %v179 = vshrl.u32 %v178, 7
    %v180 = vsub.s32 %v177, %v179
    %v181 = vrot.slane %v139, %v180
    %v183 = vunpack.c.l.s4 1966171168
    %v184 = vunpack.c.0.s8 %v183
    %v185 = vlaneseq
    %v186 = vshrl.u32 %v185, 7
    %v187 = vsub.s32 %v184, %v186
    %v188 = vrot.slane %v174, %v187
    %v189 = vcombine.high %v181, %v181
    %v190 = vcombine.high %v188, %v188
    %v192 = vunpack.c.l.s4 1966171168
    %v193 = vunpack.c.0.s8 %v192
    %v194 = vlaneseq
    %v195 = vshrl.u32 %v194, 7
    %v196 = vsub.s32 %v193, %v195
    %v197 = vrot.slane %v181, %v196
    %v199 = vunpack.c.l.s4 1966171168
    %v200 = vunpack.c.0.s8 %v199
    %v201 = vlaneseq
    %v202 = vshrl.u32 %v201, 7
    %v203 = vsub.s32 %v200, %v202
    %v204 = vrot.slane %v188, %v203
    %v206 = vunpack.c.l.s4 1966171168
    %v207 = vunpack.c.0.s8 %v206
    %v208 = vlaneseq
    %v209 = vshrl.u32 %v208, 7
    %v210 = vsub.s32 %v207, %v209
    %v211 = vrot.slane %v189, %v210
    %v213 = vunpack.c.l.s4 1966171168
    %v214 = vunpack.c.0.s8 %v213
    %v215 = vlaneseq
    %v216 = vshrl.u32 %v215, 7
    %v217 = vsub.s32 %v214, %v216
    %v218 = vrot.slane %v190, %v217
    %v219 = vcombine.high %v197, %v197
    %v220 = vcombine.high %v204, %v204
    %v221 = vcombine.high %v211, %v211
    %v222 = vcombine.high %v218, %v218
    %v223 = vcombine.high %v140, %v140
    %v225 = vunpack.c.l.s4 1966171168
    %v226 = vunpack.c.0.s8 %v225
    %v227 = vlaneseq
    %v228 = vshrl.u32 %v227, 7
    %v229 = vsub.s32 %v226, %v228
    %v230 = vrot.slane %v140, %v229
    %v232 = vunpack.c.l.s4 1966171168
    %v233 = vunpack.c.0.s8 %v232
    %v234 = vlaneseq
    %v235 = vshrl.u32 %v234, 7
    %v236 = vsub.s32 %v233, %v235
    %v237 = vrot.slane %v223, %v236
    %v238 = vcombine.high %v230, %v230
    %v239 = vcombine.high %v237, %v237
    %v241 = vunpack.c.l.s4 1966171168
    %v242 = vunpack.c.0.s8 %v241
    %v243 = vlaneseq
    %v244 = vshrl.u32 %v243, 7
    %v245 = vsub.s32 %v242, %v244
    %v246 = vrot.slane %v230, %v245
    %v248 = vunpack.c.l.s4 1966171168
    %v249 = vunpack.c.0.s8 %v248
    %v250 = vlaneseq
    %v251 = vshrl.u32 %v250, 7
    %v252 = vsub.s32 %v249, %v251
    %v253 = vrot.slane %v237, %v252
    %v255 = vunpack.c.l.s4 1966171168
    %v256 = vunpack.c.0.s8 %v255
    %v257 = vlaneseq
    %v258 = vshrl.u32 %v257, 7
    %v259 = vsub.s32 %v256, %v258
    %v260 = vrot.slane %v238, %v259
    %v262 = vunpack.c.l.s4 1966171168
    %v263 = vunpack.c.0.s8 %v262
    %v264 = vlaneseq
    %v265 = vshrl.u32 %v264, 7
    %v266 = vsub.s32 %v263, %v265
    %v267 = vrot.slane %v239, %v266
    %v268 = vcombine.high %v246, %v246
    %v269 = vcombine.high %v253, %v253
    %v270 = vcombine.high %v260, %v260
    %v271 = vcombine.high %v267, %v267
    %v272 = vlaneseq
    %v273 = vshrl.u32 %v272, 7
    %v274 = vsub.s32 0, %v273
    %v275 = vrot.slane %v197, %v274
    %v276 = vlaneseq
    %v277 = vshrl.u32 %v276, 7
    %v278 = vsub.s32 0, %v277
    %v279 = vrot.slane %v211, %v278
    %v280 = vlaneseq
    %v281 = vshrl.u32 %v280, 7
    %v282 = vsub.s32 0, %v281
    %v283 = vrot.slane %v219, %v282
    %v284 = vlaneseq
    %v285 = vshrl.u32 %v284, 7
    %v286 = vsub.s32 0, %v285
    %v287 = vrot.slane %v221, %v286
    %v288 = vlaneseq
    %v289 = vshrl.u32 %v288, 7
    %v290 = vsub.s32 0, %v289
    %v291 = vrot.slane %v204, %v290
    %v292 = vlaneseq
    %v293 = vshrl.u32 %v292, 7
    %v294 = vsub.s32 0, %v293
    %v295 = vrot.slane %v218, %v294
    %v296 = vlaneseq
    %v297 = vshrl.u32 %v296, 7
    %v298 = vsub.s32 0, %v297
    %v299 = vrot.slane %v220, %v298
    %v300 = vlaneseq
    %v301 = vshrl.u32 %v300, 7
    %v302 = vsub.s32 0, %v301
    %v303 = vrot.slane %v222, %v302
    %v304 = vlaneseq
    %v305 = vshrl.u32 %v304, 7
    %v306 = vsub.s32 0, %v305
    %v307 = vrot.slane %v246, %v306
    %v308 = vlaneseq
    %v309 = vshrl.u32 %v308, 7
    %v310 = vsub.s32 0, %v309
    %v311 = vrot.slane %v260, %v310
    %v312 = vlaneseq
    %v313 = vshrl.u32 %v312, 7
    %v314 = vsub.s32 0, %v313
    %v315 = vrot.slane %v268, %v314
    %v316 = vlaneseq
    %v317 = vshrl.u32 %v316, 7
    %v318 = vsub.s32 0, %v317
    %v319 = vrot.slane %v270, %v318
    %v320 = vlaneseq
    %v321 = vshrl.u32 %v320, 7
    %v322 = vsub.s32 0, %v321
    %v323 = vrot.slane %v253, %v322
    %v324 = vlaneseq
    %v325 = vshrl.u32 %v324, 7
    %v326 = vsub.s32 0, %v325
    %v327 = vrot.slane %v267, %v326
    %v328 = vlaneseq
    %v329 = vshrl.u32 %v328, 7
    %v330 = vsub.s32 0, %v329
    %v331 = vrot.slane %v269, %v330
    %v332 = vlaneseq
    %v333 = vshrl.u32 %v332, 7
    %v334 = vsub.s32 0, %v333
    %v335 = vrot.slane %v271, %v334
    %v352 = vmul.f32 %v275, %v170
    %v353 = vmul.f32 %v275, %v171
    %v354 = vmul.f32 %v279, %v170
    %v355 = vmul.f32 %v279, %v171
    %v356 = vmul.f32 %v283, %v170
    %v357 = vmul.f32 %v283, %v171
    %v358 = vmul.f32 %v287, %v170
    %v359 = vmul.f32 %v287, %v171
    %v360 = vmul.f32 %v291, %v170
    %v361 = vmul.f32 %v291, %v171
    %v362 = vmul.f32 %v295, %v170
    %v363 = vmul.f32 %v295, %v171
    %v364 = vmul.f32 %v299, %v170
    %v365 = vmul.f32 %v299, %v171
    %v366 = vmul.f32 %v303, %v170
    %v367 = vmul.f32 %v303, %v171
    %v368 = vmul.f32 %v307, %v170
    %v369 = vmul.f32 %v307, %v171
    %v370 = vmul.f32 %v311, %v170
    %v371 = vmul.f32 %v311, %v171
    %v372 = vmul.f32 %v315, %v170
    %v373 = vmul.f32 %v315, %v171
    %v374 = vmul.f32 %v319, %v170
    %v375 = vmul.f32 %v319, %v171
    %v376 = vmul.f32 %v323, %v170
    %v377 = vmul.f32 %v323, %v171
    %v378 = vmul.f32 %v327, %v170
    %v379 = vmul.f32 %v327, %v171
    %v380 = vmul.f32 %v331, %v170
    %v381 = vmul.f32 %v331, %v171
    %v382 = vmul.f32 %v335, %v170
    %v383 = vmul.f32 %v335, %v171
    %s384 = sadd.s32 %s69, 1
    %s385 = sld [smem:[#allocation3 + %s384]]
    %s386 = smul.u32 %s384, 4
    %s387 = sld [smem:[#allocation7 + %s386]]
    %s388 = smul.f32 %s387, 0.5
    %s389 = sadd.s32 %s386, 1
    %s390 = sld [smem:[#allocation7 + %s389]]
    %s391 = smul.f32 %s390, 0.5
    %s392 = sadd.s32 %s386, 2
    %s393 = sld [smem:[#allocation7 + %s392]]
    %s394 = smul.f32 %s393, 0.5
    %s395 = sadd.s32 %s386, 3
    %s396 = sld [smem:[#allocation7 + %s395]]
    %s397 = smul.f32 %s396, 0.5
    %s398 = ssub.f32 %s394, %s388
    %s399 = smax.f32 %s398, 0.0
    %s400 = ssub.f32 %s397, %s391
    %s401 = smax.f32 %s400, 0.0
    %v402 = vrcp.pop 7.0
    %s403 = vtos %v402
    %s404 = smul.f32 %s399, %s403
    %v405 = vrcp.pop 7.0
    %s406 = vtos %v405
    %s407 = smul.f32 %s401, %s406
    %s408 = smul.f32 %s404, %s407
    %p409 = scmp.gt.f32.partialorder %s408, 0.0
    %v410 = vstv %s408
    %v411 = vrcp.pop %v410
    %s412 = vtos %v411
    %s413 = scalar_select %p409, %s412, 0.0
    %v414 = vstv %s407
    %v415 = vmul.f32 %v414, %v66
    %v416 = vstv %s391
    %v417 = vadd.f32 %v416, %v415
    %v418 = vstv %s404
    %v419 = vmul.f32 %v418, %v68
    %v420 = vstv %s388
    %v421 = vadd.f32 %v420, %v419
    %v422 = vadd.f32 %v417, %v414
    %v423 = vsub.f32 %v422, %v59
    %v424 = vsub.f32 %v422, %v60
    %v425 = vmax.f32 %v423, -1.0
    %v426 = vmax.f32 %v424, -1.0
    %v427 = vmin.f32 %v425, 1.0
    %v428 = vmin.f32 %v426, 1.0
    %v429 = vmul.f32 %v427, 0.5
    %v430 = vmul.f32 %v428, 0.5
    %v431 = vand.u32 2147483647, %v427
    %v432 = vand.u32 2147483647, %v428
    %v433 = vmul.f32 %v429, %v431
    %v434 = vmul.f32 %v430, %v432
    %v435 = vsub.f32 %v427, %v433
    %v436 = vsub.f32 %v428, %v434
    %v437 = vsub.f32 %v417, %v59
    %v438 = vsub.f32 %v417, %v60
    %v439 = vmax.f32 %v437, -1.0
    %v440 = vmax.f32 %v438, -1.0
    %v441 = vmin.f32 %v439, 1.0
    %v442 = vmin.f32 %v440, 1.0
    %v443 = vmul.f32 %v441, 0.5
    %v444 = vmul.f32 %v442, 0.5
    %v445 = vand.u32 2147483647, %v441
    %v446 = vand.u32 2147483647, %v442
    %v447 = vmul.f32 %v443, %v445
    %v448 = vmul.f32 %v444, %v446
    %v449 = vsub.f32 %v441, %v447
    %v450 = vsub.f32 %v442, %v448
    %v451 = vsub.f32 %v435, %v449
    %v452 = vsub.f32 %v436, %v450
    %v453 = vstv %s413
    %v454 = vmul.f32 %v451, %v453
    %v455 = vmul.f32 %v452, %v453
    %v456 = vadd.f32 %v421, %v418
    %v457 = vsub.f32 %v456, %v59
    %v458 = vsub.f32 %v456, %v60
    %v459 = vmax.f32 %v457, -1.0
    %v460 = vmax.f32 %v458, -1.0
    %v461 = vmin.f32 %v459, 1.0
    %v462 = vmin.f32 %v460, 1.0
    %v463 = vmul.f32 %v461, 0.5
    %v464 = vmul.f32 %v462, 0.5
    %v465 = vand.u32 2147483647, %v461
    %v466 = vand.u32 2147483647, %v462
    %v467 = vmul.f32 %v463, %v465
    %v468 = vmul.f32 %v464, %v466
    %v469 = vsub.f32 %v461, %v467
    %v470 = vsub.f32 %v462, %v468
    %v471 = vsub.f32 %v421, %v59
    %v472 = vsub.f32 %v421, %v60
    %v473 = vmax.f32 %v471, -1.0
    %v474 = vmax.f32 %v472, -1.0
    %v475 = vmin.f32 %v473, 1.0
    %v476 = vmin.f32 %v474, 1.0
    %v477 = vmul.f32 %v475, 0.5
    %v478 = vmul.f32 %v476, 0.5
    %v479 = vand.u32 2147483647, %v475
    %v480 = vand.u32 2147483647, %v476
    %v481 = vmul.f32 %v477, %v479
    %v482 = vmul.f32 %v478, %v480
    %v483 = vsub.f32 %v475, %v481
    %v484 = vsub.f32 %v476, %v482
    %v485 = vsub.f32 %v469, %v483
    %v486 = vsub.f32 %v470, %v484
    %v489 = vcombine.high %v454, %v454
    %v491 = vunpack.c.l.s4 1966171168
    %v492 = vunpack.c.0.s8 %v491
    %v493 = vlaneseq
    %v494 = vshrl.u32 %v493, 7
    %v495 = vsub.s32 %v492, %v494
    %v496 = vrot.slane %v454, %v495
    %v498 = vunpack.c.l.s4 1966171168
    %v499 = vunpack.c.0.s8 %v498
    %v500 = vlaneseq
    %v501 = vshrl.u32 %v500, 7
    %v502 = vsub.s32 %v499, %v501
    %v503 = vrot.slane %v489, %v502
    %v504 = vcombine.high %v496, %v496
    %v505 = vcombine.high %v503, %v503
    %v507 = vunpack.c.l.s4 1966171168
    %v508 = vunpack.c.0.s8 %v507
    %v509 = vlaneseq
    %v510 = vshrl.u32 %v509, 7
    %v511 = vsub.s32 %v508, %v510
    %v512 = vrot.slane %v496, %v511
    %v514 = vunpack.c.l.s4 1966171168
    %v515 = vunpack.c.0.s8 %v514
    %v516 = vlaneseq
    %v517 = vshrl.u32 %v516, 7
    %v518 = vsub.s32 %v515, %v517
    %v519 = vrot.slane %v503, %v518
    %v521 = vunpack.c.l.s4 1966171168
    %v522 = vunpack.c.0.s8 %v521
    %v523 = vlaneseq
    %v524 = vshrl.u32 %v523, 7
    %v525 = vsub.s32 %v522, %v524
    %v526 = vrot.slane %v504, %v525
    %v528 = vunpack.c.l.s4 1966171168
    %v529 = vunpack.c.0.s8 %v528
    %v530 = vlaneseq
    %v531 = vshrl.u32 %v530, 7
    %v532 = vsub.s32 %v529, %v531
    %v533 = vrot.slane %v505, %v532
    %v534 = vcombine.high %v512, %v512
    %v535 = vcombine.high %v519, %v519
    %v536 = vcombine.high %v526, %v526
    %v537 = vcombine.high %v533, %v533
    %v538 = vcombine.high %v455, %v455
    %v540 = vunpack.c.l.s4 1966171168
    %v541 = vunpack.c.0.s8 %v540
    %v542 = vlaneseq
    %v543 = vshrl.u32 %v542, 7
    %v544 = vsub.s32 %v541, %v543
    %v545 = vrot.slane %v455, %v544
    %v547 = vunpack.c.l.s4 1966171168
    %v548 = vunpack.c.0.s8 %v547
    %v549 = vlaneseq
    %v550 = vshrl.u32 %v549, 7
    %v551 = vsub.s32 %v548, %v550
    %v552 = vrot.slane %v538, %v551
    %v553 = vcombine.high %v545, %v545
    %v554 = vcombine.high %v552, %v552
    %v556 = vunpack.c.l.s4 1966171168
    %v557 = vunpack.c.0.s8 %v556
    %v558 = vlaneseq
    %v559 = vshrl.u32 %v558, 7
    %v560 = vsub.s32 %v557, %v559
    %v561 = vrot.slane %v545, %v560
    %v563 = vunpack.c.l.s4 1966171168
    %v564 = vunpack.c.0.s8 %v563
    %v565 = vlaneseq
    %v566 = vshrl.u32 %v565, 7
    %v567 = vsub.s32 %v564, %v566
    %v568 = vrot.slane %v552, %v567
    %v570 = vunpack.c.l.s4 1966171168
    %v571 = vunpack.c.0.s8 %v570
    %v572 = vlaneseq
    %v573 = vshrl.u32 %v572, 7
    %v574 = vsub.s32 %v571, %v573
    %v575 = vrot.slane %v553, %v574
    %v577 = vunpack.c.l.s4 1966171168
    %v578 = vunpack.c.0.s8 %v577
    %v579 = vlaneseq
    %v580 = vshrl.u32 %v579, 7
    %v581 = vsub.s32 %v578, %v580
    %v582 = vrot.slane %v554, %v581
    %v583 = vcombine.high %v561, %v561
    %v584 = vcombine.high %v568, %v568
    %v585 = vcombine.high %v575, %v575
    %v586 = vcombine.high %v582, %v582
    %v587 = vlaneseq
    %v588 = vshrl.u32 %v587, 7
    %v589 = vsub.s32 0, %v588
    %v590 = vrot.slane %v512, %v589
    %v591 = vlaneseq
    %v592 = vshrl.u32 %v591, 7
    %v593 = vsub.s32 0, %v592
    %v594 = vrot.slane %v526, %v593
    %v595 = vlaneseq
    %v596 = vshrl.u32 %v595, 7
    %v597 = vsub.s32 0, %v596
    %v598 = vrot.slane %v534, %v597
    %v599 = vlaneseq
    %v600 = vshrl.u32 %v599, 7
    %v601 = vsub.s32 0, %v600
    %v602 = vrot.slane %v536, %v601
    %v603 = vlaneseq
    %v604 = vshrl.u32 %v603, 7
    %v605 = vsub.s32 0, %v604
    %v606 = vrot.slane %v519, %v605
    %v607 = vlaneseq
    %v608 = vshrl.u32 %v607, 7
    %v609 = vsub.s32 0, %v608
    %v610 = vrot.slane %v533, %v609
    %v611 = vlaneseq
    %v612 = vshrl.u32 %v611, 7
    %v613 = vsub.s32 0, %v612
    %v614 = vrot.slane %v535, %v613
    %v615 = vlaneseq
    %v616 = vshrl.u32 %v615, 7
    %v617 = vsub.s32 0, %v616
    %v618 = vrot.slane %v537, %v617
    %v619 = vlaneseq
    %v620 = vshrl.u32 %v619, 7
    %v621 = vsub.s32 0, %v620
    %v622 = vrot.slane %v561, %v621
    %v623 = vlaneseq
    %v624 = vshrl.u32 %v623, 7
    %v625 = vsub.s32 0, %v624
    %v626 = vrot.slane %v575, %v625
    %v627 = vlaneseq
    %v628 = vshrl.u32 %v627, 7
    %v629 = vsub.s32 0, %v628
    %v630 = vrot.slane %v583, %v629
    %v631 = vlaneseq
    %v632 = vshrl.u32 %v631, 7
    %v633 = vsub.s32 0, %v632
    %v634 = vrot.slane %v585, %v633
    %v635 = vlaneseq
    %v636 = vshrl.u32 %v635, 7
    %v637 = vsub.s32 0, %v636
    %v638 = vrot.slane %v568, %v637
    %v639 = vlaneseq
    %v640 = vshrl.u32 %v639, 7
    %v641 = vsub.s32 0, %v640
    %v642 = vrot.slane %v582, %v641
    %v643 = vlaneseq
    %v644 = vshrl.u32 %v643, 7
    %v645 = vsub.s32 0, %v644
    %v646 = vrot.slane %v584, %v645
    %v647 = vlaneseq
    %v648 = vshrl.u32 %v647, 7
    %v649 = vsub.s32 0, %v648
    %v650 = vrot.slane %v586, %v649
    %v667 = vmul.f32 %v590, %v485
    %v668 = vmul.f32 %v590, %v486
    %v669 = vmul.f32 %v594, %v485
    %v670 = vmul.f32 %v594, %v486
    %v671 = vmul.f32 %v598, %v485
    %v672 = vmul.f32 %v598, %v486
    %v673 = vmul.f32 %v602, %v485
    %v674 = vmul.f32 %v602, %v486
    %v675 = vmul.f32 %v606, %v485
    %v676 = vmul.f32 %v606, %v486
    %v677 = vmul.f32 %v610, %v485
    %v678 = vmul.f32 %v610, %v486
    %v679 = vmul.f32 %v614, %v485
    %v680 = vmul.f32 %v614, %v486
    %v681 = vmul.f32 %v618, %v485
    %v682 = vmul.f32 %v618, %v486
    %v683 = vmul.f32 %v622, %v485
    %v684 = vmul.f32 %v622, %v486
    %v685 = vmul.f32 %v626, %v485
    %v686 = vmul.f32 %v626, %v486
    %v687 = vmul.f32 %v630, %v485
    %v688 = vmul.f32 %v630, %v486
    %v689 = vmul.f32 %v634, %v485
    %v690 = vmul.f32 %v634, %v486
    %v691 = vmul.f32 %v638, %v485
    %v692 = vmul.f32 %v638, %v486
    %v693 = vmul.f32 %v642, %v485
    %v694 = vmul.f32 %v642, %v486
    %v695 = vmul.f32 %v646, %v485
    %v696 = vmul.f32 %v646, %v486
    %v697 = vmul.f32 %v650, %v485
    %v698 = vmul.f32 %v650, %v486
    %s699 = sadd.s32 %s69, 2
    %s700 = sld [smem:[#allocation3 + %s699]]
    %s701 = smul.u32 %s699, 4
    %s702 = sld [smem:[#allocation7 + %s701]]
    %s703 = smul.f32 %s702, 0.5
    %s704 = sadd.s32 %s701, 1
    %s705 = sld [smem:[#allocation7 + %s704]]
    %s706 = smul.f32 %s705, 0.5
    %s707 = sadd.s32 %s701, 2
    %s708 = sld [smem:[#allocation7 + %s707]]
    %s709 = smul.f32 %s708, 0.5
    %s710 = sadd.s32 %s701, 3
    %s711 = sld [smem:[#allocation7 + %s710]]
    %s712 = smul.f32 %s711, 0.5
    %s713 = ssub.f32 %s709, %s703
    %s714 = smax.f32 %s713, 0.0
    %s715 = ssub.f32 %s712, %s706
    %s716 = smax.f32 %s715, 0.0
    %v717 = vrcp.pop 7.0
    %s718 = vtos %v717
    %s719 = smul.f32 %s714, %s718
    %v720 = vrcp.pop 7.0
    %s721 = vtos %v720
    %s722 = smul.f32 %s716, %s721
    %s723 = smul.f32 %s719, %s722
    %p724 = scmp.gt.f32.partialorder %s723, 0.0
    %v725 = vstv %s723
    %v726 = vrcp.pop %v725
    %s727 = vtos %v726
    %s728 = scalar_select %p724, %s727, 0.0
    %v729 = vstv %s722
    %v730 = vmul.f32 %v729, %v66
    %v731 = vstv %s706
    %v732 = vadd.f32 %v731, %v730
    %v733 = vstv %s719
    %v734 = vmul.f32 %v733, %v68
    %v735 = vstv %s703
    %v736 = vadd.f32 %v735, %v734
    %v737 = vadd.f32 %v732, %v729
    %v738 = vsub.f32 %v737, %v59
    %v739 = vsub.f32 %v737, %v60
    %v740 = vmax.f32 %v738, -1.0
    %v741 = vmax.f32 %v739, -1.0
    %v742 = vmin.f32 %v740, 1.0
    %v743 = vmin.f32 %v741, 1.0
    %v744 = vmul.f32 %v742, 0.5
    %v745 = vmul.f32 %v743, 0.5
    %v746 = vand.u32 2147483647, %v742
    %v747 = vand.u32 2147483647, %v743
    %v748 = vmul.f32 %v744, %v746
    %v749 = vmul.f32 %v745, %v747
    %v750 = vsub.f32 %v742, %v748
    %v751 = vsub.f32 %v743, %v749
    %v752 = vsub.f32 %v732, %v59
    %v753 = vsub.f32 %v732, %v60
    %v754 = vmax.f32 %v752, -1.0
    %v755 = vmax.f32 %v753, -1.0
    %v756 = vmin.f32 %v754, 1.0
    %v757 = vmin.f32 %v755, 1.0
    %v758 = vmul.f32 %v756, 0.5
    %v759 = vmul.f32 %v757, 0.5
    %v760 = vand.u32 2147483647, %v756
    %v761 = vand.u32 2147483647, %v757
    %v762 = vmul.f32 %v758, %v760
    %v763 = vmul.f32 %v759, %v761
    %v764 = vsub.f32 %v756, %v762
    %v765 = vsub.f32 %v757, %v763
    %v766 = vsub.f32 %v750, %v764
    %v767 = vsub.f32 %v751, %v765
    %v768 = vstv %s728
    %v769 = vmul.f32 %v766, %v768
    %v770 = vmul.f32 %v767, %v768
    %v771 = vadd.f32 %v736, %v733
    %v772 = vsub.f32 %v771, %v59
    %v773 = vsub.f32 %v771, %v60
    %v774 = vmax.f32 %v772, -1.0
    %v775 = vmax.f32 %v773, -1.0
    %v776 = vmin.f32 %v774, 1.0
    %v777 = vmin.f32 %v775, 1.0
    %v778 = vmul.f32 %v776, 0.5
    %v779 = vmul.f32 %v777, 0.5
    %v780 = vand.u32 2147483647, %v776
    %v781 = vand.u32 2147483647, %v777
    %v782 = vmul.f32 %v778, %v780
    %v783 = vmul.f32 %v779, %v781
    %v784 = vsub.f32 %v776, %v782
    %v785 = vsub.f32 %v777, %v783
    %v786 = vsub.f32 %v736, %v59
    %v787 = vsub.f32 %v736, %v60
    %v788 = vmax.f32 %v786, -1.0
    %v789 = vmax.f32 %v787, -1.0
    %v790 = vmin.f32 %v788, 1.0
    %v791 = vmin.f32 %v789, 1.0
    %v792 = vmul.f32 %v790, 0.5
    %v793 = vmul.f32 %v791, 0.5
    %v794 = vand.u32 2147483647, %v790
    %v795 = vand.u32 2147483647, %v791
    %v796 = vmul.f32 %v792, %v794
    %v797 = vmul.f32 %v793, %v795
    %v798 = vsub.f32 %v790, %v796
    %v799 = vsub.f32 %v791, %v797
    %v800 = vsub.f32 %v784, %v798
    %v801 = vsub.f32 %v785, %v799
    %v804 = vcombine.high %v769, %v769
    %v806 = vunpack.c.l.s4 1966171168
    %v807 = vunpack.c.0.s8 %v806
    %v808 = vlaneseq
    %v809 = vshrl.u32 %v808, 7
    %v810 = vsub.s32 %v807, %v809
    %v811 = vrot.slane %v769, %v810
    %v813 = vunpack.c.l.s4 1966171168
    %v814 = vunpack.c.0.s8 %v813
    %v815 = vlaneseq
    %v816 = vshrl.u32 %v815, 7
    %v817 = vsub.s32 %v814, %v816
    %v818 = vrot.slane %v804, %v817
    %v819 = vcombine.high %v811, %v811
    %v820 = vcombine.high %v818, %v818
    %v822 = vunpack.c.l.s4 1966171168
    %v823 = vunpack.c.0.s8 %v822
    %v824 = vlaneseq
    %v825 = vshrl.u32 %v824, 7
    %v826 = vsub.s32 %v823, %v825
    %v827 = vrot.slane %v811, %v826
    %v829 = vunpack.c.l.s4 1966171168
    %v830 = vunpack.c.0.s8 %v829
    %v831 = vlaneseq
    %v832 = vshrl.u32 %v831, 7
    %v833 = vsub.s32 %v830, %v832
    %v834 = vrot.slane %v818, %v833
    %v836 = vunpack.c.l.s4 1966171168
    %v837 = vunpack.c.0.s8 %v836
    %v838 = vlaneseq
    %v839 = vshrl.u32 %v838, 7
    %v840 = vsub.s32 %v837, %v839
    %v841 = vrot.slane %v819, %v840
    %v843 = vunpack.c.l.s4 1966171168
    %v844 = vunpack.c.0.s8 %v843
    %v845 = vlaneseq
    %v846 = vshrl.u32 %v845, 7
    %v847 = vsub.s32 %v844, %v846
    %v848 = vrot.slane %v820, %v847
    %v849 = vcombine.high %v827, %v827
    %v850 = vcombine.high %v834, %v834
    %v851 = vcombine.high %v841, %v841
    %v852 = vcombine.high %v848, %v848
    %v853 = vcombine.high %v770, %v770
    %v855 = vunpack.c.l.s4 1966171168
    %v856 = vunpack.c.0.s8 %v855
    %v857 = vlaneseq
    %v858 = vshrl.u32 %v857, 7
    %v859 = vsub.s32 %v856, %v858
    %v860 = vrot.slane %v770, %v859
    %v862 = vunpack.c.l.s4 1966171168
    %v863 = vunpack.c.0.s8 %v862
    %v864 = vlaneseq
    %v865 = vshrl.u32 %v864, 7
    %v866 = vsub.s32 %v863, %v865
    %v867 = vrot.slane %v853, %v866
    %v868 = vcombine.high %v860, %v860
    %v869 = vcombine.high %v867, %v867
    %v871 = vunpack.c.l.s4 1966171168
    %v872 = vunpack.c.0.s8 %v871
    %v873 = vlaneseq
    %v874 = vshrl.u32 %v873, 7
    %v875 = vsub.s32 %v872, %v874
    %v876 = vrot.slane %v860, %v875
    %v878 = vunpack.c.l.s4 1966171168
    %v879 = vunpack.c.0.s8 %v878
    %v880 = vlaneseq
    %v881 = vshrl.u32 %v880, 7
    %v882 = vsub.s32 %v879, %v881
    %v883 = vrot.slane %v867, %v882
    %v885 = vunpack.c.l.s4 1966171168
    %v886 = vunpack.c.0.s8 %v885
    %v887 = vlaneseq
    %v888 = vshrl.u32 %v887, 7
    %v889 = vsub.s32 %v886, %v888
    %v890 = vrot.slane %v868, %v889
    %v892 = vunpack.c.l.s4 1966171168
    %v893 = vunpack.c.0.s8 %v892
    %v894 = vlaneseq
    %v895 = vshrl.u32 %v894, 7
    %v896 = vsub.s32 %v893, %v895
    %v897 = vrot.slane %v869, %v896
    %v898 = vcombine.high %v876, %v876
    %v899 = vcombine.high %v883, %v883
    %v900 = vcombine.high %v890, %v890
    %v901 = vcombine.high %v897, %v897
    %v902 = vlaneseq
    %v903 = vshrl.u32 %v902, 7
    %v904 = vsub.s32 0, %v903
    %v905 = vrot.slane %v827, %v904
    %v906 = vlaneseq
    %v907 = vshrl.u32 %v906, 7
    %v908 = vsub.s32 0, %v907
    %v909 = vrot.slane %v841, %v908
    %v910 = vlaneseq
    %v911 = vshrl.u32 %v910, 7
    %v912 = vsub.s32 0, %v911
    %v913 = vrot.slane %v849, %v912
    %v914 = vlaneseq
    %v915 = vshrl.u32 %v914, 7
    %v916 = vsub.s32 0, %v915
    %v917 = vrot.slane %v851, %v916
    %v918 = vlaneseq
    %v919 = vshrl.u32 %v918, 7
    %v920 = vsub.s32 0, %v919
    %v921 = vrot.slane %v834, %v920
    %v922 = vlaneseq
    %v923 = vshrl.u32 %v922, 7
    %v924 = vsub.s32 0, %v923
    %v925 = vrot.slane %v848, %v924
    %v926 = vlaneseq
    %v927 = vshrl.u32 %v926, 7
    %v928 = vsub.s32 0, %v927
    %v929 = vrot.slane %v850, %v928
    %v930 = vlaneseq
    %v931 = vshrl.u32 %v930, 7
    %v932 = vsub.s32 0, %v931
    %v933 = vrot.slane %v852, %v932
    %v934 = vlaneseq
    %v935 = vshrl.u32 %v934, 7
    %v936 = vsub.s32 0, %v935
    %v937 = vrot.slane %v876, %v936
    %v938 = vlaneseq
    %v939 = vshrl.u32 %v938, 7
    %v940 = vsub.s32 0, %v939
    %v941 = vrot.slane %v890, %v940
    %v942 = vlaneseq
    %v943 = vshrl.u32 %v942, 7
    %v944 = vsub.s32 0, %v943
    %v945 = vrot.slane %v898, %v944
    %v946 = vlaneseq
    %v947 = vshrl.u32 %v946, 7
    %v948 = vsub.s32 0, %v947
    %v949 = vrot.slane %v900, %v948
    %v950 = vlaneseq
    %v951 = vshrl.u32 %v950, 7
    %v952 = vsub.s32 0, %v951
    %v953 = vrot.slane %v883, %v952
    %v954 = vlaneseq
    %v955 = vshrl.u32 %v954, 7
    %v956 = vsub.s32 0, %v955
    %v957 = vrot.slane %v897, %v956
    %v958 = vlaneseq
    %v959 = vshrl.u32 %v958, 7
    %v960 = vsub.s32 0, %v959
    %v961 = vrot.slane %v899, %v960
    %v962 = vlaneseq
    %v963 = vshrl.u32 %v962, 7
    %v964 = vsub.s32 0, %v963
    %v965 = vrot.slane %v901, %v964
    %v982 = vmul.f32 %v905, %v800
    %v983 = vmul.f32 %v905, %v801
    %v984 = vmul.f32 %v909, %v800
    %v985 = vmul.f32 %v909, %v801
    %v986 = vmul.f32 %v913, %v800
    %v987 = vmul.f32 %v913, %v801
    %v988 = vmul.f32 %v917, %v800
    %v989 = vmul.f32 %v917, %v801
    %v990 = vmul.f32 %v921, %v800
    %v991 = vmul.f32 %v921, %v801
    %v992 = vmul.f32 %v925, %v800
    %v993 = vmul.f32 %v925, %v801
    %v994 = vmul.f32 %v929, %v800
    %v995 = vmul.f32 %v929, %v801
    %v996 = vmul.f32 %v933, %v800
    %v997 = vmul.f32 %v933, %v801
    %v998 = vmul.f32 %v937, %v800
    %v999 = vmul.f32 %v937, %v801
    %v1000 = vmul.f32 %v941, %v800
    %v1001 = vmul.f32 %v941, %v801
    %v1002 = vmul.f32 %v945, %v800
    %v1003 = vmul.f32 %v945, %v801
    %v1004 = vmul.f32 %v949, %v800
    %v1005 = vmul.f32 %v949, %v801
    %v1006 = vmul.f32 %v953, %v800
    %v1007 = vmul.f32 %v953, %v801
    %v1008 = vmul.f32 %v957, %v800
    %v1009 = vmul.f32 %v957, %v801
    %v1010 = vmul.f32 %v961, %v800
    %v1011 = vmul.f32 %v961, %v801
    %v1012 = vmul.f32 %v965, %v800
    %v1013 = vmul.f32 %v965, %v801
    %s1014 = sadd.s32 %s69, 3
    %s1015 = sld [smem:[#allocation3 + %s1014]]
    %s1016 = smul.u32 %s1014, 4
    %s1017 = sld [smem:[#allocation7 + %s1016]]
    %s1018 = smul.f32 %s1017, 0.5
    %s1019 = sadd.s32 %s1016, 1
    %s1020 = sld [smem:[#allocation7 + %s1019]]
    %s1021 = smul.f32 %s1020, 0.5
    %s1022 = sadd.s32 %s1016, 2
    %s1023 = sld [smem:[#allocation7 + %s1022]]
    %s1024 = smul.f32 %s1023, 0.5
    %s1025 = sadd.s32 %s1016, 3
    %s1026 = sld [smem:[#allocation7 + %s1025]]
    %s1027 = smul.f32 %s1026, 0.5
    %s1028 = ssub.f32 %s1024, %s1018
    %s1029 = smax.f32 %s1028, 0.0
    %s1030 = ssub.f32 %s1027, %s1021
    %s1031 = smax.f32 %s1030, 0.0
    %v1032 = vrcp.pop 7.0
    %s1033 = vtos %v1032
    %s1034 = smul.f32 %s1029, %s1033
    %v1035 = vrcp.pop 7.0
    %s1036 = vtos %v1035
    %s1037 = smul.f32 %s1031, %s1036
    %s1038 = smul.f32 %s1034, %s1037
    %p1039 = scmp.gt.f32.partialorder %s1038, 0.0
    %v1040 = vstv %s1038
    %v1041 = vrcp.pop %v1040
    %s1042 = vtos %v1041
    %s1043 = scalar_select %p1039, %s1042, 0.0
    %v1044 = vstv %s1037
    %v1045 = vmul.f32 %v1044, %v66
    %v1046 = vstv %s1021
    %v1047 = vadd.f32 %v1046, %v1045
    %v1048 = vstv %s1034
    %v1049 = vmul.f32 %v1048, %v68
    %v1050 = vstv %s1018
    %v1051 = vadd.f32 %v1050, %v1049
    %v1052 = vadd.f32 %v1047, %v1044
    %v1053 = vsub.f32 %v1052, %v59
    %v1054 = vsub.f32 %v1052, %v60
    %v1055 = vmax.f32 %v1053, -1.0
    %v1056 = vmax.f32 %v1054, -1.0
    %v1057 = vmin.f32 %v1055, 1.0
    %v1058 = vmin.f32 %v1056, 1.0
    %v1059 = vmul.f32 %v1057, 0.5
    %v1060 = vmul.f32 %v1058, 0.5
    %v1061 = vand.u32 2147483647, %v1057
    %v1062 = vand.u32 2147483647, %v1058
    %v1063 = vmul.f32 %v1059, %v1061
    %v1064 = vmul.f32 %v1060, %v1062
    %v1065 = vsub.f32 %v1057, %v1063
    %v1066 = vsub.f32 %v1058, %v1064
    %v1067 = vsub.f32 %v1047, %v59
    %v1068 = vsub.f32 %v1047, %v60
    %v1069 = vmax.f32 %v1067, -1.0
    %v1070 = vmax.f32 %v1068, -1.0
    %v1071 = vmin.f32 %v1069, 1.0
    %v1072 = vmin.f32 %v1070, 1.0
    %v1073 = vmul.f32 %v1071, 0.5
    %v1074 = vmul.f32 %v1072, 0.5
    %v1075 = vand.u32 2147483647, %v1071
    %v1076 = vand.u32 2147483647, %v1072
    %v1077 = vmul.f32 %v1073, %v1075
    %v1078 = vmul.f32 %v1074, %v1076
    %v1079 = vsub.f32 %v1071, %v1077
    %v1080 = vsub.f32 %v1072, %v1078
    %v1081 = vsub.f32 %v1065, %v1079
    %v1082 = vsub.f32 %v1066, %v1080
    %v1083 = vstv %s1043
    %v1084 = vmul.f32 %v1081, %v1083
    %v1085 = vmul.f32 %v1082, %v1083
    %v1086 = vadd.f32 %v1051, %v1048
    %v1087 = vsub.f32 %v1086, %v59
    %v1088 = vsub.f32 %v1086, %v60
    %v1089 = vmax.f32 %v1087, -1.0
    %v1090 = vmax.f32 %v1088, -1.0
    %v1091 = vmin.f32 %v1089, 1.0
    %v1092 = vmin.f32 %v1090, 1.0
    %v1093 = vmul.f32 %v1091, 0.5
    %v1094 = vmul.f32 %v1092, 0.5
    %v1095 = vand.u32 2147483647, %v1091
    %v1096 = vand.u32 2147483647, %v1092
    %v1097 = vmul.f32 %v1093, %v1095
    %v1098 = vmul.f32 %v1094, %v1096
    %v1099 = vsub.f32 %v1091, %v1097
    %v1100 = vsub.f32 %v1092, %v1098
    %v1101 = vsub.f32 %v1051, %v59
    %v1102 = vsub.f32 %v1051, %v60
    %v1103 = vmax.f32 %v1101, -1.0
    %v1104 = vmax.f32 %v1102, -1.0
    %v1105 = vmin.f32 %v1103, 1.0
    %v1106 = vmin.f32 %v1104, 1.0
    %v1107 = vmul.f32 %v1105, 0.5
    %v1108 = vmul.f32 %v1106, 0.5
    %v1109 = vand.u32 2147483647, %v1105
    %v1110 = vand.u32 2147483647, %v1106
    %v1111 = vmul.f32 %v1107, %v1109
    %v1112 = vmul.f32 %v1108, %v1110
    %v1113 = vsub.f32 %v1105, %v1111
    %v1114 = vsub.f32 %v1106, %v1112
    %v1115 = vsub.f32 %v1099, %v1113
    %v1116 = vsub.f32 %v1100, %v1114
    %v1119 = vcombine.high %v1084, %v1084
    %v1121 = vunpack.c.l.s4 1966171168
    %v1122 = vunpack.c.0.s8 %v1121
    %v1123 = vlaneseq
    %v1124 = vshrl.u32 %v1123, 7
    %v1125 = vsub.s32 %v1122, %v1124
    %v1126 = vrot.slane %v1084, %v1125
    %v1128 = vunpack.c.l.s4 1966171168
    %v1129 = vunpack.c.0.s8 %v1128
    %v1130 = vlaneseq
    %v1131 = vshrl.u32 %v1130, 7
    %v1132 = vsub.s32 %v1129, %v1131
    %v1133 = vrot.slane %v1119, %v1132
    %v1134 = vcombine.high %v1126, %v1126
    %v1135 = vcombine.high %v1133, %v1133
    %v1137 = vunpack.c.l.s4 1966171168
    %v1138 = vunpack.c.0.s8 %v1137
    %v1139 = vlaneseq
    %v1140 = vshrl.u32 %v1139, 7
    %v1141 = vsub.s32 %v1138, %v1140
    %v1142 = vrot.slane %v1126, %v1141
    %v1144 = vunpack.c.l.s4 1966171168
    %v1145 = vunpack.c.0.s8 %v1144
    %v1146 = vlaneseq
    %v1147 = vshrl.u32 %v1146, 7
    %v1148 = vsub.s32 %v1145, %v1147
    %v1149 = vrot.slane %v1133, %v1148
    %v1151 = vunpack.c.l.s4 1966171168
    %v1152 = vunpack.c.0.s8 %v1151
    %v1153 = vlaneseq
    %v1154 = vshrl.u32 %v1153, 7
    %v1155 = vsub.s32 %v1152, %v1154
    %v1156 = vrot.slane %v1134, %v1155
    %v1158 = vunpack.c.l.s4 1966171168
    %v1159 = vunpack.c.0.s8 %v1158
    %v1160 = vlaneseq
    %v1161 = vshrl.u32 %v1160, 7
    %v1162 = vsub.s32 %v1159, %v1161
    %v1163 = vrot.slane %v1135, %v1162
    %v1164 = vcombine.high %v1142, %v1142
    %v1165 = vcombine.high %v1149, %v1149
    %v1166 = vcombine.high %v1156, %v1156
    %v1167 = vcombine.high %v1163, %v1163
    %v1168 = vcombine.high %v1085, %v1085
    %v1170 = vunpack.c.l.s4 1966171168
    %v1171 = vunpack.c.0.s8 %v1170
    %v1172 = vlaneseq
    %v1173 = vshrl.u32 %v1172, 7
    %v1174 = vsub.s32 %v1171, %v1173
    %v1175 = vrot.slane %v1085, %v1174
    %v1177 = vunpack.c.l.s4 1966171168
    %v1178 = vunpack.c.0.s8 %v1177
    %v1179 = vlaneseq
    %v1180 = vshrl.u32 %v1179, 7
    %v1181 = vsub.s32 %v1178, %v1180
    %v1182 = vrot.slane %v1168, %v1181
    %v1183 = vcombine.high %v1175, %v1175
    %v1184 = vcombine.high %v1182, %v1182
    %v1186 = vunpack.c.l.s4 1966171168
    %v1187 = vunpack.c.0.s8 %v1186
    %v1188 = vlaneseq
    %v1189 = vshrl.u32 %v1188, 7
    %v1190 = vsub.s32 %v1187, %v1189
    %v1191 = vrot.slane %v1175, %v1190
    %v1193 = vunpack.c.l.s4 1966171168
    %v1194 = vunpack.c.0.s8 %v1193
    %v1195 = vlaneseq
    %v1196 = vshrl.u32 %v1195, 7
    %v1197 = vsub.s32 %v1194, %v1196
    %v1198 = vrot.slane %v1182, %v1197
    %v1200 = vunpack.c.l.s4 1966171168
    %v1201 = vunpack.c.0.s8 %v1200
    %v1202 = vlaneseq
    %v1203 = vshrl.u32 %v1202, 7
    %v1204 = vsub.s32 %v1201, %v1203
    %v1205 = vrot.slane %v1183, %v1204
    %v1207 = vunpack.c.l.s4 1966171168
    %v1208 = vunpack.c.0.s8 %v1207
    %v1209 = vlaneseq
    %v1210 = vshrl.u32 %v1209, 7
    %v1211 = vsub.s32 %v1208, %v1210
    %v1212 = vrot.slane %v1184, %v1211
    %v1213 = vcombine.high %v1191, %v1191
    %v1214 = vcombine.high %v1198, %v1198
    %v1215 = vcombine.high %v1205, %v1205
    %v1216 = vcombine.high %v1212, %v1212
    %v1217 = vlaneseq
    %v1218 = vshrl.u32 %v1217, 7
    %v1219 = vsub.s32 0, %v1218
    %v1220 = vrot.slane %v1142, %v1219
    %v1221 = vlaneseq
    %v1222 = vshrl.u32 %v1221, 7
    %v1223 = vsub.s32 0, %v1222
    %v1224 = vrot.slane %v1156, %v1223
    %v1225 = vlaneseq
    %v1226 = vshrl.u32 %v1225, 7
    %v1227 = vsub.s32 0, %v1226
    %v1228 = vrot.slane %v1164, %v1227
    %v1229 = vlaneseq
    %v1230 = vshrl.u32 %v1229, 7
    %v1231 = vsub.s32 0, %v1230
    %v1232 = vrot.slane %v1166, %v1231
    %v1233 = vlaneseq
    %v1234 = vshrl.u32 %v1233, 7
    %v1235 = vsub.s32 0, %v1234
    %v1236 = vrot.slane %v1149, %v1235
    %v1237 = vlaneseq
    %v1238 = vshrl.u32 %v1237, 7
    %v1239 = vsub.s32 0, %v1238
    %v1240 = vrot.slane %v1163, %v1239
    %v1241 = vlaneseq
    %v1242 = vshrl.u32 %v1241, 7
    %v1243 = vsub.s32 0, %v1242
    %v1244 = vrot.slane %v1165, %v1243
    %v1245 = vlaneseq
    %v1246 = vshrl.u32 %v1245, 7
    %v1247 = vsub.s32 0, %v1246
    %v1248 = vrot.slane %v1167, %v1247
    %v1249 = vlaneseq
    %v1250 = vshrl.u32 %v1249, 7
    %v1251 = vsub.s32 0, %v1250
    %v1252 = vrot.slane %v1191, %v1251
    %v1253 = vlaneseq
    %v1254 = vshrl.u32 %v1253, 7
    %v1255 = vsub.s32 0, %v1254
    %v1256 = vrot.slane %v1205, %v1255
    %v1257 = vlaneseq
    %v1258 = vshrl.u32 %v1257, 7
    %v1259 = vsub.s32 0, %v1258
    %v1260 = vrot.slane %v1213, %v1259
    %v1261 = vlaneseq
    %v1262 = vshrl.u32 %v1261, 7
    %v1263 = vsub.s32 0, %v1262
    %v1264 = vrot.slane %v1215, %v1263
    %v1265 = vlaneseq
    %v1266 = vshrl.u32 %v1265, 7
    %v1267 = vsub.s32 0, %v1266
    %v1268 = vrot.slane %v1198, %v1267
    %v1269 = vlaneseq
    %v1270 = vshrl.u32 %v1269, 7
    %v1271 = vsub.s32 0, %v1270
    %v1272 = vrot.slane %v1212, %v1271
    %v1273 = vlaneseq
    %v1274 = vshrl.u32 %v1273, 7
    %v1275 = vsub.s32 0, %v1274
    %v1276 = vrot.slane %v1214, %v1275
    %v1277 = vlaneseq
    %v1278 = vshrl.u32 %v1277, 7
    %v1279 = vsub.s32 0, %v1278
    %v1280 = vrot.slane %v1216, %v1279
    %v1297 = vmul.f32 %v1220, %v1115
    %v1298 = vmul.f32 %v1220, %v1116
    %v1299 = vmul.f32 %v1224, %v1115
    %v1300 = vmul.f32 %v1224, %v1116
    %v1301 = vmul.f32 %v1228, %v1115
    %v1302 = vmul.f32 %v1228, %v1116
    %v1303 = vmul.f32 %v1232, %v1115
    %v1304 = vmul.f32 %v1232, %v1116
    %v1305 = vmul.f32 %v1236, %v1115
    %v1306 = vmul.f32 %v1236, %v1116
    %v1307 = vmul.f32 %v1240, %v1115
    %v1308 = vmul.f32 %v1240, %v1116
    %v1309 = vmul.f32 %v1244, %v1115
    %v1310 = vmul.f32 %v1244, %v1116
    %v1311 = vmul.f32 %v1248, %v1115
    %v1312 = vmul.f32 %v1248, %v1116
    %v1313 = vmul.f32 %v1252, %v1115
    %v1314 = vmul.f32 %v1252, %v1116
    %v1315 = vmul.f32 %v1256, %v1115
    %v1316 = vmul.f32 %v1256, %v1116
    %v1317 = vmul.f32 %v1260, %v1115
    %v1318 = vmul.f32 %v1260, %v1116
    %v1319 = vmul.f32 %v1264, %v1115
    %v1320 = vmul.f32 %v1264, %v1116
    %v1321 = vmul.f32 %v1268, %v1115
    %v1322 = vmul.f32 %v1268, %v1116
    %v1323 = vmul.f32 %v1272, %v1115
    %v1324 = vmul.f32 %v1272, %v1116
    %v1325 = vmul.f32 %v1276, %v1115
    %v1326 = vmul.f32 %v1276, %v1116
    %v1327 = vmul.f32 %v1280, %v1115
    %v1328 = vmul.f32 %v1280, %v1116
    %s1329 = sadd.s32 %s69, 4
    %s1330 = sld [smem:[#allocation3 + %s1329]]
    %s1331 = smul.u32 %s1329, 4
    %s1332 = sld [smem:[#allocation7 + %s1331]]
    %s1333 = smul.f32 %s1332, 0.5
    %s1334 = sadd.s32 %s1331, 1
    %s1335 = sld [smem:[#allocation7 + %s1334]]
    %s1336 = smul.f32 %s1335, 0.5
    %s1337 = sadd.s32 %s1331, 2
    %s1338 = sld [smem:[#allocation7 + %s1337]]
    %s1339 = smul.f32 %s1338, 0.5
    %s1340 = sadd.s32 %s1331, 3
    %s1341 = sld [smem:[#allocation7 + %s1340]]
    %s1342 = smul.f32 %s1341, 0.5
    %s1343 = ssub.f32 %s1339, %s1333
    %s1344 = smax.f32 %s1343, 0.0
    %s1345 = ssub.f32 %s1342, %s1336
    %s1346 = smax.f32 %s1345, 0.0
    %v1347 = vrcp.pop 7.0
    %s1348 = vtos %v1347
    %s1349 = smul.f32 %s1344, %s1348
    %v1350 = vrcp.pop 7.0
    %s1351 = vtos %v1350
    %s1352 = smul.f32 %s1346, %s1351
    %s1353 = smul.f32 %s1349, %s1352
    %p1354 = scmp.gt.f32.partialorder %s1353, 0.0
    %v1355 = vstv %s1353
    %v1356 = vrcp.pop %v1355
    %s1357 = vtos %v1356
    %s1358 = scalar_select %p1354, %s1357, 0.0
    %v1359 = vstv %s1352
    %v1360 = vmul.f32 %v1359, %v66
    %v1361 = vstv %s1336
    %v1362 = vadd.f32 %v1361, %v1360
    %v1363 = vstv %s1349
    %v1364 = vmul.f32 %v1363, %v68
    %v1365 = vstv %s1333
    %v1366 = vadd.f32 %v1365, %v1364
    %v1367 = vadd.f32 %v1362, %v1359
    %v1368 = vsub.f32 %v1367, %v59
    %v1369 = vsub.f32 %v1367, %v60
    %v1370 = vmax.f32 %v1368, -1.0
    %v1371 = vmax.f32 %v1369, -1.0
    %v1372 = vmin.f32 %v1370, 1.0
    %v1373 = vmin.f32 %v1371, 1.0
    %v1374 = vmul.f32 %v1372, 0.5
    %v1375 = vmul.f32 %v1373, 0.5
    %v1376 = vand.u32 2147483647, %v1372
    %v1377 = vand.u32 2147483647, %v1373
    %v1378 = vmul.f32 %v1374, %v1376
    %v1379 = vmul.f32 %v1375, %v1377
    %v1380 = vsub.f32 %v1372, %v1378
    %v1381 = vsub.f32 %v1373, %v1379
    %v1382 = vsub.f32 %v1362, %v59
    %v1383 = vsub.f32 %v1362, %v60
    %v1384 = vmax.f32 %v1382, -1.0
    %v1385 = vmax.f32 %v1383, -1.0
    %v1386 = vmin.f32 %v1384, 1.0
    %v1387 = vmin.f32 %v1385, 1.0
    %v1388 = vmul.f32 %v1386, 0.5
    %v1389 = vmul.f32 %v1387, 0.5
    %v1390 = vand.u32 2147483647, %v1386
    %v1391 = vand.u32 2147483647, %v1387
    %v1392 = vmul.f32 %v1388, %v1390
    %v1393 = vmul.f32 %v1389, %v1391
    %v1394 = vsub.f32 %v1386, %v1392
    %v1395 = vsub.f32 %v1387, %v1393
    %v1396 = vsub.f32 %v1380, %v1394
    %v1397 = vsub.f32 %v1381, %v1395
    %v1398 = vstv %s1358
    %v1399 = vmul.f32 %v1396, %v1398
    %v1400 = vmul.f32 %v1397, %v1398
    %v1401 = vadd.f32 %v1366, %v1363
    %v1402 = vsub.f32 %v1401, %v59
    %v1403 = vsub.f32 %v1401, %v60
    %v1404 = vmax.f32 %v1402, -1.0
    %v1405 = vmax.f32 %v1403, -1.0
    %v1406 = vmin.f32 %v1404, 1.0
    %v1407 = vmin.f32 %v1405, 1.0
    %v1408 = vmul.f32 %v1406, 0.5
    %v1409 = vmul.f32 %v1407, 0.5
    %v1410 = vand.u32 2147483647, %v1406
    %v1411 = vand.u32 2147483647, %v1407
    %v1412 = vmul.f32 %v1408, %v1410
    %v1413 = vmul.f32 %v1409, %v1411
    %v1414 = vsub.f32 %v1406, %v1412
    %v1415 = vsub.f32 %v1407, %v1413
    %v1416 = vsub.f32 %v1366, %v59
    %v1417 = vsub.f32 %v1366, %v60
    %v1418 = vmax.f32 %v1416, -1.0
    %v1419 = vmax.f32 %v1417, -1.0
    %v1420 = vmin.f32 %v1418, 1.0
    %v1421 = vmin.f32 %v1419, 1.0
    %v1422 = vmul.f32 %v1420, 0.5
    %v1423 = vmul.f32 %v1421, 0.5
    %v1424 = vand.u32 2147483647, %v1420
    %v1425 = vand.u32 2147483647, %v1421
    %v1426 = vmul.f32 %v1422, %v1424
    %v1427 = vmul.f32 %v1423, %v1425
    %v1428 = vsub.f32 %v1420, %v1426
    %v1429 = vsub.f32 %v1421, %v1427
    %v1430 = vsub.f32 %v1414, %v1428
    %v1431 = vsub.f32 %v1415, %v1429
    %v1434 = vcombine.high %v1399, %v1399
    %v1436 = vunpack.c.l.s4 1966171168
    %v1437 = vunpack.c.0.s8 %v1436
    %v1438 = vlaneseq
    %v1439 = vshrl.u32 %v1438, 7
    %v1440 = vsub.s32 %v1437, %v1439
    %v1441 = vrot.slane %v1399, %v1440
    %v1443 = vunpack.c.l.s4 1966171168
    %v1444 = vunpack.c.0.s8 %v1443
    %v1445 = vlaneseq
    %v1446 = vshrl.u32 %v1445, 7
    %v1447 = vsub.s32 %v1444, %v1446
    %v1448 = vrot.slane %v1434, %v1447
    %v1449 = vcombine.high %v1441, %v1441
    %v1450 = vcombine.high %v1448, %v1448
    %v1452 = vunpack.c.l.s4 1966171168
    %v1453 = vunpack.c.0.s8 %v1452
    %v1454 = vlaneseq
    %v1455 = vshrl.u32 %v1454, 7
    %v1456 = vsub.s32 %v1453, %v1455
    %v1457 = vrot.slane %v1441, %v1456
    %v1459 = vunpack.c.l.s4 1966171168
    %v1460 = vunpack.c.0.s8 %v1459
    %v1461 = vlaneseq
    %v1462 = vshrl.u32 %v1461, 7
    %v1463 = vsub.s32 %v1460, %v1462
    %v1464 = vrot.slane %v1448, %v1463
    %v1466 = vunpack.c.l.s4 1966171168
    %v1467 = vunpack.c.0.s8 %v1466
    %v1468 = vlaneseq
    %v1469 = vshrl.u32 %v1468, 7
    %v1470 = vsub.s32 %v1467, %v1469
    %v1471 = vrot.slane %v1449, %v1470
    %v1473 = vunpack.c.l.s4 1966171168
    %v1474 = vunpack.c.0.s8 %v1473
    %v1475 = vlaneseq
    %v1476 = vshrl.u32 %v1475, 7
    %v1477 = vsub.s32 %v1474, %v1476
    %v1478 = vrot.slane %v1450, %v1477
    %v1479 = vcombine.high %v1457, %v1457
    %v1480 = vcombine.high %v1464, %v1464
    %v1481 = vcombine.high %v1471, %v1471
    %v1482 = vcombine.high %v1478, %v1478
    %v1483 = vcombine.high %v1400, %v1400
    %v1485 = vunpack.c.l.s4 1966171168
    %v1486 = vunpack.c.0.s8 %v1485
    %v1487 = vlaneseq
    %v1488 = vshrl.u32 %v1487, 7
    %v1489 = vsub.s32 %v1486, %v1488
    %v1490 = vrot.slane %v1400, %v1489
    %v1492 = vunpack.c.l.s4 1966171168
    %v1493 = vunpack.c.0.s8 %v1492
    %v1494 = vlaneseq
    %v1495 = vshrl.u32 %v1494, 7
    %v1496 = vsub.s32 %v1493, %v1495
    %v1497 = vrot.slane %v1483, %v1496
    %v1498 = vcombine.high %v1490, %v1490
    %v1499 = vcombine.high %v1497, %v1497
    %v1501 = vunpack.c.l.s4 1966171168
    %v1502 = vunpack.c.0.s8 %v1501
    %v1503 = vlaneseq
    %v1504 = vshrl.u32 %v1503, 7
    %v1505 = vsub.s32 %v1502, %v1504
    %v1506 = vrot.slane %v1490, %v1505
    %v1508 = vunpack.c.l.s4 1966171168
    %v1509 = vunpack.c.0.s8 %v1508
    %v1510 = vlaneseq
    %v1511 = vshrl.u32 %v1510, 7
    %v1512 = vsub.s32 %v1509, %v1511
    %v1513 = vrot.slane %v1497, %v1512
    %v1515 = vunpack.c.l.s4 1966171168
    %v1516 = vunpack.c.0.s8 %v1515
    %v1517 = vlaneseq
    %v1518 = vshrl.u32 %v1517, 7
    %v1519 = vsub.s32 %v1516, %v1518
    %v1520 = vrot.slane %v1498, %v1519
    %v1522 = vunpack.c.l.s4 1966171168
    %v1523 = vunpack.c.0.s8 %v1522
    %v1524 = vlaneseq
    %v1525 = vshrl.u32 %v1524, 7
    %v1526 = vsub.s32 %v1523, %v1525
    %v1527 = vrot.slane %v1499, %v1526
    %v1528 = vcombine.high %v1506, %v1506
    %v1529 = vcombine.high %v1513, %v1513
    %v1530 = vcombine.high %v1520, %v1520
    %v1531 = vcombine.high %v1527, %v1527
    %v1532 = vlaneseq
    %v1533 = vshrl.u32 %v1532, 7
    %v1534 = vsub.s32 0, %v1533
    %v1535 = vrot.slane %v1457, %v1534
    %v1536 = vlaneseq
    %v1537 = vshrl.u32 %v1536, 7
    %v1538 = vsub.s32 0, %v1537
    %v1539 = vrot.slane %v1471, %v1538
    %v1540 = vlaneseq
    %v1541 = vshrl.u32 %v1540, 7
    %v1542 = vsub.s32 0, %v1541
    %v1543 = vrot.slane %v1479, %v1542
    %v1544 = vlaneseq
    %v1545 = vshrl.u32 %v1544, 7
    %v1546 = vsub.s32 0, %v1545
    %v1547 = vrot.slane %v1481, %v1546
    %v1548 = vlaneseq
    %v1549 = vshrl.u32 %v1548, 7
    %v1550 = vsub.s32 0, %v1549
    %v1551 = vrot.slane %v1464, %v1550
    %v1552 = vlaneseq
    %v1553 = vshrl.u32 %v1552, 7
    %v1554 = vsub.s32 0, %v1553
    %v1555 = vrot.slane %v1478, %v1554
    %v1556 = vlaneseq
    %v1557 = vshrl.u32 %v1556, 7
    %v1558 = vsub.s32 0, %v1557
    %v1559 = vrot.slane %v1480, %v1558
    %v1560 = vlaneseq
    %v1561 = vshrl.u32 %v1560, 7
    %v1562 = vsub.s32 0, %v1561
    %v1563 = vrot.slane %v1482, %v1562
    %v1564 = vlaneseq
    %v1565 = vshrl.u32 %v1564, 7
    %v1566 = vsub.s32 0, %v1565
    %v1567 = vrot.slane %v1506, %v1566
    %v1568 = vlaneseq
    %v1569 = vshrl.u32 %v1568, 7
    %v1570 = vsub.s32 0, %v1569
    %v1571 = vrot.slane %v1520, %v1570
    %v1572 = vlaneseq
    %v1573 = vshrl.u32 %v1572, 7
    %v1574 = vsub.s32 0, %v1573
    %v1575 = vrot.slane %v1528, %v1574
    %v1576 = vlaneseq
    %v1577 = vshrl.u32 %v1576, 7
    %v1578 = vsub.s32 0, %v1577
    %v1579 = vrot.slane %v1530, %v1578
    %v1580 = vlaneseq
    %v1581 = vshrl.u32 %v1580, 7
    %v1582 = vsub.s32 0, %v1581
    %v1583 = vrot.slane %v1513, %v1582
    %v1584 = vlaneseq
    %v1585 = vshrl.u32 %v1584, 7
    %v1586 = vsub.s32 0, %v1585
    %v1587 = vrot.slane %v1527, %v1586
    %v1588 = vlaneseq
    %v1589 = vshrl.u32 %v1588, 7
    %v1590 = vsub.s32 0, %v1589
    %v1591 = vrot.slane %v1529, %v1590
    %v1592 = vlaneseq
    %v1593 = vshrl.u32 %v1592, 7
    %v1594 = vsub.s32 0, %v1593
    %v1595 = vrot.slane %v1531, %v1594
    %v1612 = vmul.f32 %v1535, %v1430
    %v1613 = vmul.f32 %v1535, %v1431
    %v1614 = vmul.f32 %v1539, %v1430
    %v1615 = vmul.f32 %v1539, %v1431
    %v1616 = vmul.f32 %v1543, %v1430
    %v1617 = vmul.f32 %v1543, %v1431
    %v1618 = vmul.f32 %v1547, %v1430
    %v1619 = vmul.f32 %v1547, %v1431
    %v1620 = vmul.f32 %v1551, %v1430
    %v1621 = vmul.f32 %v1551, %v1431
    %v1622 = vmul.f32 %v1555, %v1430
    %v1623 = vmul.f32 %v1555, %v1431
    %v1624 = vmul.f32 %v1559, %v1430
    %v1625 = vmul.f32 %v1559, %v1431
    %v1626 = vmul.f32 %v1563, %v1430
    %v1627 = vmul.f32 %v1563, %v1431
    %v1628 = vmul.f32 %v1567, %v1430
    %v1629 = vmul.f32 %v1567, %v1431
    %v1630 = vmul.f32 %v1571, %v1430
    %v1631 = vmul.f32 %v1571, %v1431
    %v1632 = vmul.f32 %v1575, %v1430
    %v1633 = vmul.f32 %v1575, %v1431
    %v1634 = vmul.f32 %v1579, %v1430
    %v1635 = vmul.f32 %v1579, %v1431
    %v1636 = vmul.f32 %v1583, %v1430
    %v1637 = vmul.f32 %v1583, %v1431
    %v1638 = vmul.f32 %v1587, %v1430
    %v1639 = vmul.f32 %v1587, %v1431
    %v1640 = vmul.f32 %v1591, %v1430
    %v1641 = vmul.f32 %v1591, %v1431
    %v1642 = vmul.f32 %v1595, %v1430
    %v1643 = vmul.f32 %v1595, %v1431
    %s1644 = sadd.s32 %s69, 5
    %s1645 = sld [smem:[#allocation3 + %s1644]]
    %s1646 = smul.u32 %s1644, 4
    %s1647 = sld [smem:[#allocation7 + %s1646]]
    %s1648 = smul.f32 %s1647, 0.5
    %s1649 = sadd.s32 %s1646, 1
    %s1650 = sld [smem:[#allocation7 + %s1649]]
    %s1651 = smul.f32 %s1650, 0.5
    %s1652 = sadd.s32 %s1646, 2
    %s1653 = sld [smem:[#allocation7 + %s1652]]
    %s1654 = smul.f32 %s1653, 0.5
    %s1655 = sadd.s32 %s1646, 3
    %s1656 = sld [smem:[#allocation7 + %s1655]]
    %s1657 = smul.f32 %s1656, 0.5
    %s1658 = ssub.f32 %s1654, %s1648
    %s1659 = smax.f32 %s1658, 0.0
    %s1660 = ssub.f32 %s1657, %s1651
    %s1661 = smax.f32 %s1660, 0.0
    %v1662 = vrcp.pop 7.0
    %s1663 = vtos %v1662
    %s1664 = smul.f32 %s1659, %s1663
    %v1665 = vrcp.pop 7.0
    %s1666 = vtos %v1665
    %s1667 = smul.f32 %s1661, %s1666
    %s1668 = smul.f32 %s1664, %s1667
    %p1669 = scmp.gt.f32.partialorder %s1668, 0.0
    %v1670 = vstv %s1668
    %v1671 = vrcp.pop %v1670
    %s1672 = vtos %v1671
    %s1673 = scalar_select %p1669, %s1672, 0.0
    %v1674 = vstv %s1667
    %v1675 = vmul.f32 %v1674, %v66
    %v1676 = vstv %s1651
    %v1677 = vadd.f32 %v1676, %v1675
    %v1678 = vstv %s1664
    %v1679 = vmul.f32 %v1678, %v68
    %v1680 = vstv %s1648
    %v1681 = vadd.f32 %v1680, %v1679
    %v1682 = vadd.f32 %v1677, %v1674
    %v1683 = vsub.f32 %v1682, %v59
    %v1684 = vsub.f32 %v1682, %v60
    %v1685 = vmax.f32 %v1683, -1.0
    %v1686 = vmax.f32 %v1684, -1.0
    %v1687 = vmin.f32 %v1685, 1.0
    %v1688 = vmin.f32 %v1686, 1.0
    %v1689 = vmul.f32 %v1687, 0.5
    %v1690 = vmul.f32 %v1688, 0.5
    %v1691 = vand.u32 2147483647, %v1687
    %v1692 = vand.u32 2147483647, %v1688
    %v1693 = vmul.f32 %v1689, %v1691
    %v1694 = vmul.f32 %v1690, %v1692
    %v1695 = vsub.f32 %v1687, %v1693
    %v1696 = vsub.f32 %v1688, %v1694
    %v1697 = vsub.f32 %v1677, %v59
    %v1698 = vsub.f32 %v1677, %v60
    %v1699 = vmax.f32 %v1697, -1.0
    %v1700 = vmax.f32 %v1698, -1.0
    %v1701 = vmin.f32 %v1699, 1.0
    %v1702 = vmin.f32 %v1700, 1.0
    %v1703 = vmul.f32 %v1701, 0.5
    %v1704 = vmul.f32 %v1702, 0.5
    %v1705 = vand.u32 2147483647, %v1701
    %v1706 = vand.u32 2147483647, %v1702
    %v1707 = vmul.f32 %v1703, %v1705
    %v1708 = vmul.f32 %v1704, %v1706
    %v1709 = vsub.f32 %v1701, %v1707
    %v1710 = vsub.f32 %v1702, %v1708
    %v1711 = vsub.f32 %v1695, %v1709
    %v1712 = vsub.f32 %v1696, %v1710
    %v1713 = vstv %s1673
    %v1714 = vmul.f32 %v1711, %v1713
    %v1715 = vmul.f32 %v1712, %v1713
    %v1716 = vadd.f32 %v1681, %v1678
    %v1717 = vsub.f32 %v1716, %v59
    %v1718 = vsub.f32 %v1716, %v60
    %v1719 = vmax.f32 %v1717, -1.0
    %v1720 = vmax.f32 %v1718, -1.0
    %v1721 = vmin.f32 %v1719, 1.0
    %v1722 = vmin.f32 %v1720, 1.0
    %v1723 = vmul.f32 %v1721, 0.5
    %v1724 = vmul.f32 %v1722, 0.5
    %v1725 = vand.u32 2147483647, %v1721
    %v1726 = vand.u32 2147483647, %v1722
    %v1727 = vmul.f32 %v1723, %v1725
    %v1728 = vmul.f32 %v1724, %v1726
    %v1729 = vsub.f32 %v1721, %v1727
    %v1730 = vsub.f32 %v1722, %v1728
    %v1731 = vsub.f32 %v1681, %v59
    %v1732 = vsub.f32 %v1681, %v60
    %v1733 = vmax.f32 %v1731, -1.0
    %v1734 = vmax.f32 %v1732, -1.0
    %v1735 = vmin.f32 %v1733, 1.0
    %v1736 = vmin.f32 %v1734, 1.0
    %v1737 = vmul.f32 %v1735, 0.5
    %v1738 = vmul.f32 %v1736, 0.5
    %v1739 = vand.u32 2147483647, %v1735
    %v1740 = vand.u32 2147483647, %v1736
    %v1741 = vmul.f32 %v1737, %v1739
    %v1742 = vmul.f32 %v1738, %v1740
    %v1743 = vsub.f32 %v1735, %v1741
    %v1744 = vsub.f32 %v1736, %v1742
    %v1745 = vsub.f32 %v1729, %v1743
    %v1746 = vsub.f32 %v1730, %v1744
    %v1749 = vcombine.high %v1714, %v1714
    %v1751 = vunpack.c.l.s4 1966171168
    %v1752 = vunpack.c.0.s8 %v1751
    %v1753 = vlaneseq
    %v1754 = vshrl.u32 %v1753, 7
    %v1755 = vsub.s32 %v1752, %v1754
    %v1756 = vrot.slane %v1714, %v1755
    %v1758 = vunpack.c.l.s4 1966171168
    %v1759 = vunpack.c.0.s8 %v1758
    %v1760 = vlaneseq
    %v1761 = vshrl.u32 %v1760, 7
    %v1762 = vsub.s32 %v1759, %v1761
    %v1763 = vrot.slane %v1749, %v1762
    %v1764 = vcombine.high %v1756, %v1756
    %v1765 = vcombine.high %v1763, %v1763
    %v1767 = vunpack.c.l.s4 1966171168
    %v1768 = vunpack.c.0.s8 %v1767
    %v1769 = vlaneseq
    %v1770 = vshrl.u32 %v1769, 7
    %v1771 = vsub.s32 %v1768, %v1770
    %v1772 = vrot.slane %v1756, %v1771
    %v1774 = vunpack.c.l.s4 1966171168
    %v1775 = vunpack.c.0.s8 %v1774
    %v1776 = vlaneseq
    %v1777 = vshrl.u32 %v1776, 7
    %v1778 = vsub.s32 %v1775, %v1777
    %v1779 = vrot.slane %v1763, %v1778
    %v1781 = vunpack.c.l.s4 1966171168
    %v1782 = vunpack.c.0.s8 %v1781
    %v1783 = vlaneseq
    %v1784 = vshrl.u32 %v1783, 7
    %v1785 = vsub.s32 %v1782, %v1784
    %v1786 = vrot.slane %v1764, %v1785
    %v1788 = vunpack.c.l.s4 1966171168
    %v1789 = vunpack.c.0.s8 %v1788
    %v1790 = vlaneseq
    %v1791 = vshrl.u32 %v1790, 7
    %v1792 = vsub.s32 %v1789, %v1791
    %v1793 = vrot.slane %v1765, %v1792
    %v1794 = vcombine.high %v1772, %v1772
    %v1795 = vcombine.high %v1779, %v1779
    %v1796 = vcombine.high %v1786, %v1786
    %v1797 = vcombine.high %v1793, %v1793
    %v1798 = vcombine.high %v1715, %v1715
    %v1800 = vunpack.c.l.s4 1966171168
    %v1801 = vunpack.c.0.s8 %v1800
    %v1802 = vlaneseq
    %v1803 = vshrl.u32 %v1802, 7
    %v1804 = vsub.s32 %v1801, %v1803
    %v1805 = vrot.slane %v1715, %v1804
    %v1807 = vunpack.c.l.s4 1966171168
    %v1808 = vunpack.c.0.s8 %v1807
    %v1809 = vlaneseq
    %v1810 = vshrl.u32 %v1809, 7
    %v1811 = vsub.s32 %v1808, %v1810
    %v1812 = vrot.slane %v1798, %v1811
    %v1813 = vcombine.high %v1805, %v1805
    %v1814 = vcombine.high %v1812, %v1812
    %v1816 = vunpack.c.l.s4 1966171168
    %v1817 = vunpack.c.0.s8 %v1816
    %v1818 = vlaneseq
    %v1819 = vshrl.u32 %v1818, 7
    %v1820 = vsub.s32 %v1817, %v1819
    %v1821 = vrot.slane %v1805, %v1820
    %v1823 = vunpack.c.l.s4 1966171168
    %v1824 = vunpack.c.0.s8 %v1823
    %v1825 = vlaneseq
    %v1826 = vshrl.u32 %v1825, 7
    %v1827 = vsub.s32 %v1824, %v1826
    %v1828 = vrot.slane %v1812, %v1827
    %v1830 = vunpack.c.l.s4 1966171168
    %v1831 = vunpack.c.0.s8 %v1830
    %v1832 = vlaneseq
    %v1833 = vshrl.u32 %v1832, 7
    %v1834 = vsub.s32 %v1831, %v1833
    %v1835 = vrot.slane %v1813, %v1834
    %v1837 = vunpack.c.l.s4 1966171168
    %v1838 = vunpack.c.0.s8 %v1837
    %v1839 = vlaneseq
    %v1840 = vshrl.u32 %v1839, 7
    %v1841 = vsub.s32 %v1838, %v1840
    %v1842 = vrot.slane %v1814, %v1841
    %v1843 = vcombine.high %v1821, %v1821
    %v1844 = vcombine.high %v1828, %v1828
    %v1845 = vcombine.high %v1835, %v1835
    %v1846 = vcombine.high %v1842, %v1842
    %v1847 = vlaneseq
    %v1848 = vshrl.u32 %v1847, 7
    %v1849 = vsub.s32 0, %v1848
    %v1850 = vrot.slane %v1772, %v1849
    %v1851 = vlaneseq
    %v1852 = vshrl.u32 %v1851, 7
    %v1853 = vsub.s32 0, %v1852
    %v1854 = vrot.slane %v1786, %v1853
    %v1855 = vlaneseq
    %v1856 = vshrl.u32 %v1855, 7
    %v1857 = vsub.s32 0, %v1856
    %v1858 = vrot.slane %v1794, %v1857
    %v1859 = vlaneseq
    %v1860 = vshrl.u32 %v1859, 7
    %v1861 = vsub.s32 0, %v1860
    %v1862 = vrot.slane %v1796, %v1861
    %v1863 = vlaneseq
    %v1864 = vshrl.u32 %v1863, 7
    %v1865 = vsub.s32 0, %v1864
    %v1866 = vrot.slane %v1779, %v1865
    %v1867 = vlaneseq
    %v1868 = vshrl.u32 %v1867, 7
    %v1869 = vsub.s32 0, %v1868
    %v1870 = vrot.slane %v1793, %v1869
    %v1871 = vlaneseq
    %v1872 = vshrl.u32 %v1871, 7
    %v1873 = vsub.s32 0, %v1872
    %v1874 = vrot.slane %v1795, %v1873
    %v1875 = vlaneseq
    %v1876 = vshrl.u32 %v1875, 7
    %v1877 = vsub.s32 0, %v1876
    %v1878 = vrot.slane %v1797, %v1877
    %v1879 = vlaneseq
    %v1880 = vshrl.u32 %v1879, 7
    %v1881 = vsub.s32 0, %v1880
    %v1882 = vrot.slane %v1821, %v1881
    %v1883 = vlaneseq
    %v1884 = vshrl.u32 %v1883, 7
    %v1885 = vsub.s32 0, %v1884
    %v1886 = vrot.slane %v1835, %v1885
    %v1887 = vlaneseq
    %v1888 = vshrl.u32 %v1887, 7
    %v1889 = vsub.s32 0, %v1888
    %v1890 = vrot.slane %v1843, %v1889
    %v1891 = vlaneseq
    %v1892 = vshrl.u32 %v1891, 7
    %v1893 = vsub.s32 0, %v1892
    %v1894 = vrot.slane %v1845, %v1893
    %v1895 = vlaneseq
    %v1896 = vshrl.u32 %v1895, 7
    %v1897 = vsub.s32 0, %v1896
    %v1898 = vrot.slane %v1828, %v1897
    %v1899 = vlaneseq
    %v1900 = vshrl.u32 %v1899, 7
    %v1901 = vsub.s32 0, %v1900
    %v1902 = vrot.slane %v1842, %v1901
    %v1903 = vlaneseq
    %v1904 = vshrl.u32 %v1903, 7
    %v1905 = vsub.s32 0, %v1904
    %v1906 = vrot.slane %v1844, %v1905
    %v1907 = vlaneseq
    %v1908 = vshrl.u32 %v1907, 7
    %v1909 = vsub.s32 0, %v1908
    %v1910 = vrot.slane %v1846, %v1909
    %v1927 = vmul.f32 %v1850, %v1745
    %v1928 = vmul.f32 %v1850, %v1746
    %v1929 = vmul.f32 %v1854, %v1745
    %v1930 = vmul.f32 %v1854, %v1746
    %v1931 = vmul.f32 %v1858, %v1745
    %v1932 = vmul.f32 %v1858, %v1746
    %v1933 = vmul.f32 %v1862, %v1745
    %v1934 = vmul.f32 %v1862, %v1746
    %v1935 = vmul.f32 %v1866, %v1745
    %v1936 = vmul.f32 %v1866, %v1746
    %v1937 = vmul.f32 %v1870, %v1745
    %v1938 = vmul.f32 %v1870, %v1746
    %v1939 = vmul.f32 %v1874, %v1745
    %v1940 = vmul.f32 %v1874, %v1746
    %v1941 = vmul.f32 %v1878, %v1745
    %v1942 = vmul.f32 %v1878, %v1746
    %v1943 = vmul.f32 %v1882, %v1745
    %v1944 = vmul.f32 %v1882, %v1746
    %v1945 = vmul.f32 %v1886, %v1745
    %v1946 = vmul.f32 %v1886, %v1746
    %v1947 = vmul.f32 %v1890, %v1745
    %v1948 = vmul.f32 %v1890, %v1746
    %v1949 = vmul.f32 %v1894, %v1745
    %v1950 = vmul.f32 %v1894, %v1746
    %v1951 = vmul.f32 %v1898, %v1745
    %v1952 = vmul.f32 %v1898, %v1746
    %v1953 = vmul.f32 %v1902, %v1745
    %v1954 = vmul.f32 %v1902, %v1746
    %v1955 = vmul.f32 %v1906, %v1745
    %v1956 = vmul.f32 %v1906, %v1746
    %v1957 = vmul.f32 %v1910, %v1745
    %v1958 = vmul.f32 %v1910, %v1746
    %s1959 = sadd.s32 %s69, 6
    %s1960 = sld [smem:[#allocation3 + %s1959]]
    %s1961 = smul.u32 %s1959, 4
    %s1962 = sld [smem:[#allocation7 + %s1961]]
    %s1963 = smul.f32 %s1962, 0.5
    %s1964 = sadd.s32 %s1961, 1
    %s1965 = sld [smem:[#allocation7 + %s1964]]
    %s1966 = smul.f32 %s1965, 0.5
    %s1967 = sadd.s32 %s1961, 2
    %s1968 = sld [smem:[#allocation7 + %s1967]]
    %s1969 = smul.f32 %s1968, 0.5
    %s1970 = sadd.s32 %s1961, 3
    %s1971 = sld [smem:[#allocation7 + %s1970]]
    %s1972 = smul.f32 %s1971, 0.5
    %s1973 = ssub.f32 %s1969, %s1963
    %s1974 = smax.f32 %s1973, 0.0
    %s1975 = ssub.f32 %s1972, %s1966
    %s1976 = smax.f32 %s1975, 0.0
    %v1977 = vrcp.pop 7.0
    %s1978 = vtos %v1977
    %s1979 = smul.f32 %s1974, %s1978
    %v1980 = vrcp.pop 7.0
    %s1981 = vtos %v1980
    %s1982 = smul.f32 %s1976, %s1981
    %s1983 = smul.f32 %s1979, %s1982
    %p1984 = scmp.gt.f32.partialorder %s1983, 0.0
    %v1985 = vstv %s1983
    %v1986 = vrcp.pop %v1985
    %s1987 = vtos %v1986
    %s1988 = scalar_select %p1984, %s1987, 0.0
    %v1989 = vstv %s1982
    %v1990 = vmul.f32 %v1989, %v66
    %v1991 = vstv %s1966
    %v1992 = vadd.f32 %v1991, %v1990
    %v1993 = vstv %s1979
    %v1994 = vmul.f32 %v1993, %v68
    %v1995 = vstv %s1963
    %v1996 = vadd.f32 %v1995, %v1994
    %v1997 = vadd.f32 %v1992, %v1989
    %v1998 = vsub.f32 %v1997, %v59
    %v1999 = vsub.f32 %v1997, %v60
    %v2000 = vmax.f32 %v1998, -1.0
    %v2001 = vmax.f32 %v1999, -1.0
    %v2002 = vmin.f32 %v2000, 1.0
    %v2003 = vmin.f32 %v2001, 1.0
    %v2004 = vmul.f32 %v2002, 0.5
    %v2005 = vmul.f32 %v2003, 0.5
    %v2006 = vand.u32 2147483647, %v2002
    %v2007 = vand.u32 2147483647, %v2003
    %v2008 = vmul.f32 %v2004, %v2006
    %v2009 = vmul.f32 %v2005, %v2007
    %v2010 = vsub.f32 %v2002, %v2008
    %v2011 = vsub.f32 %v2003, %v2009
    %v2012 = vsub.f32 %v1992, %v59
    %v2013 = vsub.f32 %v1992, %v60
    %v2014 = vmax.f32 %v2012, -1.0
    %v2015 = vmax.f32 %v2013, -1.0
    %v2016 = vmin.f32 %v2014, 1.0
    %v2017 = vmin.f32 %v2015, 1.0
    %v2018 = vmul.f32 %v2016, 0.5
    %v2019 = vmul.f32 %v2017, 0.5
    %v2020 = vand.u32 2147483647, %v2016
    %v2021 = vand.u32 2147483647, %v2017
    %v2022 = vmul.f32 %v2018, %v2020
    %v2023 = vmul.f32 %v2019, %v2021
    %v2024 = vsub.f32 %v2016, %v2022
    %v2025 = vsub.f32 %v2017, %v2023
    %v2026 = vsub.f32 %v2010, %v2024
    %v2027 = vsub.f32 %v2011, %v2025
    %v2028 = vstv %s1988
    %v2029 = vmul.f32 %v2026, %v2028
    %v2030 = vmul.f32 %v2027, %v2028
    %v2031 = vadd.f32 %v1996, %v1993
    %v2032 = vsub.f32 %v2031, %v59
    %v2033 = vsub.f32 %v2031, %v60
    %v2034 = vmax.f32 %v2032, -1.0
    %v2035 = vmax.f32 %v2033, -1.0
    %v2036 = vmin.f32 %v2034, 1.0
    %v2037 = vmin.f32 %v2035, 1.0
    %v2038 = vmul.f32 %v2036, 0.5
    %v2039 = vmul.f32 %v2037, 0.5
    %v2040 = vand.u32 2147483647, %v2036
    %v2041 = vand.u32 2147483647, %v2037
    %v2042 = vmul.f32 %v2038, %v2040
    %v2043 = vmul.f32 %v2039, %v2041
    %v2044 = vsub.f32 %v2036, %v2042
    %v2045 = vsub.f32 %v2037, %v2043
    %v2046 = vsub.f32 %v1996, %v59
    %v2047 = vsub.f32 %v1996, %v60
    %v2048 = vmax.f32 %v2046, -1.0
    %v2049 = vmax.f32 %v2047, -1.0
    %v2050 = vmin.f32 %v2048, 1.0
    %v2051 = vmin.f32 %v2049, 1.0
    %v2052 = vmul.f32 %v2050, 0.5
    %v2053 = vmul.f32 %v2051, 0.5
    %v2054 = vand.u32 2147483647, %v2050
    %v2055 = vand.u32 2147483647, %v2051
    %v2056 = vmul.f32 %v2052, %v2054
    %v2057 = vmul.f32 %v2053, %v2055
    %v2058 = vsub.f32 %v2050, %v2056
    %v2059 = vsub.f32 %v2051, %v2057
    %v2060 = vsub.f32 %v2044, %v2058
    %v2061 = vsub.f32 %v2045, %v2059
    %v2064 = vcombine.high %v2029, %v2029
    %v2066 = vunpack.c.l.s4 1966171168
    %v2067 = vunpack.c.0.s8 %v2066
    %v2068 = vlaneseq
    %v2069 = vshrl.u32 %v2068, 7
    %v2070 = vsub.s32 %v2067, %v2069
    %v2071 = vrot.slane %v2029, %v2070
    %v2073 = vunpack.c.l.s4 1966171168
    %v2074 = vunpack.c.0.s8 %v2073
    %v2075 = vlaneseq
    %v2076 = vshrl.u32 %v2075, 7
    %v2077 = vsub.s32 %v2074, %v2076
    %v2078 = vrot.slane %v2064, %v2077
    %v2079 = vcombine.high %v2071, %v2071
    %v2080 = vcombine.high %v2078, %v2078
    %v2082 = vunpack.c.l.s4 1966171168
    %v2083 = vunpack.c.0.s8 %v2082
    %v2084 = vlaneseq
    %v2085 = vshrl.u32 %v2084, 7
    %v2086 = vsub.s32 %v2083, %v2085
    %v2087 = vrot.slane %v2071, %v2086
    %v2089 = vunpack.c.l.s4 1966171168
    %v2090 = vunpack.c.0.s8 %v2089
    %v2091 = vlaneseq
    %v2092 = vshrl.u32 %v2091, 7
    %v2093 = vsub.s32 %v2090, %v2092
    %v2094 = vrot.slane %v2078, %v2093
    %v2096 = vunpack.c.l.s4 1966171168
    %v2097 = vunpack.c.0.s8 %v2096
    %v2098 = vlaneseq
    %v2099 = vshrl.u32 %v2098, 7
    %v2100 = vsub.s32 %v2097, %v2099
    %v2101 = vrot.slane %v2079, %v2100
    %v2103 = vunpack.c.l.s4 1966171168
    %v2104 = vunpack.c.0.s8 %v2103
    %v2105 = vlaneseq
    %v2106 = vshrl.u32 %v2105, 7
    %v2107 = vsub.s32 %v2104, %v2106
    %v2108 = vrot.slane %v2080, %v2107
    %v2109 = vcombine.high %v2087, %v2087
    %v2110 = vcombine.high %v2094, %v2094
    %v2111 = vcombine.high %v2101, %v2101
    %v2112 = vcombine.high %v2108, %v2108
    %v2113 = vcombine.high %v2030, %v2030
    %v2115 = vunpack.c.l.s4 1966171168
    %v2116 = vunpack.c.0.s8 %v2115
    %v2117 = vlaneseq
    %v2118 = vshrl.u32 %v2117, 7
    %v2119 = vsub.s32 %v2116, %v2118
    %v2120 = vrot.slane %v2030, %v2119
    %v2122 = vunpack.c.l.s4 1966171168
    %v2123 = vunpack.c.0.s8 %v2122
    %v2124 = vlaneseq
    %v2125 = vshrl.u32 %v2124, 7
    %v2126 = vsub.s32 %v2123, %v2125
    %v2127 = vrot.slane %v2113, %v2126
    %v2128 = vcombine.high %v2120, %v2120
    %v2129 = vcombine.high %v2127, %v2127
    %v2131 = vunpack.c.l.s4 1966171168
    %v2132 = vunpack.c.0.s8 %v2131
    %v2133 = vlaneseq
    %v2134 = vshrl.u32 %v2133, 7
    %v2135 = vsub.s32 %v2132, %v2134
    %v2136 = vrot.slane %v2120, %v2135
    %v2138 = vunpack.c.l.s4 1966171168
    %v2139 = vunpack.c.0.s8 %v2138
    %v2140 = vlaneseq
    %v2141 = vshrl.u32 %v2140, 7
    %v2142 = vsub.s32 %v2139, %v2141
    %v2143 = vrot.slane %v2127, %v2142
    %v2145 = vunpack.c.l.s4 1966171168
    %v2146 = vunpack.c.0.s8 %v2145
    %v2147 = vlaneseq
    %v2148 = vshrl.u32 %v2147, 7
    %v2149 = vsub.s32 %v2146, %v2148
    %v2150 = vrot.slane %v2128, %v2149
    %v2152 = vunpack.c.l.s4 1966171168
    %v2153 = vunpack.c.0.s8 %v2152
    %v2154 = vlaneseq
    %v2155 = vshrl.u32 %v2154, 7
    %v2156 = vsub.s32 %v2153, %v2155
    %v2157 = vrot.slane %v2129, %v2156
    %v2158 = vcombine.high %v2136, %v2136
    %v2159 = vcombine.high %v2143, %v2143
    %v2160 = vcombine.high %v2150, %v2150
    %v2161 = vcombine.high %v2157, %v2157
    %v2162 = vlaneseq
    %v2163 = vshrl.u32 %v2162, 7
    %v2164 = vsub.s32 0, %v2163
    %v2165 = vrot.slane %v2087, %v2164
    %v2166 = vlaneseq
    %v2167 = vshrl.u32 %v2166, 7
    %v2168 = vsub.s32 0, %v2167
    %v2169 = vrot.slane %v2101, %v2168
    %v2170 = vlaneseq
    %v2171 = vshrl.u32 %v2170, 7
    %v2172 = vsub.s32 0, %v2171
    %v2173 = vrot.slane %v2109, %v2172
    %v2174 = vlaneseq
    %v2175 = vshrl.u32 %v2174, 7
    %v2176 = vsub.s32 0, %v2175
    %v2177 = vrot.slane %v2111, %v2176
    %v2178 = vlaneseq
    %v2179 = vshrl.u32 %v2178, 7
    %v2180 = vsub.s32 0, %v2179
    %v2181 = vrot.slane %v2094, %v2180
    %v2182 = vlaneseq
    %v2183 = vshrl.u32 %v2182, 7
    %v2184 = vsub.s32 0, %v2183
    %v2185 = vrot.slane %v2108, %v2184
    %v2186 = vlaneseq
    %v2187 = vshrl.u32 %v2186, 7
    %v2188 = vsub.s32 0, %v2187
    %v2189 = vrot.slane %v2110, %v2188
    %v2190 = vlaneseq
    %v2191 = vshrl.u32 %v2190, 7
    %v2192 = vsub.s32 0, %v2191
    %v2193 = vrot.slane %v2112, %v2192
    %v2194 = vlaneseq
    %v2195 = vshrl.u32 %v2194, 7
    %v2196 = vsub.s32 0, %v2195
    %v2197 = vrot.slane %v2136, %v2196
    %v2198 = vlaneseq
    %v2199 = vshrl.u32 %v2198, 7
    %v2200 = vsub.s32 0, %v2199
    %v2201 = vrot.slane %v2150, %v2200
    %v2202 = vlaneseq
    %v2203 = vshrl.u32 %v2202, 7
    %v2204 = vsub.s32 0, %v2203
    %v2205 = vrot.slane %v2158, %v2204
    %v2206 = vlaneseq
    %v2207 = vshrl.u32 %v2206, 7
    %v2208 = vsub.s32 0, %v2207
    %v2209 = vrot.slane %v2160, %v2208
    %v2210 = vlaneseq
    %v2211 = vshrl.u32 %v2210, 7
    %v2212 = vsub.s32 0, %v2211
    %v2213 = vrot.slane %v2143, %v2212
    %v2214 = vlaneseq
    %v2215 = vshrl.u32 %v2214, 7
    %v2216 = vsub.s32 0, %v2215
    %v2217 = vrot.slane %v2157, %v2216
    %v2218 = vlaneseq
    %v2219 = vshrl.u32 %v2218, 7
    %v2220 = vsub.s32 0, %v2219
    %v2221 = vrot.slane %v2159, %v2220
    %v2222 = vlaneseq
    %v2223 = vshrl.u32 %v2222, 7
    %v2224 = vsub.s32 0, %v2223
    %v2225 = vrot.slane %v2161, %v2224
    %v2242 = vmul.f32 %v2165, %v2060
    %v2243 = vmul.f32 %v2165, %v2061
    %v2244 = vmul.f32 %v2169, %v2060
    %v2245 = vmul.f32 %v2169, %v2061
    %v2246 = vmul.f32 %v2173, %v2060
    %v2247 = vmul.f32 %v2173, %v2061
    %v2248 = vmul.f32 %v2177, %v2060
    %v2249 = vmul.f32 %v2177, %v2061
    %v2250 = vmul.f32 %v2181, %v2060
    %v2251 = vmul.f32 %v2181, %v2061
    %v2252 = vmul.f32 %v2185, %v2060
    %v2253 = vmul.f32 %v2185, %v2061
    %v2254 = vmul.f32 %v2189, %v2060
    %v2255 = vmul.f32 %v2189, %v2061
    %v2256 = vmul.f32 %v2193, %v2060
    %v2257 = vmul.f32 %v2193, %v2061
    %v2258 = vmul.f32 %v2197, %v2060
    %v2259 = vmul.f32 %v2197, %v2061
    %v2260 = vmul.f32 %v2201, %v2060
    %v2261 = vmul.f32 %v2201, %v2061
    %v2262 = vmul.f32 %v2205, %v2060
    %v2263 = vmul.f32 %v2205, %v2061
    %v2264 = vmul.f32 %v2209, %v2060
    %v2265 = vmul.f32 %v2209, %v2061
    %v2266 = vmul.f32 %v2213, %v2060
    %v2267 = vmul.f32 %v2213, %v2061
    %v2268 = vmul.f32 %v2217, %v2060
    %v2269 = vmul.f32 %v2217, %v2061
    %v2270 = vmul.f32 %v2221, %v2060
    %v2271 = vmul.f32 %v2221, %v2061
    %v2272 = vmul.f32 %v2225, %v2060
    %v2273 = vmul.f32 %v2225, %v2061
    %s2274 = sadd.s32 %s69, 7
    %s2275 = sld [smem:[#allocation3 + %s2274]]
    %s2276 = smul.u32 %s2274, 4
    %s2277 = sld [smem:[#allocation7 + %s2276]]
    %s2278 = smul.f32 %s2277, 0.5
    %s2279 = sadd.s32 %s2276, 1
    %s2280 = sld [smem:[#allocation7 + %s2279]]
    %s2281 = smul.f32 %s2280, 0.5
    %s2282 = sadd.s32 %s2276, 2
    %s2283 = sld [smem:[#allocation7 + %s2282]]
    %s2284 = smul.f32 %s2283, 0.5
    %s2285 = sadd.s32 %s2276, 3
    %s2286 = sld [smem:[#allocation7 + %s2285]]
    %s2287 = smul.f32 %s2286, 0.5
    %s2288 = ssub.f32 %s2284, %s2278
    %s2289 = smax.f32 %s2288, 0.0
    %s2290 = ssub.f32 %s2287, %s2281
    %s2291 = smax.f32 %s2290, 0.0
    %v2292 = vrcp.pop 7.0
    %s2293 = vtos %v2292
    %s2294 = smul.f32 %s2289, %s2293
    %v2295 = vrcp.pop 7.0
    %s2296 = vtos %v2295
    %s2297 = smul.f32 %s2291, %s2296
    %s2298 = smul.f32 %s2294, %s2297
    %p2299 = scmp.gt.f32.partialorder %s2298, 0.0
    %v2300 = vstv %s2298
    %v2301 = vrcp.pop %v2300
    %s2302 = vtos %v2301
    %s2303 = scalar_select %p2299, %s2302, 0.0
    %v2304 = vstv %s2297
    %v2305 = vmul.f32 %v2304, %v66
    %v2306 = vstv %s2281
    %v2307 = vadd.f32 %v2306, %v2305
    %v2308 = vstv %s2294
    %v2309 = vmul.f32 %v2308, %v68
    %v2310 = vstv %s2278
    %v2311 = vadd.f32 %v2310, %v2309
    %v2312 = vadd.f32 %v2307, %v2304
    %v2313 = vsub.f32 %v2312, %v59
    %v2314 = vsub.f32 %v2312, %v60
    %v2315 = vmax.f32 %v2313, -1.0
    %v2316 = vmax.f32 %v2314, -1.0
    %v2317 = vmin.f32 %v2315, 1.0
    %v2318 = vmin.f32 %v2316, 1.0
    %v2319 = vmul.f32 %v2317, 0.5
    %v2320 = vmul.f32 %v2318, 0.5
    %v2321 = vand.u32 2147483647, %v2317
    %v2322 = vand.u32 2147483647, %v2318
    %v2323 = vmul.f32 %v2319, %v2321
    %v2324 = vmul.f32 %v2320, %v2322
    %v2325 = vsub.f32 %v2317, %v2323
    %v2326 = vsub.f32 %v2318, %v2324
    %v2327 = vsub.f32 %v2307, %v59
    %v2328 = vsub.f32 %v2307, %v60
    %v2329 = vmax.f32 %v2327, -1.0
    %v2330 = vmax.f32 %v2328, -1.0
    %v2331 = vmin.f32 %v2329, 1.0
    %v2332 = vmin.f32 %v2330, 1.0
    %v2333 = vmul.f32 %v2331, 0.5
    %v2334 = vmul.f32 %v2332, 0.5
    %v2335 = vand.u32 2147483647, %v2331
    %v2336 = vand.u32 2147483647, %v2332
    %v2337 = vmul.f32 %v2333, %v2335
    %v2338 = vmul.f32 %v2334, %v2336
    %v2339 = vsub.f32 %v2331, %v2337
    %v2340 = vsub.f32 %v2332, %v2338
    %v2341 = vsub.f32 %v2325, %v2339
    %v2342 = vsub.f32 %v2326, %v2340
    %v2343 = vstv %s2303
    %v2344 = vmul.f32 %v2341, %v2343
    %v2345 = vmul.f32 %v2342, %v2343
    %v2346 = vadd.f32 %v2311, %v2308
    %v2347 = vsub.f32 %v2346, %v59
    %v2348 = vsub.f32 %v2346, %v60
    %v2349 = vmax.f32 %v2347, -1.0
    %v2350 = vmax.f32 %v2348, -1.0
    %v2351 = vmin.f32 %v2349, 1.0
    %v2352 = vmin.f32 %v2350, 1.0
    %v2353 = vmul.f32 %v2351, 0.5
    %v2354 = vmul.f32 %v2352, 0.5
    %v2355 = vand.u32 2147483647, %v2351
    %v2356 = vand.u32 2147483647, %v2352
    %v2357 = vmul.f32 %v2353, %v2355
    %v2358 = vmul.f32 %v2354, %v2356
    %v2359 = vsub.f32 %v2351, %v2357
    %v2360 = vsub.f32 %v2352, %v2358
    %v2361 = vsub.f32 %v2311, %v59
    %v2362 = vsub.f32 %v2311, %v60
    %v2363 = vmax.f32 %v2361, -1.0
    %v2364 = vmax.f32 %v2362, -1.0
    %v2365 = vmin.f32 %v2363, 1.0
    %v2366 = vmin.f32 %v2364, 1.0
    %v2367 = vmul.f32 %v2365, 0.5
    %v2368 = vmul.f32 %v2366, 0.5
    %v2369 = vand.u32 2147483647, %v2365
    %v2370 = vand.u32 2147483647, %v2366
    %v2371 = vmul.f32 %v2367, %v2369
    %v2372 = vmul.f32 %v2368, %v2370
    %v2373 = vsub.f32 %v2365, %v2371
    %v2374 = vsub.f32 %v2366, %v2372
    %v2375 = vsub.f32 %v2359, %v2373
    %v2376 = vsub.f32 %v2360, %v2374
    %v2379 = vcombine.high %v2344, %v2344
    %v2381 = vunpack.c.l.s4 1966171168
    %v2382 = vunpack.c.0.s8 %v2381
    %v2383 = vlaneseq
    %v2384 = vshrl.u32 %v2383, 7
    %v2385 = vsub.s32 %v2382, %v2384
    %v2386 = vrot.slane %v2344, %v2385
    %v2388 = vunpack.c.l.s4 1966171168
    %v2389 = vunpack.c.0.s8 %v2388
    %v2390 = vlaneseq
    %v2391 = vshrl.u32 %v2390, 7
    %v2392 = vsub.s32 %v2389, %v2391
    %v2393 = vrot.slane %v2379, %v2392
    %v2394 = vcombine.high %v2386, %v2386
    %v2395 = vcombine.high %v2393, %v2393
    %v2397 = vunpack.c.l.s4 1966171168
    %v2398 = vunpack.c.0.s8 %v2397
    %v2399 = vlaneseq
    %v2400 = vshrl.u32 %v2399, 7
    %v2401 = vsub.s32 %v2398, %v2400
    %v2402 = vrot.slane %v2386, %v2401
    %v2404 = vunpack.c.l.s4 1966171168
    %v2405 = vunpack.c.0.s8 %v2404
    %v2406 = vlaneseq
    %v2407 = vshrl.u32 %v2406, 7
    %v2408 = vsub.s32 %v2405, %v2407
    %v2409 = vrot.slane %v2393, %v2408
    %v2411 = vunpack.c.l.s4 1966171168
    %v2412 = vunpack.c.0.s8 %v2411
    %v2413 = vlaneseq
    %v2414 = vshrl.u32 %v2413, 7
    %v2415 = vsub.s32 %v2412, %v2414
    %v2416 = vrot.slane %v2394, %v2415
    %v2418 = vunpack.c.l.s4 1966171168
    %v2419 = vunpack.c.0.s8 %v2418
    %v2420 = vlaneseq
    %v2421 = vshrl.u32 %v2420, 7
    %v2422 = vsub.s32 %v2419, %v2421
    %v2423 = vrot.slane %v2395, %v2422
    %v2424 = vcombine.high %v2402, %v2402
    %v2425 = vcombine.high %v2409, %v2409
    %v2426 = vcombine.high %v2416, %v2416
    %v2427 = vcombine.high %v2423, %v2423
    %v2428 = vcombine.high %v2345, %v2345
    %v2430 = vunpack.c.l.s4 1966171168
    %v2431 = vunpack.c.0.s8 %v2430
    %v2432 = vlaneseq
    %v2433 = vshrl.u32 %v2432, 7
    %v2434 = vsub.s32 %v2431, %v2433
    %v2435 = vrot.slane %v2345, %v2434
    %v2437 = vunpack.c.l.s4 1966171168
    %v2438 = vunpack.c.0.s8 %v2437
    %v2439 = vlaneseq
    %v2440 = vshrl.u32 %v2439, 7
    %v2441 = vsub.s32 %v2438, %v2440
    %v2442 = vrot.slane %v2428, %v2441
    %v2443 = vcombine.high %v2435, %v2435
    %v2444 = vcombine.high %v2442, %v2442
    %v2446 = vunpack.c.l.s4 1966171168
    %v2447 = vunpack.c.0.s8 %v2446
    %v2448 = vlaneseq
    %v2449 = vshrl.u32 %v2448, 7
    %v2450 = vsub.s32 %v2447, %v2449
    %v2451 = vrot.slane %v2435, %v2450
    %v2453 = vunpack.c.l.s4 1966171168
    %v2454 = vunpack.c.0.s8 %v2453
    %v2455 = vlaneseq
    %v2456 = vshrl.u32 %v2455, 7
    %v2457 = vsub.s32 %v2454, %v2456
    %v2458 = vrot.slane %v2442, %v2457
    %v2460 = vunpack.c.l.s4 1966171168
    %v2461 = vunpack.c.0.s8 %v2460
    %v2462 = vlaneseq
    %v2463 = vshrl.u32 %v2462, 7
    %v2464 = vsub.s32 %v2461, %v2463
    %v2465 = vrot.slane %v2443, %v2464
    %v2467 = vunpack.c.l.s4 1966171168
    %v2468 = vunpack.c.0.s8 %v2467
    %v2469 = vlaneseq
    %v2470 = vshrl.u32 %v2469, 7
    %v2471 = vsub.s32 %v2468, %v2470
    %v2472 = vrot.slane %v2444, %v2471
    %v2473 = vcombine.high %v2451, %v2451
    %v2474 = vcombine.high %v2458, %v2458
    %v2475 = vcombine.high %v2465, %v2465
    %v2476 = vcombine.high %v2472, %v2472
    %v2477 = vlaneseq
    %v2478 = vshrl.u32 %v2477, 7
    %v2479 = vsub.s32 0, %v2478
    %v2480 = vrot.slane %v2402, %v2479
    %v2481 = vlaneseq
    %v2482 = vshrl.u32 %v2481, 7
    %v2483 = vsub.s32 0, %v2482
    %v2484 = vrot.slane %v2416, %v2483
    %v2485 = vlaneseq
    %v2486 = vshrl.u32 %v2485, 7
    %v2487 = vsub.s32 0, %v2486
    %v2488 = vrot.slane %v2424, %v2487
    %v2489 = vlaneseq
    %v2490 = vshrl.u32 %v2489, 7
    %v2491 = vsub.s32 0, %v2490
    %v2492 = vrot.slane %v2426, %v2491
    %v2493 = vlaneseq
    %v2494 = vshrl.u32 %v2493, 7
    %v2495 = vsub.s32 0, %v2494
    %v2496 = vrot.slane %v2409, %v2495
    %v2497 = vlaneseq
    %v2498 = vshrl.u32 %v2497, 7
    %v2499 = vsub.s32 0, %v2498
    %v2500 = vrot.slane %v2423, %v2499
    %v2501 = vlaneseq
    %v2502 = vshrl.u32 %v2501, 7
    %v2503 = vsub.s32 0, %v2502
    %v2504 = vrot.slane %v2425, %v2503
    %v2505 = vlaneseq
    %v2506 = vshrl.u32 %v2505, 7
    %v2507 = vsub.s32 0, %v2506
    %v2508 = vrot.slane %v2427, %v2507
    %v2509 = vlaneseq
    %v2510 = vshrl.u32 %v2509, 7
    %v2511 = vsub.s32 0, %v2510
    %v2512 = vrot.slane %v2451, %v2511
    %v2513 = vlaneseq
    %v2514 = vshrl.u32 %v2513, 7
    %v2515 = vsub.s32 0, %v2514
    %v2516 = vrot.slane %v2465, %v2515
    %v2517 = vlaneseq
    %v2518 = vshrl.u32 %v2517, 7
    %v2519 = vsub.s32 0, %v2518
    %v2520 = vrot.slane %v2473, %v2519
    %v2521 = vlaneseq
    %v2522 = vshrl.u32 %v2521, 7
    %v2523 = vsub.s32 0, %v2522
    %v2524 = vrot.slane %v2475, %v2523
    %v2525 = vlaneseq
    %v2526 = vshrl.u32 %v2525, 7
    %v2527 = vsub.s32 0, %v2526
    %v2528 = vrot.slane %v2458, %v2527
    %v2529 = vlaneseq
    %v2530 = vshrl.u32 %v2529, 7
    %v2531 = vsub.s32 0, %v2530
    %v2532 = vrot.slane %v2472, %v2531
    %v2533 = vlaneseq
    %v2534 = vshrl.u32 %v2533, 7
    %v2535 = vsub.s32 0, %v2534
    %v2536 = vrot.slane %v2474, %v2535
    %v2537 = vlaneseq
    %v2538 = vshrl.u32 %v2537, 7
    %v2539 = vsub.s32 0, %v2538
    %v2540 = vrot.slane %v2476, %v2539
    %v2557 = vmul.f32 %v2480, %v2375
    %v2558 = vmul.f32 %v2480, %v2376
    %v2559 = vmul.f32 %v2484, %v2375
    %v2560 = vmul.f32 %v2484, %v2376
    %v2561 = vmul.f32 %v2488, %v2375
    %v2562 = vmul.f32 %v2488, %v2376
    %v2563 = vmul.f32 %v2492, %v2375
    %v2564 = vmul.f32 %v2492, %v2376
    %v2565 = vmul.f32 %v2496, %v2375
    %v2566 = vmul.f32 %v2496, %v2376
    %v2567 = vmul.f32 %v2500, %v2375
    %v2568 = vmul.f32 %v2500, %v2376
    %v2569 = vmul.f32 %v2504, %v2375
    %v2570 = vmul.f32 %v2504, %v2376
    %v2571 = vmul.f32 %v2508, %v2375
    %v2572 = vmul.f32 %v2508, %v2376
    %v2573 = vmul.f32 %v2512, %v2375
    %v2574 = vmul.f32 %v2512, %v2376
    %v2575 = vmul.f32 %v2516, %v2375
    %v2576 = vmul.f32 %v2516, %v2376
    %v2577 = vmul.f32 %v2520, %v2375
    %v2578 = vmul.f32 %v2520, %v2376
    %v2579 = vmul.f32 %v2524, %v2375
    %v2580 = vmul.f32 %v2524, %v2376
    %v2581 = vmul.f32 %v2528, %v2375
    %v2582 = vmul.f32 %v2528, %v2376
    %v2583 = vmul.f32 %v2532, %v2375
    %v2584 = vmul.f32 %v2532, %v2376
    %v2585 = vmul.f32 %v2536, %v2375
    %v2586 = vmul.f32 %v2536, %v2376
    %v2587 = vmul.f32 %v2540, %v2375
    %v2588 = vmul.f32 %v2540, %v2376
    %s2589 = smul.u32 %s70, 2
    %s2590 = smul.addr %s2589, 4
    %s2591 = scalar_lea.vmem [#allocation2], %s2590
    %v2592 = vld [vmem:[%s2591] sm:$0xff]
    %v2594 = vcombine.high %v2592, %v2592
    %2596 = vmatprep.subr.mxu0 0.0
    %2597 = vmatpush1.msra.mxu0 %v367
    %2598 = vmatprep.subr.mxu0 0.0
    %2599 = vmatpush1.msra.mxu0 %v366
    %2600 = vmatprep.subr.mxu0 0.0
    %2601 = vmatpush1.msra.mxu0 %v365
    %2602 = vmatprep.subr.mxu0 0.0
    %2603 = vmatpush1.msra.mxu0 %v364
    %2604 = vmatprep.subr.mxu0 0.0
    %2605 = vmatpush1.msra.mxu0 %v363
    %2606 = vmatprep.subr.mxu0 0.0
    %2607 = vmatpush1.msra.mxu0 %v362
    %2608 = vmatprep.subr.mxu0 0.0
    %2609 = vmatpush1.msra.mxu0 %v361
    %2610 = vmatprep.subr.mxu0 0.0
    %2611 = vmatpush1.msra.mxu0 %v360
    %2612 = vmatprep.subr.mxu0 0.0
    %2613 = vmatpush1.msra.mxu0 %v359
    %2614 = vmatprep.subr.mxu0 0.0
    %2615 = vmatpush1.msra.mxu0 %v358
    %2616 = vmatprep.subr.mxu0 0.0
    %2617 = vmatpush1.msra.mxu0 %v357
    %2618 = vmatprep.subr.mxu0 0.0
    %2619 = vmatpush1.msra.mxu0 %v356
    %2620 = vmatprep.subr.mxu0 0.0
    %2621 = vmatpush1.msra.mxu0 %v355
    %2622 = vmatprep.subr.mxu0 0.0
    %2623 = vmatpush1.msra.mxu0 %v354
    %2624 = vmatprep.subr.mxu0 0.0
    %2625 = vmatpush1.msra.mxu0 %v353
    %2626 = vmatprep.subr.mxu0 0.0
    %2627 = vmatpush1.msra.mxu0 %v352
    %2628 = vmatprep.subr.mxu0 0.0
    %2629 = vmatpush2.msra.mxu0 %v383
    %2630 = vmatprep.subr.mxu0 0.0
    %2631 = vmatpush2.msra.mxu0 %v382
    %2632 = vmatprep.subr.mxu0 0.0
    %2633 = vmatpush2.msra.mxu0 %v381
    %2634 = vmatprep.subr.mxu0 0.0
    %2635 = vmatpush2.msra.mxu0 %v380
    %2636 = vmatprep.subr.mxu0 0.0
    %2637 = vmatpush2.msra.mxu0 %v379
    %2638 = vmatprep.subr.mxu0 0.0
    %2639 = vmatpush2.msra.mxu0 %v378
    %2640 = vmatprep.subr.mxu0 0.0
    %2641 = vmatpush2.msra.mxu0 %v377
    %2642 = vmatprep.subr.mxu0 0.0
    %2643 = vmatpush2.msra.mxu0 %v376
    %2644 = vmatprep.subr.mxu0 0.0
    %2645 = vmatpush2.msra.mxu0 %v375
    %2646 = vmatprep.subr.mxu0 0.0
    %2647 = vmatpush2.msra.mxu0 %v374
    %2648 = vmatprep.subr.mxu0 0.0
    %2649 = vmatpush2.msra.mxu0 %v373
    %2650 = vmatprep.subr.mxu0 0.0
    %2651 = vmatpush2.msra.mxu0 %v372
    %2652 = vmatprep.subr.mxu0 0.0
    %2653 = vmatpush2.msra.mxu0 %v371
    %2654 = vmatprep.subr.mxu0 0.0
    %2655 = vmatpush2.msra.mxu0 %v370
    %2656 = vmatprep.subr.mxu0 0.0
    %2657 = vmatpush2.msra.mxu0 %v369
    %2658 = vmatprep.subr.mxu0 0.0
    %2659 = vmatpush2.msra.mxu0 %v368
    %2660 = vmatprep.mubr.f32.mxu0 %v2594
    %2661 = vmatmul.mubr.f32.gmra.mxu0 %v2592
    %v2662 = vpop.f32.mrf.mxu0
    %v2663 = vadd.f32 0.0, %v2662
    %v2664 = vpop.f32.mrf.mxu0
    %2665 = vdwg.mxu0
    %s2666 = smul.u32 %s385, 2
    %s2667 = smul.addr %s2666, 4
    %s2668 = scalar_lea.vmem [#allocation2], %s2667
    %v2669 = vld [vmem:[%s2668] sm:$0xff]
    %v2671 = vcombine.high %v2669, %v2669
    %2673 = vmatprep.subr.mxu0 0.0
    %2674 = vmatpush1.msra.mxu0 %v682
    %2675 = vmatprep.subr.mxu0 0.0
    %2676 = vmatpush1.msra.mxu0 %v681
    %2677 = vmatprep.subr.mxu0 0.0
    %2678 = vmatpush1.msra.mxu0 %v680
    %2679 = vmatprep.subr.mxu0 0.0
    %2680 = vmatpush1.msra.mxu0 %v679
    %2681 = vmatprep.subr.mxu0 0.0
    %2682 = vmatpush1.msra.mxu0 %v678
    %2683 = vmatprep.subr.mxu0 0.0
    %2684 = vmatpush1.msra.mxu0 %v677
    %2685 = vmatprep.subr.mxu0 0.0
    %2686 = vmatpush1.msra.mxu0 %v676
    %2687 = vmatprep.subr.mxu0 0.0
    %2688 = vmatpush1.msra.mxu0 %v675
    %2689 = vmatprep.subr.mxu0 0.0
    %2690 = vmatpush1.msra.mxu0 %v674
    %2691 = vmatprep.subr.mxu0 0.0
    %2692 = vmatpush1.msra.mxu0 %v673
    %2693 = vmatprep.subr.mxu0 0.0
    %2694 = vmatpush1.msra.mxu0 %v672
    %2695 = vmatprep.subr.mxu0 0.0
    %2696 = vmatpush1.msra.mxu0 %v671
    %2697 = vmatprep.subr.mxu0 0.0
    %2698 = vmatpush1.msra.mxu0 %v670
    %2699 = vmatprep.subr.mxu0 0.0
    %2700 = vmatpush1.msra.mxu0 %v669
    %2701 = vmatprep.subr.mxu0 0.0
    %2702 = vmatpush1.msra.mxu0 %v668
    %2703 = vmatprep.subr.mxu0 0.0
    %2704 = vmatpush1.msra.mxu0 %v667
    %2705 = vmatprep.subr.mxu0 0.0
    %2706 = vmatpush2.msra.mxu0 %v698
    %2707 = vmatprep.subr.mxu0 0.0
    %2708 = vmatpush2.msra.mxu0 %v697
    %2709 = vmatprep.subr.mxu0 0.0
    %2710 = vmatpush2.msra.mxu0 %v696
    %2711 = vmatprep.subr.mxu0 0.0
    %2712 = vmatpush2.msra.mxu0 %v695
    %2713 = vmatprep.subr.mxu0 0.0
    %2714 = vmatpush2.msra.mxu0 %v694
    %2715 = vmatprep.subr.mxu0 0.0
    %2716 = vmatpush2.msra.mxu0 %v693
    %2717 = vmatprep.subr.mxu0 0.0
    %2718 = vmatpush2.msra.mxu0 %v692
    %2719 = vmatprep.subr.mxu0 0.0
    %2720 = vmatpush2.msra.mxu0 %v691
    %2721 = vmatprep.subr.mxu0 0.0
    %2722 = vmatpush2.msra.mxu0 %v690
    %2723 = vmatprep.subr.mxu0 0.0
    %2724 = vmatpush2.msra.mxu0 %v689
    %2725 = vmatprep.subr.mxu0 0.0
    %2726 = vmatpush2.msra.mxu0 %v688
    %2727 = vmatprep.subr.mxu0 0.0
    %2728 = vmatpush2.msra.mxu0 %v687
    %2729 = vmatprep.subr.mxu0 0.0
    %2730 = vmatpush2.msra.mxu0 %v686
    %2731 = vmatprep.subr.mxu0 0.0
    %2732 = vmatpush2.msra.mxu0 %v685
    %2733 = vmatprep.subr.mxu0 0.0
    %2734 = vmatpush2.msra.mxu0 %v684
    %2735 = vmatprep.subr.mxu0 0.0
    %2736 = vmatpush2.msra.mxu0 %v683
    %2737 = vmatprep.mubr.f32.mxu0 %v2671
    %2738 = vmatmul.mubr.f32.gmra.mxu0 %v2669
    %v2739 = vpop.f32.mrf.mxu0
    %v2740 = vadd.f32 0.0, %v2739
    %v2741 = vpop.f32.mrf.mxu0
    %2742 = vdwg.mxu0
    %s2743 = smul.u32 %s700, 2
    %s2744 = smul.addr %s2743, 4
    %s2745 = scalar_lea.vmem [#allocation2], %s2744
    %v2746 = vld [vmem:[%s2745] sm:$0xff]
    %v2748 = vcombine.high %v2746, %v2746
    %2750 = vmatprep.subr.mxu0 0.0
    %2751 = vmatpush1.msra.mxu0 %v997
    %2752 = vmatprep.subr.mxu0 0.0
    %2753 = vmatpush1.msra.mxu0 %v996
    %2754 = vmatprep.subr.mxu0 0.0
    %2755 = vmatpush1.msra.mxu0 %v995
    %2756 = vmatprep.subr.mxu0 0.0
    %2757 = vmatpush1.msra.mxu0 %v994
    %2758 = vmatprep.subr.mxu0 0.0
    %2759 = vmatpush1.msra.mxu0 %v993
    %2760 = vmatprep.subr.mxu0 0.0
    %2761 = vmatpush1.msra.mxu0 %v992
    %2762 = vmatprep.subr.mxu0 0.0
    %2763 = vmatpush1.msra.mxu0 %v991
    %2764 = vmatprep.subr.mxu0 0.0
    %2765 = vmatpush1.msra.mxu0 %v990
    %2766 = vmatprep.subr.mxu0 0.0
    %2767 = vmatpush1.msra.mxu0 %v989
    %2768 = vmatprep.subr.mxu0 0.0
    %2769 = vmatpush1.msra.mxu0 %v988
    %2770 = vmatprep.subr.mxu0 0.0
    %2771 = vmatpush1.msra.mxu0 %v987
    %2772 = vmatprep.subr.mxu0 0.0
    %2773 = vmatpush1.msra.mxu0 %v986
    %2774 = vmatprep.subr.mxu0 0.0
    %2775 = vmatpush1.msra.mxu0 %v985
    %2776 = vmatprep.subr.mxu0 0.0
    %2777 = vmatpush1.msra.mxu0 %v984
    %2778 = vmatprep.subr.mxu0 0.0
    %2779 = vmatpush1.msra.mxu0 %v983
    %2780 = vmatprep.subr.mxu0 0.0
    %2781 = vmatpush1.msra.mxu0 %v982
    %2782 = vmatprep.subr.mxu0 0.0
    %2783 = vmatpush2.msra.mxu0 %v1013
    %2784 = vmatprep.subr.mxu0 0.0
    %2785 = vmatpush2.msra.mxu0 %v1012
    %2786 = vmatprep.subr.mxu0 0.0
    %2787 = vmatpush2.msra.mxu0 %v1011
    %2788 = vmatprep.subr.mxu0 0.0
    %2789 = vmatpush2.msra.mxu0 %v1010
    %2790 = vmatprep.subr.mxu0 0.0
    %2791 = vmatpush2.msra.mxu0 %v1009
    %2792 = vmatprep.subr.mxu0 0.0
    %2793 = vmatpush2.msra.mxu0 %v1008
    %2794 = vmatprep.subr.mxu0 0.0
    %2795 = vmatpush2.msra.mxu0 %v1007
    %2796 = vmatprep.subr.mxu0 0.0
    %2797 = vmatpush2.msra.mxu0 %v1006
    %2798 = vmatprep.subr.mxu0 0.0
    %2799 = vmatpush2.msra.mxu0 %v1005
    %2800 = vmatprep.subr.mxu0 0.0
    %2801 = vmatpush2.msra.mxu0 %v1004
    %2802 = vmatprep.subr.mxu0 0.0
    %2803 = vmatpush2.msra.mxu0 %v1003
    %2804 = vmatprep.subr.mxu0 0.0
    %2805 = vmatpush2.msra.mxu0 %v1002
    %2806 = vmatprep.subr.mxu0 0.0
    %2807 = vmatpush2.msra.mxu0 %v1001
    %2808 = vmatprep.subr.mxu0 0.0
    %2809 = vmatpush2.msra.mxu0 %v1000
    %2810 = vmatprep.subr.mxu0 0.0
    %2811 = vmatpush2.msra.mxu0 %v999
    %2812 = vmatprep.subr.mxu0 0.0
    %2813 = vmatpush2.msra.mxu0 %v998
    %2814 = vmatprep.mubr.f32.mxu0 %v2748
    %2815 = vmatmul.mubr.f32.gmra.mxu0 %v2746
    %v2816 = vpop.f32.mrf.mxu0
    %v2817 = vadd.f32 0.0, %v2816
    %v2818 = vpop.f32.mrf.mxu0
    %2819 = vdwg.mxu0
    %s2820 = smul.u32 %s1015, 2
    %s2821 = smul.addr %s2820, 4
    %s2822 = scalar_lea.vmem [#allocation2], %s2821
    %v2823 = vld [vmem:[%s2822] sm:$0xff]
    %v2825 = vcombine.high %v2823, %v2823
    %2827 = vmatprep.subr.mxu0 0.0
    %2828 = vmatpush1.msra.mxu0 %v1312
    %2829 = vmatprep.subr.mxu0 0.0
    %2830 = vmatpush1.msra.mxu0 %v1311
    %2831 = vmatprep.subr.mxu0 0.0
    %2832 = vmatpush1.msra.mxu0 %v1310
    %2833 = vmatprep.subr.mxu0 0.0
    %2834 = vmatpush1.msra.mxu0 %v1309
    %2835 = vmatprep.subr.mxu0 0.0
    %2836 = vmatpush1.msra.mxu0 %v1308
    %2837 = vmatprep.subr.mxu0 0.0
    %2838 = vmatpush1.msra.mxu0 %v1307
    %2839 = vmatprep.subr.mxu0 0.0
    %2840 = vmatpush1.msra.mxu0 %v1306
    %2841 = vmatprep.subr.mxu0 0.0
    %2842 = vmatpush1.msra.mxu0 %v1305
    %2843 = vmatprep.subr.mxu0 0.0
    %2844 = vmatpush1.msra.mxu0 %v1304
    %2845 = vmatprep.subr.mxu0 0.0
    %2846 = vmatpush1.msra.mxu0 %v1303
    %2847 = vmatprep.subr.mxu0 0.0
    %2848 = vmatpush1.msra.mxu0 %v1302
    %2849 = vmatprep.subr.mxu0 0.0
    %2850 = vmatpush1.msra.mxu0 %v1301
    %2851 = vmatprep.subr.mxu0 0.0
    %2852 = vmatpush1.msra.mxu0 %v1300
    %2853 = vmatprep.subr.mxu0 0.0
    %2854 = vmatpush1.msra.mxu0 %v1299
    %2855 = vmatprep.subr.mxu0 0.0
    %2856 = vmatpush1.msra.mxu0 %v1298
    %2857 = vmatprep.subr.mxu0 0.0
    %2858 = vmatpush1.msra.mxu0 %v1297
    %2859 = vmatprep.subr.mxu0 0.0
    %2860 = vmatpush2.msra.mxu0 %v1328
    %2861 = vmatprep.subr.mxu0 0.0
    %2862 = vmatpush2.msra.mxu0 %v1327
    %2863 = vmatprep.subr.mxu0 0.0
    %2864 = vmatpush2.msra.mxu0 %v1326
    %2865 = vmatprep.subr.mxu0 0.0
    %2866 = vmatpush2.msra.mxu0 %v1325
    %2867 = vmatprep.subr.mxu0 0.0
    %2868 = vmatpush2.msra.mxu0 %v1324
    %2869 = vmatprep.subr.mxu0 0.0
    %2870 = vmatpush2.msra.mxu0 %v1323
    %2871 = vmatprep.subr.mxu0 0.0
    %2872 = vmatpush2.msra.mxu0 %v1322
    %2873 = vmatprep.subr.mxu0 0.0
    %2874 = vmatpush2.msra.mxu0 %v1321
    %2875 = vmatprep.subr.mxu0 0.0
    %2876 = vmatpush2.msra.mxu0 %v1320
    %2877 = vmatprep.subr.mxu0 0.0
    %2878 = vmatpush2.msra.mxu0 %v1319
    %2879 = vmatprep.subr.mxu0 0.0
    %2880 = vmatpush2.msra.mxu0 %v1318
    %2881 = vmatprep.subr.mxu0 0.0
    %2882 = vmatpush2.msra.mxu0 %v1317
    %2883 = vmatprep.subr.mxu0 0.0
    %2884 = vmatpush2.msra.mxu0 %v1316
    %2885 = vmatprep.subr.mxu0 0.0
    %2886 = vmatpush2.msra.mxu0 %v1315
    %2887 = vmatprep.subr.mxu0 0.0
    %2888 = vmatpush2.msra.mxu0 %v1314
    %2889 = vmatprep.subr.mxu0 0.0
    %2890 = vmatpush2.msra.mxu0 %v1313
    %2891 = vmatprep.mubr.f32.mxu0 %v2825
    %2892 = vmatmul.mubr.f32.gmra.mxu0 %v2823
    %v2893 = vpop.f32.mrf.mxu0
    %v2894 = vadd.f32 0.0, %v2893
    %v2895 = vpop.f32.mrf.mxu0
    %2896 = vdwg.mxu0
    %s2897 = smul.u32 %s1330, 2
    %s2898 = smul.addr %s2897, 4
    %s2899 = scalar_lea.vmem [#allocation2], %s2898
    %v2900 = vld [vmem:[%s2899] sm:$0xff]
    %v2902 = vcombine.high %v2900, %v2900
    %2904 = vmatprep.subr.mxu0 0.0
    %2905 = vmatpush1.msra.mxu0 %v1627
    %2906 = vmatprep.subr.mxu0 0.0
    %2907 = vmatpush1.msra.mxu0 %v1626
    %2908 = vmatprep.subr.mxu0 0.0
    %2909 = vmatpush1.msra.mxu0 %v1625
    %2910 = vmatprep.subr.mxu0 0.0
    %2911 = vmatpush1.msra.mxu0 %v1624
    %2912 = vmatprep.subr.mxu0 0.0
    %2913 = vmatpush1.msra.mxu0 %v1623
    %2914 = vmatprep.subr.mxu0 0.0
    %2915 = vmatpush1.msra.mxu0 %v1622
    %2916 = vmatprep.subr.mxu0 0.0
    %2917 = vmatpush1.msra.mxu0 %v1621
    %2918 = vmatprep.subr.mxu0 0.0
    %2919 = vmatpush1.msra.mxu0 %v1620
    %2920 = vmatprep.subr.mxu0 0.0
    %2921 = vmatpush1.msra.mxu0 %v1619
    %2922 = vmatprep.subr.mxu0 0.0
    %2923 = vmatpush1.msra.mxu0 %v1618
    %2924 = vmatprep.subr.mxu0 0.0
    %2925 = vmatpush1.msra.mxu0 %v1617
    %2926 = vmatprep.subr.mxu0 0.0
    %2927 = vmatpush1.msra.mxu0 %v1616
    %2928 = vmatprep.subr.mxu0 0.0
    %2929 = vmatpush1.msra.mxu0 %v1615
    %2930 = vmatprep.subr.mxu0 0.0
    %2931 = vmatpush1.msra.mxu0 %v1614
    %2932 = vmatprep.subr.mxu0 0.0
    %2933 = vmatpush1.msra.mxu0 %v1613
    %2934 = vmatprep.subr.mxu0 0.0
    %2935 = vmatpush1.msra.mxu0 %v1612
    %2936 = vmatprep.subr.mxu0 0.0
    %2937 = vmatpush2.msra.mxu0 %v1643
    %2938 = vmatprep.subr.mxu0 0.0
    %2939 = vmatpush2.msra.mxu0 %v1642
    %2940 = vmatprep.subr.mxu0 0.0
    %2941 = vmatpush2.msra.mxu0 %v1641
    %2942 = vmatprep.subr.mxu0 0.0
    %2943 = vmatpush2.msra.mxu0 %v1640
    %2944 = vmatprep.subr.mxu0 0.0
    %2945 = vmatpush2.msra.mxu0 %v1639
    %2946 = vmatprep.subr.mxu0 0.0
    %2947 = vmatpush2.msra.mxu0 %v1638
    %2948 = vmatprep.subr.mxu0 0.0
    %2949 = vmatpush2.msra.mxu0 %v1637
    %2950 = vmatprep.subr.mxu0 0.0
    %2951 = vmatpush2.msra.mxu0 %v1636
    %2952 = vmatprep.subr.mxu0 0.0
    %2953 = vmatpush2.msra.mxu0 %v1635
    %2954 = vmatprep.subr.mxu0 0.0
    %2955 = vmatpush2.msra.mxu0 %v1634
    %2956 = vmatprep.subr.mxu0 0.0
    %2957 = vmatpush2.msra.mxu0 %v1633
    %2958 = vmatprep.subr.mxu0 0.0
    %2959 = vmatpush2.msra.mxu0 %v1632
    %2960 = vmatprep.subr.mxu0 0.0
    %2961 = vmatpush2.msra.mxu0 %v1631
    %2962 = vmatprep.subr.mxu0 0.0
    %2963 = vmatpush2.msra.mxu0 %v1630
    %2964 = vmatprep.subr.mxu0 0.0
    %2965 = vmatpush2.msra.mxu0 %v1629
    %2966 = vmatprep.subr.mxu0 0.0
    %2967 = vmatpush2.msra.mxu0 %v1628
    %2968 = vmatprep.mubr.f32.mxu0 %v2902
    %2969 = vmatmul.mubr.f32.gmra.mxu0 %v2900
    %v2970 = vpop.f32.mrf.mxu0
    %v2971 = vadd.f32 0.0, %v2970
    %v2972 = vpop.f32.mrf.mxu0
    %2973 = vdwg.mxu0
    %s2974 = smul.u32 %s1645, 2
    %s2975 = smul.addr %s2974, 4
    %s2976 = scalar_lea.vmem [#allocation2], %s2975
    %v2977 = vld [vmem:[%s2976] sm:$0xff]
    %v2979 = vcombine.high %v2977, %v2977
    %2981 = vmatprep.subr.mxu0 0.0
    %2982 = vmatpush1.msra.mxu0 %v1942
    %2983 = vmatprep.subr.mxu0 0.0
    %2984 = vmatpush1.msra.mxu0 %v1941
    %2985 = vmatprep.subr.mxu0 0.0
    %2986 = vmatpush1.msra.mxu0 %v1940
    %2987 = vmatprep.subr.mxu0 0.0
    %2988 = vmatpush1.msra.mxu0 %v1939
    %2989 = vmatprep.subr.mxu0 0.0
    %2990 = vmatpush1.msra.mxu0 %v1938
    %2991 = vmatprep.subr.mxu0 0.0
    %2992 = vmatpush1.msra.mxu0 %v1937
    %2993 = vmatprep.subr.mxu0 0.0
    %2994 = vmatpush1.msra.mxu0 %v1936
    %2995 = vmatprep.subr.mxu0 0.0
    %2996 = vmatpush1.msra.mxu0 %v1935
    %2997 = vmatprep.subr.mxu0 0.0
    %2998 = vmatpush1.msra.mxu0 %v1934
    %2999 = vmatprep.subr.mxu0 0.0
    %3000 = vmatpush1.msra.mxu0 %v1933
    %3001 = vmatprep.subr.mxu0 0.0
    %3002 = vmatpush1.msra.mxu0 %v1932
    %3003 = vmatprep.subr.mxu0 0.0
    %3004 = vmatpush1.msra.mxu0 %v1931
    %3005 = vmatprep.subr.mxu0 0.0
    %3006 = vmatpush1.msra.mxu0 %v1930
    %3007 = vmatprep.subr.mxu0 0.0
    %3008 = vmatpush1.msra.mxu0 %v1929
    %3009 = vmatprep.subr.mxu0 0.0
    %3010 = vmatpush1.msra.mxu0 %v1928
    %3011 = vmatprep.subr.mxu0 0.0
    %3012 = vmatpush1.msra.mxu0 %v1927
    %3013 = vmatprep.subr.mxu0 0.0
    %3014 = vmatpush2.msra.mxu0 %v1958
    %3015 = vmatprep.subr.mxu0 0.0
    %3016 = vmatpush2.msra.mxu0 %v1957
    %3017 = vmatprep.subr.mxu0 0.0
    %3018 = vmatpush2.msra.mxu0 %v1956
    %3019 = vmatprep.subr.mxu0 0.0
    %3020 = vmatpush2.msra.mxu0 %v1955
    %3021 = vmatprep.subr.mxu0 0.0
    %3022 = vmatpush2.msra.mxu0 %v1954
    %3023 = vmatprep.subr.mxu0 0.0
    %3024 = vmatpush2.msra.mxu0 %v1953
    %3025 = vmatprep.subr.mxu0 0.0
    %3026 = vmatpush2.msra.mxu0 %v1952
    %3027 = vmatprep.subr.mxu0 0.0
    %3028 = vmatpush2.msra.mxu0 %v1951
    %3029 = vmatprep.subr.mxu0 0.0
    %3030 = vmatpush2.msra.mxu0 %v1950
    %3031 = vmatprep.subr.mxu0 0.0
    %3032 = vmatpush2.msra.mxu0 %v1949
    %3033 = vmatprep.subr.mxu0 0.0
    %3034 = vmatpush2.msra.mxu0 %v1948
    %3035 = vmatprep.subr.mxu0 0.0
    %3036 = vmatpush2.msra.mxu0 %v1947
    %3037 = vmatprep.subr.mxu0 0.0
    %3038 = vmatpush2.msra.mxu0 %v1946
    %3039 = vmatprep.subr.mxu0 0.0
    %3040 = vmatpush2.msra.mxu0 %v1945
    %3041 = vmatprep.subr.mxu0 0.0
    %3042 = vmatpush2.msra.mxu0 %v1944
    %3043 = vmatprep.subr.mxu0 0.0
    %3044 = vmatpush2.msra.mxu0 %v1943
    %3045 = vmatprep.mubr.f32.mxu0 %v2979
    %3046 = vmatmul.mubr.f32.gmra.mxu0 %v2977
    %v3047 = vpop.f32.mrf.mxu0
    %v3048 = vadd.f32 0.0, %v3047
    %v3049 = vpop.f32.mrf.mxu0
    %3050 = vdwg.mxu0
    %s3051 = smul.u32 %s1960, 2
    %s3052 = smul.addr %s3051, 4
    %s3053 = scalar_lea.vmem [#allocation2], %s3052
    %v3054 = vld [vmem:[%s3053] sm:$0xff]
    %v3056 = vcombine.high %v3054, %v3054
    %3058 = vmatprep.subr.mxu0 0.0
    %3059 = vmatpush1.msra.mxu0 %v2257
    %3060 = vmatprep.subr.mxu0 0.0
    %3061 = vmatpush1.msra.mxu0 %v2256
    %3062 = vmatprep.subr.mxu0 0.0
    %3063 = vmatpush1.msra.mxu0 %v2255
    %3064 = vmatprep.subr.mxu0 0.0
    %3065 = vmatpush1.msra.mxu0 %v2254
    %3066 = vmatprep.subr.mxu0 0.0
    %3067 = vmatpush1.msra.mxu0 %v2253
    %3068 = vmatprep.subr.mxu0 0.0
    %3069 = vmatpush1.msra.mxu0 %v2252
    %3070 = vmatprep.subr.mxu0 0.0
    %3071 = vmatpush1.msra.mxu0 %v2251
    %3072 = vmatprep.subr.mxu0 0.0
    %3073 = vmatpush1.msra.mxu0 %v2250
    %3074 = vmatprep.subr.mxu0 0.0
    %3075 = vmatpush1.msra.mxu0 %v2249
    %3076 = vmatprep.subr.mxu0 0.0
    %3077 = vmatpush1.msra.mxu0 %v2248
    %3078 = vmatprep.subr.mxu0 0.0
    %3079 = vmatpush1.msra.mxu0 %v2247
    %3080 = vmatprep.subr.mxu0 0.0
    %3081 = vmatpush1.msra.mxu0 %v2246
    %3082 = vmatprep.subr.mxu0 0.0
    %3083 = vmatpush1.msra.mxu0 %v2245
    %3084 = vmatprep.subr.mxu0 0.0
    %3085 = vmatpush1.msra.mxu0 %v2244
    %3086 = vmatprep.subr.mxu0 0.0
    %3087 = vmatpush1.msra.mxu0 %v2243
    %3088 = vmatprep.subr.mxu0 0.0
    %3089 = vmatpush1.msra.mxu0 %v2242
    %3090 = vmatprep.subr.mxu0 0.0
    %3091 = vmatpush2.msra.mxu0 %v2273
    %3092 = vmatprep.subr.mxu0 0.0
    %3093 = vmatpush2.msra.mxu0 %v2272
    %3094 = vmatprep.subr.mxu0 0.0
    %3095 = vmatpush2.msra.mxu0 %v2271
    %3096 = vmatprep.subr.mxu0 0.0
    %3097 = vmatpush2.msra.mxu0 %v2270
    %3098 = vmatprep.subr.mxu0 0.0
    %3099 = vmatpush2.msra.mxu0 %v2269
    %3100 = vmatprep.subr.mxu0 0.0
    %3101 = vmatpush2.msra.mxu0 %v2268
    %3102 = vmatprep.subr.mxu0 0.0
    %3103 = vmatpush2.msra.mxu0 %v2267
    %3104 = vmatprep.subr.mxu0 0.0
    %3105 = vmatpush2.msra.mxu0 %v2266
    %3106 = vmatprep.subr.mxu0 0.0
    %3107 = vmatpush2.msra.mxu0 %v2265
    %3108 = vmatprep.subr.mxu0 0.0
    %3109 = vmatpush2.msra.mxu0 %v2264
    %3110 = vmatprep.subr.mxu0 0.0
    %3111 = vmatpush2.msra.mxu0 %v2263
    %3112 = vmatprep.subr.mxu0 0.0
    %3113 = vmatpush2.msra.mxu0 %v2262
    %3114 = vmatprep.subr.mxu0 0.0
    %3115 = vmatpush2.msra.mxu0 %v2261
    %3116 = vmatprep.subr.mxu0 0.0
    %3117 = vmatpush2.msra.mxu0 %v2260
    %3118 = vmatprep.subr.mxu0 0.0
    %3119 = vmatpush2.msra.mxu0 %v2259
    %3120 = vmatprep.subr.mxu0 0.0
    %3121 = vmatpush2.msra.mxu0 %v2258
    %3122 = vmatprep.mubr.f32.mxu0 %v3056
    %3123 = vmatmul.mubr.f32.gmra.mxu0 %v3054
    %v3124 = vpop.f32.mrf.mxu0
    %v3125 = vadd.f32 0.0, %v3124
    %v3126 = vpop.f32.mrf.mxu0
    %3127 = vdwg.mxu0
    %s3128 = smul.u32 %s2275, 2
    %s3129 = smul.addr %s3128, 4
    %s3130 = scalar_lea.vmem [#allocation2], %s3129
    %v3131 = vld [vmem:[%s3130] sm:$0xff]
    %v3133 = vcombine.high %v3131, %v3131
    %3135 = vmatprep.subr.mxu0 0.0
    %3136 = vmatpush1.msra.mxu0 %v2572
    %3137 = vmatprep.subr.mxu0 0.0
    %3138 = vmatpush1.msra.mxu0 %v2571
    %3139 = vmatprep.subr.mxu0 0.0
    %3140 = vmatpush1.msra.mxu0 %v2570
    %3141 = vmatprep.subr.mxu0 0.0
    %3142 = vmatpush1.msra.mxu0 %v2569
    %3143 = vmatprep.subr.mxu0 0.0
    %3144 = vmatpush1.msra.mxu0 %v2568
    %3145 = vmatprep.subr.mxu0 0.0
    %3146 = vmatpush1.msra.mxu0 %v2567
    %3147 = vmatprep.subr.mxu0 0.0
    %3148 = vmatpush1.msra.mxu0 %v2566
    %3149 = vmatprep.subr.mxu0 0.0
    %3150 = vmatpush1.msra.mxu0 %v2565
    %3151 = vmatprep.subr.mxu0 0.0
    %3152 = vmatpush1.msra.mxu0 %v2564
    %3153 = vmatprep.subr.mxu0 0.0
    %3154 = vmatpush1.msra.mxu0 %v2563
    %3155 = vmatprep.subr.mxu0 0.0
    %3156 = vmatpush1.msra.mxu0 %v2562
    %3157 = vmatprep.subr.mxu0 0.0
    %3158 = vmatpush1.msra.mxu0 %v2561
    %3159 = vmatprep.subr.mxu0 0.0
    %3160 = vmatpush1.msra.mxu0 %v2560
    %3161 = vmatprep.subr.mxu0 0.0
    %3162 = vmatpush1.msra.mxu0 %v2559
    %3163 = vmatprep.subr.mxu0 0.0
    %3164 = vmatpush1.msra.mxu0 %v2558
    %3165 = vmatprep.subr.mxu0 0.0
    %3166 = vmatpush1.msra.mxu0 %v2557
    %3167 = vmatprep.subr.mxu0 0.0
    %3168 = vmatpush2.msra.mxu0 %v2588
    %3169 = vmatprep.subr.mxu0 0.0
    %3170 = vmatpush2.msra.mxu0 %v2587
    %3171 = vmatprep.subr.mxu0 0.0
    %3172 = vmatpush2.msra.mxu0 %v2586
    %3173 = vmatprep.subr.mxu0 0.0
    %3174 = vmatpush2.msra.mxu0 %v2585
    %3175 = vmatprep.subr.mxu0 0.0
    %3176 = vmatpush2.msra.mxu0 %v2584
    %3177 = vmatprep.subr.mxu0 0.0
    %3178 = vmatpush2.msra.mxu0 %v2583
    %3179 = vmatprep.subr.mxu0 0.0
    %3180 = vmatpush2.msra.mxu0 %v2582
    %3181 = vmatprep.subr.mxu0 0.0
    %3182 = vmatpush2.msra.mxu0 %v2581
    %3183 = vmatprep.subr.mxu0 0.0
    %3184 = vmatpush2.msra.mxu0 %v2580
    %3185 = vmatprep.subr.mxu0 0.0
    %3186 = vmatpush2.msra.mxu0 %v2579
    %3187 = vmatprep.subr.mxu0 0.0
    %3188 = vmatpush2.msra.mxu0 %v2578
    %3189 = vmatprep.subr.mxu0 0.0
    %3190 = vmatpush2.msra.mxu0 %v2577
    %3191 = vmatprep.subr.mxu0 0.0
    %3192 = vmatpush2.msra.mxu0 %v2576
    %3193 = vmatprep.subr.mxu0 0.0
    %3194 = vmatpush2.msra.mxu0 %v2575
    %3195 = vmatprep.subr.mxu0 0.0
    %3196 = vmatpush2.msra.mxu0 %v2574
    %3197 = vmatprep.subr.mxu0 0.0
    %3198 = vmatpush2.msra.mxu0 %v2573
    %3199 = vmatprep.mubr.f32.mxu0 %v3133
    %3200 = vmatmul.mubr.f32.gmra.mxu0 %v3131
    %v3201 = vpop.f32.mrf.mxu0
    %v3202 = vadd.f32 0.0, %v3201
    %v3203 = vpop.f32.mrf.mxu0
    %3204 = vdwg.mxu0
    %3206 = vrot.lane.b32.xlu0 %v2740, 64
    %v3207 = vpop.permute.xlu0 %3206
    %3210 = vrot.lane.b32.xlu0 %v2894, 64
    %v3211 = vpop.permute.xlu0 %3210
    %3214 = vrot.lane.b32.xlu0 %v3048, 64
    %v3215 = vpop.permute.xlu0 %3214
    %3218 = vrot.lane.b32.xlu0 %v3202, 64
    %v3219 = vpop.permute.xlu0 %3218
    %vm3221 = vcmask 523264
    %v3222 = vsel %vm3221, %v2663, %v3207
    %v3223 = vsel %vm3221, %v2817, %v3211
    %v3224 = vsel %vm3221, %v2971, %v3215
    %v3225 = vsel %vm3221, %v3125, %v3219
    %v3230 = vcombine.low %v3222, %v3223
    %v3231 = vcombine.low %v3224, %v3225
    %3234 = vst [vmem:[#allocation8] sm:$0xff] %v3230
    %3235 = vst [vmem:[#allocation8 + $0x8] sm:$0xff] %v3231
    // Predicated region
    $region27: #{tpu_custom_call.1} parent=1 // pred_check
      _
    $region28: #{tpu_custom_call.1} parent=1 // pred_check_branch
      %3237 = sbr.rel (0) target = $region30
    $region29: #{tpu_custom_call.1} parent=1 // pred_region
      %s3239 = ssub.s32 256, 256
      %3240 = vsyncadd [#allocation4], %s3239
      %s3242 = sshll.u32 [#allocation8], 4
      %s3243 = int_to_ptr.vmem [resolvable:$true] %s3242
      %3245 = dma.vmem_to_hbm [thread:$0]  %s3243, 256, %s3, [#allocation4]
    $region30: #{tpu_custom_call.1} parent=1 // pred_fallthru
      _
    // Predicated region
    $region31: #{tpu_custom_call.1} parent=1 // pred_check
      _
    $region32: #{tpu_custom_call.1} parent=1 // pred_check_branch
      %3247 = sbr.rel (0) target = $region34
    $region33: #{tpu_custom_call.1} parent=1 // pred_region
      %3248 = dma.done [#allocation4], 256
    $region34: #{tpu_custom_call.1} parent=1 // pred_fallthru
      _
    %3249 = vsyncpa [#allocation4], 1
    %3250 = vsyncpa [#allocation5], 1
    %3251 = vsyncpa [#allocation6], 1

</llo_original>
